<compile_context>
chip_gen: v7x
topology: tpu7x:2x2x1
jax: 0.10.0
libtpu: 0.0.40
codegen_flags: <defaults>
</compile_context>

<pallas_src>
import functools

import numpy as np
import jax
import jax.numpy as jnp
from jax.experimental import pallas as pl
from jax.experimental.pallas import tpu as pltpu

# ----- module-implied static geometry ---------------------------------------
KH, KW = 3, 5                 # Conv2d kernel size
POOL = 2                      # max_pool2d window / stride
IN_H, IN_W = 6, 10            # forced by CNN .view(-1, 3*2*3)
OUT_H, OUT_W = 2, 3           # pooled spatial output
FEAT = 3 * OUT_H * OUT_W      # 18 = LSTM input size
NPIX = IN_H * IN_W            # 60 pixels per frame

# ----- TPU-friendly padded geometry ------------------------------------------
H_PAD = 128                   # hidden 50 -> 128: every gate block is 128 lanes
G4 = 4 * H_PAD                # 512-wide fused gates, order (i, f, o, g)
FEAT_PAD = 128                # conv features padded to one lane tile
B_PAD = 8                     # batch rows padded to one sublane tile
CLS_PAD = 128                 # class lanes padded to one lane tile
IMG_K = 64                    # 60 pixels + 4 zero cols (aligned contraction dim)

# weight-slab row offsets (bf16 slab, all blocks 16-sublane aligned)
W_CONV = 0
W_IH0 = W_CONV + IMG_K        # 64
W_HH0 = W_IH0 + H_PAD         # 192
W_IH1 = W_HH0 + H_PAD         # 320
W_HH1 = W_IH1 + H_PAD         # 448
W_LIN = W_HH1 + H_PAD         # 576
W_ROWS = W_LIN + H_PAD        # 704

# bias-slab row offsets (f32 slab; loop-biases pre-broadcast to 8 rows)
B_B1 = 0                      # rows [0, 8):  layer-1 bias x8
B_LINB = 8                    # rows [8, 16): linear bias + -1e30 class mask, x8
B_CONVB = 16                  # row 16: conv bias (rows 17..23 zero)
B_L0B = 24                    # row 24: layer-0 bias (rows 25..31 zero)
B_ROWS = 32


# ----------------------------- Pallas kernel -------------------------------

def fused_network_kernel(img_ref, w_ref, b_ref, h0_ref, c0_ref, out_ref):
    """CNN -> 2-layer LSTM -> Linear -> log_softmax, fully fused in VMEM.

    img_ref : (S*B_PAD, IMG_K) bf16  time-major flattened 6x10 frames
              (row = s*B_PAD + b; padded batch rows / pixel cols are zero)
    w_ref   : (W_ROWS, G4) bf16 weight slab:
              [0,64)    conv gather-weight (im2col + conv + 4 pool offsets
                        folded; one 128-lane block per pool offset,
                        features in torch (c, oh, ow) order)
              [64,192)  wih0   [192,320) whh0   [320,448) wih1
              [448,576) whh1   [576,704) wlin (classes in lanes [0, CLS_PAD))
    b_ref   : (B_ROWS, G4) f32 bias slab (see offsets above)
    h0_ref, c0_ref : (2, B_PAD, H_PAD) f32 zero-padded initial states
    out_ref : (B_PAD, CLS_PAD) f32 log-probs (rows >= B and lanes >= num_class
              are padding and sliced away by the wrapper)
    """
    n = img_ref.shape[0]                 # S * B_PAD
    s_len = n // B_PAD
    f32 = jnp.float32
    bf16 = jnp.bfloat16

    # ---- CNN: im2col + conv folded into one gather-weight matmul ----------
    conv4 = jnp.dot(img_ref[...], w_ref[W_CONV:W_IH0, :],
                    preferred_element_type=f32)                     # (n, G4)
    pooled = jnp.maximum(
        jnp.maximum(conv4[:, 0:FEAT_PAD], conv4[:, FEAT_PAD:2 * FEAT_PAD]),
        jnp.maximum(conv4[:, 2 * FEAT_PAD:3 * FEAT_PAD],
                    conv4[:, 3 * FEAT_PAD:]))                       # (n, 128)
    feats = jnp.maximum(pooled + b_ref[B_CONVB:B_CONVB + 1, 0:FEAT_PAD], 0.0)

    # ---- layer-0 input projection hoisted out of the time loop ------------
    x0_pre = (jnp.dot(feats.astype(bf16), w_ref[W_IH0:W_HH0, :],
                      preferred_element_type=f32)
              + b_ref[B_L0B:B_L0B + 1, :])                          # (n, G4) f32

    whh0 = w_ref[W_HH0:W_IH1, :]
    wih1 = w_ref[W_IH1:W_HH1, :]
    whh1 = w_ref[W_HH1:W_LIN, :]
    b1b = b_ref[B_B1:B_B1 + B_PAD, :]                               # (8, G4)

    def cell(gates, c_prev):
        # gate blocks along G4 are (i, f, o, g), each exactly 128 lanes:
        # one sigmoid over 3*H_PAD lanes, one tanh over H_PAD lanes, all f32.
        sig = jax.nn.sigmoid(gates[:, 0:3 * H_PAD])
        g = jnp.tanh(gates[:, 3 * H_PAD:])
        c_new = sig[:, H_PAD:2 * H_PAD] * c_prev + sig[:, 0:H_PAD] * g
        h_new = sig[:, 2 * H_PAD:3 * H_PAD] * jnp.tanh(c_new)
        return h_new, c_new

    h1, c1 = h0_ref[0], c0_ref[0]                                   # (8, 128) f32
    h2, c2 = h0_ref[1], c0_ref[1]
    # TODO(synk): nn.LSTM inter-layer dropout (p=0.8) is train-mode only;
    # eval-mode semantics (no dropout) are implemented here.
    for t in range(s_len):               # static -> fully unrolled
        g0 = x0_pre[t * B_PAD:(t + 1) * B_PAD, :] + jnp.dot(
            h1.astype(bf16), whh0, preferred_element_type=f32)
        h1, c1 = cell(g0, c1)
        g1 = (jnp.dot(h1.astype(bf16), wih1, preferred_element_type=f32)
              + jnp.dot(h2.astype(bf16), whh1, preferred_element_type=f32)
              + b1b)
        h2, c2 = cell(g1, c2)

    # ---- Linear head + log_softmax (padded class lanes masked to -1e30) ---
    logits = (jnp.dot(h2.astype(bf16), w_ref[W_LIN:W_ROWS, 0:CLS_PAD],
                      preferred_element_type=f32)
              + b_ref[B_LINB:B_LINB + B_PAD, 0:CLS_PAD])            # (8, 128)
    m = jnp.max(logits, axis=1, keepdims=True)
    shifted = logits - m
    lse = jnp.log(jnp.sum(jnp.exp(shifted), axis=1, keepdims=True))
    out_ref[...] = shifted - lse


# ------------------------------ JAX wrappers --------------------------------

def _full_specs(arrays):
    """Whole-array BlockSpecs for the single-step grid=(1,)."""
    return [pl.BlockSpec(a.shape, lambda i, _nd=a.ndim: (0,) * _nd)
            for a in arrays]


def prepare_params(params):
    """Torch-layout params -> two packed kernel slabs (done offline, once)."""
    H = params["whh0"].shape[0]
    num_class = params["wlin"].shape[1]
    conv_w = np.asarray(params["conv_w"], np.float32).reshape(3, KH, KW)
    conv_b = np.asarray(params["conv_b"], np.float32)

    def pad_gates(w, rows_pad):
        # torch fused gate order (i, f, g, o) -> kernel (i, f, o, g), each
        # gate padded to H_PAD lanes; extra rows zero.
        w = np.asarray(w, np.float32)
        i, f, g, o = np.split(w, 4, axis=1)
        out = np.zeros((rows_pad, G4), np.float32)
        for k, blk in enumerate((i, f, o, g)):
            out[:w.shape[0], k * H_PAD:k * H_PAD + H] = blk
        return out

    # conv gather-weight: folds im2col (window gather), the conv weights and
    # the 4 max-pool offsets (one 128-lane block each) into a single matrix,
    # with features emitted directly in torch (c, oh, ow) .view order.
    w_all = np.zeros((IMG_K, G4), np.float32)
    for dh in range(POOL):
        for dw in range(POOL):
            blk = (dh * POOL + dw) * FEAT_PAD
            for oh in range(OUT_H):
                for ow in range(OUT_W):
                    for c in range(3):
                        col = blk + c * (OUT_H * OUT_W) + oh * OUT_W + ow
                        for kh in range(KH):
                            for kw in range(KW):
                                r = ((POOL * oh + dh + kh) * IN_W
                                     + (POOL * ow + dw + kw))
                                w_all[r, col] = conv_w[c, kh, kw]

    wih0 = pad_gates(params["wih0"], H_PAD)      # real rows: first FEAT (=18)
    whh0 = pad_gates(params["whh0"], H_PAD)
    wih1 = pad_gates(params["wih1"], H_PAD)
    whh1 = pad_gates(params["whh1"], H_PAD)
    wlin = np.zeros((H_PAD, G4), np.float32)
    wlin[:H, :num_class] = np.asarray(params["wlin"], np.float32)
    w_slab = np.concatenate([w_all, wih0, whh0, wih1, whh1, wlin], axis=0)
    assert w_slab.shape == (W_ROWS, G4)

    cbias = np.zeros((1, G4), np.float32)
    cbias[0, :FEAT] = np.repeat(conv_b, OUT_H * OUT_W)
    blin = np.zeros((1, G4), np.float32)
    blin[0, :CLS_PAD] = -1e30                     # mask padded class lanes
    blin[0, :num_class] = np.asarray(params["blin"], np.float32).reshape(-1)
    b_slab = np.concatenate([
        np.repeat(pad_gates(params["b1"], 1), B_PAD, axis=0),   # rows [0, 8)
        np.repeat(blin, B_PAD, axis=0),                         # rows [8, 16)
        cbias, np.zeros((7, G4), np.float32),                   # row 16
        pad_gates(params["b0"], 1), np.zeros((7, G4), np.float32),  # row 24
    ], axis=0)
    assert b_slab.shape == (B_ROWS, G4)

    return jnp.asarray(w_slab, jnp.bfloat16), jnp.asarray(b_slab, jnp.float32)


@functools.partial(jax.jit, static_argnames=("num_class",))
def network_forward(x, w_slab, b_slab, h0, c0, *, num_class):
    """Mirrors Network.forward (eval mode).  x: (B, T, C, H, W, S)."""
    B, T, C, Hh, Ww, S = x.shape
    assert T == 1 and C == 1, "module semantics require T == 1 and C == 1"
    assert (Hh, Ww) == (IN_H, IN_W), "CNN .view(-1, 3*2*3) forces a 6x10 input"
    assert B <= B_PAD
    N = B * T * S

    # torch: c_in = x.view(B*T*S, C, H, W) (raw row-major reshape, faithful);
    # r_in = c_out.view(B, S, -1): timestep s of batch b is row b*S + s.
    # Reorder rows time-major and pad batch / pixel dims to aligned tiles.
    frames = x.reshape(N, NPIX).reshape(B, S, NPIX).transpose(1, 0, 2)
    frames = jnp.pad(frames, ((0, 0), (0, B_PAD - B), (0, IMG_K - NPIX)))
    img = frames.reshape(S * B_PAD, IMG_K).astype(jnp.bfloat16)

    h0p = jnp.pad(h0, ((0, 0), (0, B_PAD - h0.shape[1]),
                       (0, H_PAD - h0.shape[2])))
    c0p = jnp.pad(c0, ((0, 0), (0, B_PAD - c0.shape[1]),
                       (0, H_PAD - c0.shape[2])))

    inputs = (img, w_slab, b_slab, h0p, c0p)
    # NOTE(v7x): for a real batch (B >> B_PAD) add a leading grid axis over
    # batch blocks marked "parallel" so both TensorCores are used.
    out = pl.pallas_call(
        fused_network_kernel,
        grid=(1,),
        in_specs=_full_specs(inputs),
        out_specs=pl.BlockSpec((B_PAD, CLS_PAD), lambda i: (0, 0)),
        out_shape=jax.ShapeDtypeStruct((B_PAD, CLS_PAD), jnp.float32),
        compiler_params=pltpu.CompilerParams(
            dimension_semantics=("arbitrary",)),
    )(*inputs)
    return out[:B, :num_class]


# --------------------------- params & reference -----------------------------

def init_params(key, num_class=23, hidden_size=50, feat=FEAT):
    """Deterministic init mirroring the PyTorch parameter layout/ranges.

    LSTM weights are stored fused over the 4 gates along the last axis in
    torch gate order (i, f, g, o):
      wih*: (input, 4H) == weight_ih_l*.T,  whh*: (H, 4H) == weight_hh_l*.T,
      b*  : (1, 4H)    == bias_ih_l* + bias_hh_l*
    Linear stored transposed: wlin (H, num_class), blin (1, num_class).
    """
    ks = jax.random.split(key, 12)

    def u(k, shape, bound):
        return jax.random.uniform(k, shape, jnp.float32, -bound, bound)

    kconv = 1.0 / (1 * KH * KW) ** 0.5
    klstm = 1.0 / hidden_size ** 0.5
    g4 = 4 * hidden_size
    return {
        "conv_w": u(ks[0], (3, 1, KH, KW), kconv),
        "conv_b": u(ks[1], (3,), kconv),
        "wih0": u(ks[2], (feat, g4), klstm),
        "whh0": u(ks[3], (hidden_size, g4), klstm),
        "b0": u(ks[4], (1, g4), klstm) + u(ks[5], (1, g4), klstm),
        "wih1": u(ks[6], (hidden_size, g4), klstm),
        "whh1": u(ks[7], (hidden_size, g4), klstm),
        "b1": u(ks[8], (1, g4), klstm) + u(ks[9], (1, g4), klstm),
        "wlin": u(ks[10], (hidden_size, num_class), klstm),
        "blin": u(ks[11], (1, num_class), klstm),
    }


def reference_forward(x, params, h0, c0):
    """Pure-JAX (XLA, f32) eval-mode reference mirroring Network.forward."""
    B, T, C, Hh, Ww, S = x.shape
    N = B * T * S
    c_in = x.reshape(N, C, Hh, Ww)
    conv = jax.lax.conv_general_dilated(
        c_in, params["conv_w"], (1, 1), "VALID",
        dimension_numbers=("NCHW", "OIHW", "NCHW"))
    conv = conv + params["conv_b"][None, :, None, None]        # (N, 3, 4, 6)
    oh, ow = conv.shape[2] // POOL, conv.shape[3] // POOL
    pooled = jnp.max(conv.reshape(N, 3, oh, POOL, ow, POOL), axis=(3, 5))
    feats = jnp.maximum(pooled, 0.0).reshape(N, 3 * oh * ow)   # torch .view
    r_in = feats.reshape(B, S, -1)

    def cell(x_t, h, c, wih, whh, b):
        g = x_t @ wih + h @ whh + b
        i, f, gg, o = jnp.split(g, 4, axis=-1)
        c_new = jax.nn.sigmoid(f) * c + jax.nn.sigmoid(i) * jnp.tanh(gg)
        return jax.nn.sigmoid(o) * jnp.tanh(c_new), c_new

    h1, c1, h2, c2 = h0[0], c0[0], h0[1], c0[1]
    for s in range(S):
        h1, c1 = cell(r_in[:, s], h1, c1,
                      params["wih0"], params["whh0"], params["b0"])
        h2, c2 = cell(h1, h2, c2,
                      params["wih1"], params["whh1"], params["b1"])
    logits = h2 @ params["wlin"] + params["blin"]
    return jax.nn.log_softmax(logits, axis=1)


if __name__ == "__main__":
    key = jax.random.PRNGKey(0)
    kx, kp = jax.random.split(key)

    # Shapes implied by the module: CNN view(-1, 3*2*3) forces H=6, W=10;
    # LSTM input_size=18 forces timesteps=1; Conv2d in_channels forces C=1.
    B, T, C, Hh, Ww, S = 2, 1, 1, IN_H, IN_W, 8
    num_class, hidden_size, num_layers = 23, 50, 2

    x = jax.random.normal(kx, (B, T, C, Hh, Ww, S), jnp.float32)
    params = init_params(kp, num_class=num_class, hidden_size=hidden_size)
    w_slab, b_slab = prepare_params(params)
    h0 = jnp.zeros((num_layers, B, hidden_size), jnp.float32)   # init_hidden
    c0 = jnp.zeros((num_layers, B, hidden_size), jnp.float32)

    out = jax.block_until_ready(
        network_forward(x, w_slab, b_slab, h0, c0, num_class=num_class))
    assert out.shape == (B, num_class), out.shape

    # numerical check vs. a pure-XLA f32 reference; tolerance covers the bf16
    # matmul operands (all cell-state / activation math stays f32 in-kernel)
    ref = jax.block_until_ready(reference_forward(x, params, h0, c0))
    err = float(jnp.max(jnp.abs(out - ref)))
    assert jnp.allclose(out, ref, atol=3e-2, rtol=3e-2), err

    print("KERNEL_OK")
</pallas_src>

<mosaic_0001>
module attributes {stable_mosaic.version = 11 : i64} {
  func.func @fused_network_kernel(%arg0: i32, %arg1: memref<64x64xbf16, #tpu.memory_space<vmem>>, %arg2: memref<704x512xbf16, #tpu.memory_space<vmem>>, %arg3: memref<32x512xf32, #tpu.memory_space<vmem>>, %arg4: memref<2x8x128xf32, #tpu.memory_space<vmem>>, %arg5: memref<2x8x128xf32, #tpu.memory_space<vmem>>, %arg6: memref<8x128xf32, #tpu.memory_space<vmem>>) attributes {dimension_semantics = [#tpu.dimension_semantics<arbitrary>], iteration_bounds = array<i64: 1>, scalar_prefetch = 0 : i64, scratch_operands = 0 : i64, tpu.core_type = #tpu.core_type<tc>, window_params = [{pipeline_mode = #tpu.pipeline_mode<synchronous>, transform_indices = @transform_0, window_bounds = array<i64: 64, 64>}, {pipeline_mode = #tpu.pipeline_mode<synchronous>, transform_indices = @transform_1, window_bounds = array<i64: 704, 512>}, {pipeline_mode = #tpu.pipeline_mode<synchronous>, transform_indices = @transform_2, window_bounds = array<i64: 32, 512>}, {pipeline_mode = #tpu.pipeline_mode<synchronous>, transform_indices = @transform_3, window_bounds = array<i64: 2, 8, 128>}, {pipeline_mode = #tpu.pipeline_mode<synchronous>, transform_indices = @transform_4, window_bounds = array<i64: 2, 8, 128>}, {pipeline_mode = #tpu.pipeline_mode<synchronous>, transform_indices = @transform_5, window_bounds = array<i64: 8, 128>}]} {
    %c0 = arith.constant 0 : index
    %c0_0 = arith.constant 0 : index
    %0 = vector.load %arg1[%c0, %c0_0] : memref<64x64xbf16, #tpu.memory_space<vmem>>, vector<64x64xbf16>
    %c0_1 = arith.constant 0 : index
    %c0_2 = arith.constant 0 : index
    %1 = vector.load %arg2[%c0_1, %c0_2] : memref<704x512xbf16, #tpu.memory_space<vmem>>, vector<64x512xbf16>
    %cst = arith.constant dense<0.000000e+00> : vector<64x512xf32>
    %2 = tpu.matmul %0, %1, %cst {dimension_numbers = #tpu.dot_dimension_numbers<[1], [0], [0], [1], [0, 0, 1, 1], [], []>} : vector<64x64xbf16>, vector<64x512xbf16>, vector<64x512xf32> -> vector<64x512xf32>
    %3 = vector.extract_strided_slice %2 {offsets = [0, 0], sizes = [64, 128], strides = [1, 1]} : vector<64x512xf32> to vector<64x128xf32>
    %4 = vector.extract_strided_slice %2 {offsets = [0, 128], sizes = [64, 128], strides = [1, 1]} : vector<64x512xf32> to vector<64x128xf32>
    %5 = arith.maximumf %3, %4 : vector<64x128xf32>
    %6 = vector.extract_strided_slice %2 {offsets = [0, 256], sizes = [64, 128], strides = [1, 1]} : vector<64x512xf32> to vector<64x128xf32>
    %7 = vector.extract_strided_slice %2 {offsets = [0, 384], sizes = [64, 128], strides = [1, 1]} : vector<64x512xf32> to vector<64x128xf32>
    %8 = arith.maximumf %6, %7 : vector<64x128xf32>
    %9 = arith.maximumf %5, %8 : vector<64x128xf32>
    %c16 = arith.constant 16 : index
    %c0_3 = arith.constant 0 : index
    %10 = vector.load %arg3[%c16, %c0_3] : memref<32x512xf32, #tpu.memory_space<vmem>>, vector<1x128xf32>
    %11 = vector.broadcast %10 : vector<1x128xf32> to vector<64x128xf32>
    %12 = arith.addf %9, %11 : vector<64x128xf32>
    %cst_4 = arith.constant 0.000000e+00 : f32
    %13 = vector.broadcast %cst_4 : f32 to vector<64x128xf32>
    %14 = arith.maximumf %12, %13 : vector<64x128xf32>
    %15 = arith.truncf %14 : vector<64x128xf32> to vector<64x128xbf16>
    %c64 = arith.constant 64 : index
    %c0_5 = arith.constant 0 : index
    %16 = vector.load %arg2[%c64, %c0_5] : memref<704x512xbf16, #tpu.memory_space<vmem>>, vector<128x512xbf16>
    %cst_6 = arith.constant dense<0.000000e+00> : vector<64x512xf32>
    %17 = tpu.matmul %15, %16, %cst_6 {dimension_numbers = #tpu.dot_dimension_numbers<[1], [0], [0], [1], [0, 0, 1, 1], [], []>} : vector<64x128xbf16>, vector<128x512xbf16>, vector<64x512xf32> -> vector<64x512xf32>
    %c24 = arith.constant 24 : index
    %c0_7 = arith.constant 0 : index
    %18 = vector.load %arg3[%c24, %c0_7] : memref<32x512xf32, #tpu.memory_space<vmem>>, vector<1x512xf32>
    %19 = vector.broadcast %18 : vector<1x512xf32> to vector<64x512xf32>
    %20 = arith.addf %17, %19 : vector<64x512xf32>
    %c192 = arith.constant 192 : index
    %c0_8 = arith.constant 0 : index
    %21 = vector.load %arg2[%c192, %c0_8] : memref<704x512xbf16, #tpu.memory_space<vmem>>, vector<128x512xbf16>
    %c320 = arith.constant 320 : index
    %c0_9 = arith.constant 0 : index
    %22 = vector.load %arg2[%c320, %c0_9] : memref<704x512xbf16, #tpu.memory_space<vmem>>, vector<128x512xbf16>
    %c448 = arith.constant 448 : index
    %c0_10 = arith.constant 0 : index
    %23 = vector.load %arg2[%c448, %c0_10] : memref<704x512xbf16, #tpu.memory_space<vmem>>, vector<128x512xbf16>
    %c0_11 = arith.constant 0 : index
    %c0_12 = arith.constant 0 : index
    %24 = vector.load %arg3[%c0_11, %c0_12] : memref<32x512xf32, #tpu.memory_space<vmem>>, vector<8x512xf32>
    %c0_13 = arith.constant 0 : index
    %c0_14 = arith.constant 0 : index
    %c0_15 = arith.constant 0 : index
    %25 = vector.load %arg4[%c0_13, %c0_14, %c0_15] : memref<2x8x128xf32, #tpu.memory_space<vmem>>, vector<1x8x128xf32>
    %26 = vector.shape_cast %25 : vector<1x8x128xf32> to vector<8x128xf32>
    %c0_16 = arith.constant 0 : index
    %c0_17 = arith.constant 0 : index
    %c0_18 = arith.constant 0 : index
    %27 = vector.load %arg5[%c0_16, %c0_17, %c0_18] : memref<2x8x128xf32, #tpu.memory_space<vmem>>, vector<1x8x128xf32>
    %28 = vector.shape_cast %27 : vector<1x8x128xf32> to vector<8x128xf32>
    %c1 = arith.constant 1 : index
    %c0_19 = arith.constant 0 : index
    %c0_20 = arith.constant 0 : index
    %29 = vector.load %arg4[%c1, %c0_19, %c0_20] : memref<2x8x128xf32, #tpu.memory_space<vmem>>, vector<1x8x128xf32>
    %30 = vector.shape_cast %29 : vector<1x8x128xf32> to vector<8x128xf32>
    %c1_21 = arith.constant 1 : index
    %c0_22 = arith.constant 0 : index
    %c0_23 = arith.constant 0 : index
    %31 = vector.load %arg5[%c1_21, %c0_22, %c0_23] : memref<2x8x128xf32, #tpu.memory_space<vmem>>, vector<1x8x128xf32>
    %32 = vector.shape_cast %31 : vector<1x8x128xf32> to vector<8x128xf32>
    %33 = vector.extract_strided_slice %20 {offsets = [0, 0], sizes = [8, 512], strides = [1, 1]} : vector<64x512xf32> to vector<8x512xf32>
    %34 = arith.truncf %26 : vector<8x128xf32> to vector<8x128xbf16>
    %cst_24 = arith.constant dense<0.000000e+00> : vector<8x512xf32>
    %35 = tpu.matmul %34, %21, %cst_24 {dimension_numbers = #tpu.dot_dimension_numbers<[1], [0], [0], [1], [0, 0, 1, 1], [], []>} : vector<8x128xbf16>, vector<128x512xbf16>, vector<8x512xf32> -> vector<8x512xf32>
    %36 = arith.addf %33, %35 : vector<8x512xf32>
    %37 = vector.extract_strided_slice %36 {offsets = [0, 0], sizes = [8, 384], strides = [1, 1]} : vector<8x512xf32> to vector<8x384xf32>
    %38 = arith.negf %37 : vector<8x384xf32>
    %39 = math.exp %38 : vector<8x384xf32>
    %cst_25 = arith.constant 1.000000e+00 : f32
    %40 = vector.broadcast %cst_25 : f32 to vector<8x384xf32>
    %41 = arith.addf %40, %39 : vector<8x384xf32>
    %42 = arith.divf %40, %41 : vector<8x384xf32>
    %43 = vector.extract_strided_slice %36 {offsets = [0, 384], sizes = [8, 128], strides = [1, 1]} : vector<8x512xf32> to vector<8x128xf32>
    %44 = math.tanh %43 : vector<8x128xf32>
    %45 = vector.extract_strided_slice %42 {offsets = [0, 128], sizes = [8, 128], strides = [1, 1]} : vector<8x384xf32> to vector<8x128xf32>
    %46 = arith.mulf %45, %28 : vector<8x128xf32>
    %47 = vector.extract_strided_slice %42 {offsets = [0, 0], sizes = [8, 128], strides = [1, 1]} : vector<8x384xf32> to vector<8x128xf32>
    %48 = arith.mulf %47, %44 : vector<8x128xf32>
    %49 = arith.addf %46, %48 : vector<8x128xf32>
    %50 = vector.extract_strided_slice %42 {offsets = [0, 256], sizes = [8, 128], strides = [1, 1]} : vector<8x384xf32> to vector<8x128xf32>
    %51 = math.tanh %49 : vector<8x128xf32>
    %52 = arith.mulf %50, %51 : vector<8x128xf32>
    %53 = arith.truncf %52 : vector<8x128xf32> to vector<8x128xbf16>
    %cst_26 = arith.constant dense<0.000000e+00> : vector<8x512xf32>
    %54 = tpu.matmul %53, %22, %cst_26 {dimension_numbers = #tpu.dot_dimension_numbers<[1], [0], [0], [1], [0, 0, 1, 1], [], []>} : vector<8x128xbf16>, vector<128x512xbf16>, vector<8x512xf32> -> vector<8x512xf32>
    %55 = arith.truncf %30 : vector<8x128xf32> to vector<8x128xbf16>
    %cst_27 = arith.constant dense<0.000000e+00> : vector<8x512xf32>
    %56 = tpu.matmul %55, %23, %cst_27 {dimension_numbers = #tpu.dot_dimension_numbers<[1], [0], [0], [1], [0, 0, 1, 1], [], []>} : vector<8x128xbf16>, vector<128x512xbf16>, vector<8x512xf32> -> vector<8x512xf32>
    %57 = arith.addf %54, %56 : vector<8x512xf32>
    %58 = arith.addf %57, %24 : vector<8x512xf32>
    %59 = vector.extract_strided_slice %58 {offsets = [0, 0], sizes = [8, 384], strides = [1, 1]} : vector<8x512xf32> to vector<8x384xf32>
    %60 = arith.negf %59 : vector<8x384xf32>
    %61 = math.exp %60 : vector<8x384xf32>
    %cst_28 = arith.constant 1.000000e+00 : f32
    %62 = vector.broadcast %cst_28 : f32 to vector<8x384xf32>
    %63 = arith.addf %62, %61 : vector<8x384xf32>
    %64 = arith.divf %62, %63 : vector<8x384xf32>
    %65 = vector.extract_strided_slice %58 {offsets = [0, 384], sizes = [8, 128], strides = [1, 1]} : vector<8x512xf32> to vector<8x128xf32>
    %66 = math.tanh %65 : vector<8x128xf32>
    %67 = vector.extract_strided_slice %64 {offsets = [0, 128], sizes = [8, 128], strides = [1, 1]} : vector<8x384xf32> to vector<8x128xf32>
    %68 = arith.mulf %67, %32 : vector<8x128xf32>
    %69 = vector.extract_strided_slice %64 {offsets = [0, 0], sizes = [8, 128], strides = [1, 1]} : vector<8x384xf32> to vector<8x128xf32>
    %70 = arith.mulf %69, %66 : vector<8x128xf32>
    %71 = arith.addf %68, %70 : vector<8x128xf32>
    %72 = vector.extract_strided_slice %64 {offsets = [0, 256], sizes = [8, 128], strides = [1, 1]} : vector<8x384xf32> to vector<8x128xf32>
    %73 = math.tanh %71 : vector<8x128xf32>
    %74 = arith.mulf %72, %73 : vector<8x128xf32>
    %75 = vector.extract_strided_slice %20 {offsets = [8, 0], sizes = [8, 512], strides = [1, 1]} : vector<64x512xf32> to vector<8x512xf32>
    %76 = arith.truncf %52 : vector<8x128xf32> to vector<8x128xbf16>
    %cst_29 = arith.constant dense<0.000000e+00> : vector<8x512xf32>
    %77 = tpu.matmul %76, %21, %cst_29 {dimension_numbers = #tpu.dot_dimension_numbers<[1], [0], [0], [1], [0, 0, 1, 1], [], []>} : vector<8x128xbf16>, vector<128x512xbf16>, vector<8x512xf32> -> vector<8x512xf32>
    %78 = arith.addf %75, %77 : vector<8x512xf32>
    %79 = vector.extract_strided_slice %78 {offsets = [0, 0], sizes = [8, 384], strides = [1, 1]} : vector<8x512xf32> to vector<8x384xf32>
    %80 = arith.negf %79 : vector<8x384xf32>
    %81 = math.exp %80 : vector<8x384xf32>
    %cst_30 = arith.constant 1.000000e+00 : f32
    %82 = vector.broadcast %cst_30 : f32 to vector<8x384xf32>
    %83 = arith.addf %82, %81 : vector<8x384xf32>
    %84 = arith.divf %82, %83 : vector<8x384xf32>
    %85 = vector.extract_strided_slice %78 {offsets = [0, 384], sizes = [8, 128], strides = [1, 1]} : vector<8x512xf32> to vector<8x128xf32>
    %86 = math.tanh %85 : vector<8x128xf32>
    %87 = vector.extract_strided_slice %84 {offsets = [0, 128], sizes = [8, 128], strides = [1, 1]} : vector<8x384xf32> to vector<8x128xf32>
    %88 = arith.mulf %87, %49 : vector<8x128xf32>
    %89 = vector.extract_strided_slice %84 {offsets = [0, 0], sizes = [8, 128], strides = [1, 1]} : vector<8x384xf32> to vector<8x128xf32>
    %90 = arith.mulf %89, %86 : vector<8x128xf32>
    %91 = arith.addf %88, %90 : vector<8x128xf32>
    %92 = vector.extract_strided_slice %84 {offsets = [0, 256], sizes = [8, 128], strides = [1, 1]} : vector<8x384xf32> to vector<8x128xf32>
    %93 = math.tanh %91 : vector<8x128xf32>
    %94 = arith.mulf %92, %93 : vector<8x128xf32>
    %95 = arith.truncf %94 : vector<8x128xf32> to vector<8x128xbf16>
    %cst_31 = arith.constant dense<0.000000e+00> : vector<8x512xf32>
    %96 = tpu.matmul %95, %22, %cst_31 {dimension_numbers = #tpu.dot_dimension_numbers<[1], [0], [0], [1], [0, 0, 1, 1], [], []>} : vector<8x128xbf16>, vector<128x512xbf16>, vector<8x512xf32> -> vector<8x512xf32>
    %97 = arith.truncf %74 : vector<8x128xf32> to vector<8x128xbf16>
    %cst_32 = arith.constant dense<0.000000e+00> : vector<8x512xf32>
    %98 = tpu.matmul %97, %23, %cst_32 {dimension_numbers = #tpu.dot_dimension_numbers<[1], [0], [0], [1], [0, 0, 1, 1], [], []>} : vector<8x128xbf16>, vector<128x512xbf16>, vector<8x512xf32> -> vector<8x512xf32>
    %99 = arith.addf %96, %98 : vector<8x512xf32>
    %100 = arith.addf %99, %24 : vector<8x512xf32>
    %101 = vector.extract_strided_slice %100 {offsets = [0, 0], sizes = [8, 384], strides = [1, 1]} : vector<8x512xf32> to vector<8x384xf32>
    %102 = arith.negf %101 : vector<8x384xf32>
    %103 = math.exp %102 : vector<8x384xf32>
    %cst_33 = arith.constant 1.000000e+00 : f32
    %104 = vector.broadcast %cst_33 : f32 to vector<8x384xf32>
    %105 = arith.addf %104, %103 : vector<8x384xf32>
    %106 = arith.divf %104, %105 : vector<8x384xf32>
    %107 = vector.extract_strided_slice %100 {offsets = [0, 384], sizes = [8, 128], strides = [1, 1]} : vector<8x512xf32> to vector<8x128xf32>
    %108 = math.tanh %107 : vector<8x128xf32>
    %109 = vector.extract_strided_slice %106 {offsets = [0, 128], sizes = [8, 128], strides = [1, 1]} : vector<8x384xf32> to vector<8x128xf32>
    %110 = arith.mulf %109, %71 : vector<8x128xf32>
    %111 = vector.extract_strided_slice %106 {offsets = [0, 0], sizes = [8, 128], strides = [1, 1]} : vector<8x384xf32> to vector<8x128xf32>
    %112 = arith.mulf %111, %108 : vector<8x128xf32>
    %113 = arith.addf %110, %112 : vector<8x128xf32>
    %114 = vector.extract_strided_slice %106 {offsets = [0, 256], sizes = [8, 128], strides = [1, 1]} : vector<8x384xf32> to vector<8x128xf32>
    %115 = math.tanh %113 : vector<8x128xf32>
    %116 = arith.mulf %114, %115 : vector<8x128xf32>
    %117 = vector.extract_strided_slice %20 {offsets = [16, 0], sizes = [8, 512], strides = [1, 1]} : vector<64x512xf32> to vector<8x512xf32>
    %118 = arith.truncf %94 : vector<8x128xf32> to vector<8x128xbf16>
    %cst_34 = arith.constant dense<0.000000e+00> : vector<8x512xf32>
    %119 = tpu.matmul %118, %21, %cst_34 {dimension_numbers = #tpu.dot_dimension_numbers<[1], [0], [0], [1], [0, 0, 1, 1], [], []>} : vector<8x128xbf16>, vector<128x512xbf16>, vector<8x512xf32> -> vector<8x512xf32>
    %120 = arith.addf %117, %119 : vector<8x512xf32>
    %121 = vector.extract_strided_slice %120 {offsets = [0, 0], sizes = [8, 384], strides = [1, 1]} : vector<8x512xf32> to vector<8x384xf32>
    %122 = arith.negf %121 : vector<8x384xf32>
    %123 = math.exp %122 : vector<8x384xf32>
    %cst_35 = arith.constant 1.000000e+00 : f32
    %124 = vector.broadcast %cst_35 : f32 to vector<8x384xf32>
    %125 = arith.addf %124, %123 : vector<8x384xf32>
    %126 = arith.divf %124, %125 : vector<8x384xf32>
    %127 = vector.extract_strided_slice %120 {offsets = [0, 384], sizes = [8, 128], strides = [1, 1]} : vector<8x512xf32> to vector<8x128xf32>
    %128 = math.tanh %127 : vector<8x128xf32>
    %129 = vector.extract_strided_slice %126 {offsets = [0, 128], sizes = [8, 128], strides = [1, 1]} : vector<8x384xf32> to vector<8x128xf32>
    %130 = arith.mulf %129, %91 : vector<8x128xf32>
    %131 = vector.extract_strided_slice %126 {offsets = [0, 0], sizes = [8, 128], strides = [1, 1]} : vector<8x384xf32> to vector<8x128xf32>
    %132 = arith.mulf %131, %128 : vector<8x128xf32>
    %133 = arith.addf %130, %132 : vector<8x128xf32>
    %134 = vector.extract_strided_slice %126 {offsets = [0, 256], sizes = [8, 128], strides = [1, 1]} : vector<8x384xf32> to vector<8x128xf32>
    %135 = math.tanh %133 : vector<8x128xf32>
    %136 = arith.mulf %134, %135 : vector<8x128xf32>
    %137 = arith.truncf %136 : vector<8x128xf32> to vector<8x128xbf16>
    %cst_36 = arith.constant dense<0.000000e+00> : vector<8x512xf32>
    %138 = tpu.matmul %137, %22, %cst_36 {dimension_numbers = #tpu.dot_dimension_numbers<[1], [0], [0], [1], [0, 0, 1, 1], [], []>} : vector<8x128xbf16>, vector<128x512xbf16>, vector<8x512xf32> -> vector<8x512xf32>
    %139 = arith.truncf %116 : vector<8x128xf32> to vector<8x128xbf16>
    %cst_37 = arith.constant dense<0.000000e+00> : vector<8x512xf32>
    %140 = tpu.matmul %139, %23, %cst_37 {dimension_numbers = #tpu.dot_dimension_numbers<[1], [0], [0], [1], [0, 0, 1, 1], [], []>} : vector<8x128xbf16>, vector<128x512xbf16>, vector<8x512xf32> -> vector<8x512xf32>
    %141 = arith.addf %138, %140 : vector<8x512xf32>
    %142 = arith.addf %141, %24 : vector<8x512xf32>
    %143 = vector.extract_strided_slice %142 {offsets = [0, 0], sizes = [8, 384], strides = [1, 1]} : vector<8x512xf32> to vector<8x384xf32>
    %144 = arith.negf %143 : vector<8x384xf32>
    %145 = math.exp %144 : vector<8x384xf32>
    %cst_38 = arith.constant 1.000000e+00 : f32
    %146 = vector.broadcast %cst_38 : f32 to vector<8x384xf32>
    %147 = arith.addf %146, %145 : vector<8x384xf32>
    %148 = arith.divf %146, %147 : vector<8x384xf32>
    %149 = vector.extract_strided_slice %142 {offsets = [0, 384], sizes = [8, 128], strides = [1, 1]} : vector<8x512xf32> to vector<8x128xf32>
    %150 = math.tanh %149 : vector<8x128xf32>
    %151 = vector.extract_strided_slice %148 {offsets = [0, 128], sizes = [8, 128], strides = [1, 1]} : vector<8x384xf32> to vector<8x128xf32>
    %152 = arith.mulf %151, %113 : vector<8x128xf32>
    %153 = vector.extract_strided_slice %148 {offsets = [0, 0], sizes = [8, 128], strides = [1, 1]} : vector<8x384xf32> to vector<8x128xf32>
    %154 = arith.mulf %153, %150 : vector<8x128xf32>
    %155 = arith.addf %152, %154 : vector<8x128xf32>
    %156 = vector.extract_strided_slice %148 {offsets = [0, 256], sizes = [8, 128], strides = [1, 1]} : vector<8x384xf32> to vector<8x128xf32>
    %157 = math.tanh %155 : vector<8x128xf32>
    %158 = arith.mulf %156, %157 : vector<8x128xf32>
    %159 = vector.extract_strided_slice %20 {offsets = [24, 0], sizes = [8, 512], strides = [1, 1]} : vector<64x512xf32> to vector<8x512xf32>
    %160 = arith.truncf %136 : vector<8x128xf32> to vector<8x128xbf16>
    %cst_39 = arith.constant dense<0.000000e+00> : vector<8x512xf32>
    %161 = tpu.matmul %160, %21, %cst_39 {dimension_numbers = #tpu.dot_dimension_numbers<[1], [0], [0], [1], [0, 0, 1, 1], [], []>} : vector<8x128xbf16>, vector<128x512xbf16>, vector<8x512xf32> -> vector<8x512xf32>
    %162 = arith.addf %159, %161 : vector<8x512xf32>
    %163 = vector.extract_strided_slice %162 {offsets = [0, 0], sizes = [8, 384], strides = [1, 1]} : vector<8x512xf32> to vector<8x384xf32>
    %164 = arith.negf %163 : vector<8x384xf32>
    %165 = math.exp %164 : vector<8x384xf32>
    %cst_40 = arith.constant 1.000000e+00 : f32
    %166 = vector.broadcast %cst_40 : f32 to vector<8x384xf32>
    %167 = arith.addf %166, %165 : vector<8x384xf32>
    %168 = arith.divf %166, %167 : vector<8x384xf32>
    %169 = vector.extract_strided_slice %162 {offsets = [0, 384], sizes = [8, 128], strides = [1, 1]} : vector<8x512xf32> to vector<8x128xf32>
    %170 = math.tanh %169 : vector<8x128xf32>
    %171 = vector.extract_strided_slice %168 {offsets = [0, 128], sizes = [8, 128], strides = [1, 1]} : vector<8x384xf32> to vector<8x128xf32>
    %172 = arith.mulf %171, %133 : vector<8x128xf32>
    %173 = vector.extract_strided_slice %168 {offsets = [0, 0], sizes = [8, 128], strides = [1, 1]} : vector<8x384xf32> to vector<8x128xf32>
    %174 = arith.mulf %173, %170 : vector<8x128xf32>
    %175 = arith.addf %172, %174 : vector<8x128xf32>
    %176 = vector.extract_strided_slice %168 {offsets = [0, 256], sizes = [8, 128], strides = [1, 1]} : vector<8x384xf32> to vector<8x128xf32>
    %177 = math.tanh %175 : vector<8x128xf32>
    %178 = arith.mulf %176, %177 : vector<8x128xf32>
    %179 = arith.truncf %178 : vector<8x128xf32> to vector<8x128xbf16>
    %cst_41 = arith.constant dense<0.000000e+00> : vector<8x512xf32>
    %180 = tpu.matmul %179, %22, %cst_41 {dimension_numbers = #tpu.dot_dimension_numbers<[1], [0], [0], [1], [0, 0, 1, 1], [], []>} : vector<8x128xbf16>, vector<128x512xbf16>, vector<8x512xf32> -> vector<8x512xf32>
    %181 = arith.truncf %158 : vector<8x128xf32> to vector<8x128xbf16>
    %cst_42 = arith.constant dense<0.000000e+00> : vector<8x512xf32>
    %182 = tpu.matmul %181, %23, %cst_42 {dimension_numbers = #tpu.dot_dimension_numbers<[1], [0], [0], [1], [0, 0, 1, 1], [], []>} : vector<8x128xbf16>, vector<128x512xbf16>, vector<8x512xf32> -> vector<8x512xf32>
    %183 = arith.addf %180, %182 : vector<8x512xf32>
    %184 = arith.addf %183, %24 : vector<8x512xf32>
    %185 = vector.extract_strided_slice %184 {offsets = [0, 0], sizes = [8, 384], strides = [1, 1]} : vector<8x512xf32> to vector<8x384xf32>
    %186 = arith.negf %185 : vector<8x384xf32>
    %187 = math.exp %186 : vector<8x384xf32>
    %cst_43 = arith.constant 1.000000e+00 : f32
    %188 = vector.broadcast %cst_43 : f32 to vector<8x384xf32>
    %189 = arith.addf %188, %187 : vector<8x384xf32>
    %190 = arith.divf %188, %189 : vector<8x384xf32>
    %191 = vector.extract_strided_slice %184 {offsets = [0, 384], sizes = [8, 128], strides = [1, 1]} : vector<8x512xf32> to vector<8x128xf32>
    %192 = math.tanh %191 : vector<8x128xf32>
    %193 = vector.extract_strided_slice %190 {offsets = [0, 128], sizes = [8, 128], strides = [1, 1]} : vector<8x384xf32> to vector<8x128xf32>
    %194 = arith.mulf %193, %155 : vector<8x128xf32>
    %195 = vector.extract_strided_slice %190 {offsets = [0, 0], sizes = [8, 128], strides = [1, 1]} : vector<8x384xf32> to vector<8x128xf32>
    %196 = arith.mulf %195, %192 : vector<8x128xf32>
    %197 = arith.addf %194, %196 : vector<8x128xf32>
    %198 = vector.extract_strided_slice %190 {offsets = [0, 256], sizes = [8, 128], strides = [1, 1]} : vector<8x384xf32> to vector<8x128xf32>
    %199 = math.tanh %197 : vector<8x128xf32>
    %200 = arith.mulf %198, %199 : vector<8x128xf32>
    %201 = vector.extract_strided_slice %20 {offsets = [32, 0], sizes = [8, 512], strides = [1, 1]} : vector<64x512xf32> to vector<8x512xf32>
    %202 = arith.truncf %178 : vector<8x128xf32> to vector<8x128xbf16>
    %cst_44 = arith.constant dense<0.000000e+00> : vector<8x512xf32>
    %203 = tpu.matmul %202, %21, %cst_44 {dimension_numbers = #tpu.dot_dimension_numbers<[1], [0], [0], [1], [0, 0, 1, 1], [], []>} : vector<8x128xbf16>, vector<128x512xbf16>, vector<8x512xf32> -> vector<8x512xf32>
    %204 = arith.addf %201, %203 : vector<8x512xf32>
    %205 = vector.extract_strided_slice %204 {offsets = [0, 0], sizes = [8, 384], strides = [1, 1]} : vector<8x512xf32> to vector<8x384xf32>
    %206 = arith.negf %205 : vector<8x384xf32>
    %207 = math.exp %206 : vector<8x384xf32>
    %cst_45 = arith.constant 1.000000e+00 : f32
    %208 = vector.broadcast %cst_45 : f32 to vector<8x384xf32>
    %209 = arith.addf %208, %207 : vector<8x384xf32>
    %210 = arith.divf %208, %209 : vector<8x384xf32>
    %211 = vector.extract_strided_slice %204 {offsets = [0, 384], sizes = [8, 128], strides = [1, 1]} : vector<8x512xf32> to vector<8x128xf32>
    %212 = math.tanh %211 : vector<8x128xf32>
    %213 = vector.extract_strided_slice %210 {offsets = [0, 128], sizes = [8, 128], strides = [1, 1]} : vector<8x384xf32> to vector<8x128xf32>
    %214 = arith.mulf %213, %175 : vector<8x128xf32>
    %215 = vector.extract_strided_slice %210 {offsets = [0, 0], sizes = [8, 128], strides = [1, 1]} : vector<8x384xf32> to vector<8x128xf32>
    %216 = arith.mulf %215, %212 : vector<8x128xf32>
    %217 = arith.addf %214, %216 : vector<8x128xf32>
    %218 = vector.extract_strided_slice %210 {offsets = [0, 256], sizes = [8, 128], strides = [1, 1]} : vector<8x384xf32> to vector<8x128xf32>
    %219 = math.tanh %217 : vector<8x128xf32>
    %220 = arith.mulf %218, %219 : vector<8x128xf32>
    %221 = arith.truncf %220 : vector<8x128xf32> to vector<8x128xbf16>
    %cst_46 = arith.constant dense<0.000000e+00> : vector<8x512xf32>
    %222 = tpu.matmul %221, %22, %cst_46 {dimension_numbers = #tpu.dot_dimension_numbers<[1], [0], [0], [1], [0, 0, 1, 1], [], []>} : vector<8x128xbf16>, vector<128x512xbf16>, vector<8x512xf32> -> vector<8x512xf32>
    %223 = arith.truncf %200 : vector<8x128xf32> to vector<8x128xbf16>
    %cst_47 = arith.constant dense<0.000000e+00> : vector<8x512xf32>
    %224 = tpu.matmul %223, %23, %cst_47 {dimension_numbers = #tpu.dot_dimension_numbers<[1], [0], [0], [1], [0, 0, 1, 1], [], []>} : vector<8x128xbf16>, vector<128x512xbf16>, vector<8x512xf32> -> vector<8x512xf32>
    %225 = arith.addf %222, %224 : vector<8x512xf32>
    %226 = arith.addf %225, %24 : vector<8x512xf32>
    %227 = vector.extract_strided_slice %226 {offsets = [0, 0], sizes = [8, 384], strides = [1, 1]} : vector<8x512xf32> to vector<8x384xf32>
    %228 = arith.negf %227 : vector<8x384xf32>
    %229 = math.exp %228 : vector<8x384xf32>
    %cst_48 = arith.constant 1.000000e+00 : f32
    %230 = vector.broadcast %cst_48 : f32 to vector<8x384xf32>
    %231 = arith.addf %230, %229 : vector<8x384xf32>
    %232 = arith.divf %230, %231 : vector<8x384xf32>
    %233 = vector.extract_strided_slice %226 {offsets = [0, 384], sizes = [8, 128], strides = [1, 1]} : vector<8x512xf32> to vector<8x128xf32>
    %234 = math.tanh %233 : vector<8x128xf32>
    %235 = vector.extract_strided_slice %232 {offsets = [0, 128], sizes = [8, 128], strides = [1, 1]} : vector<8x384xf32> to vector<8x128xf32>
    %236 = arith.mulf %235, %197 : vector<8x128xf32>
    %237 = vector.extract_strided_slice %232 {offsets = [0, 0], sizes = [8, 128], strides = [1, 1]} : vector<8x384xf32> to vector<8x128xf32>
    %238 = arith.mulf %237, %234 : vector<8x128xf32>
    %239 = arith.addf %236, %238 : vector<8x128xf32>
    %240 = vector.extract_strided_slice %232 {offsets = [0, 256], sizes = [8, 128], strides = [1, 1]} : vector<8x384xf32> to vector<8x128xf32>
    %241 = math.tanh %239 : vector<8x128xf32>
    %242 = arith.mulf %240, %241 : vector<8x128xf32>
    %243 = vector.extract_strided_slice %20 {offsets = [40, 0], sizes = [8, 512], strides = [1, 1]} : vector<64x512xf32> to vector<8x512xf32>
    %244 = arith.truncf %220 : vector<8x128xf32> to vector<8x128xbf16>
    %cst_49 = arith.constant dense<0.000000e+00> : vector<8x512xf32>
    %245 = tpu.matmul %244, %21, %cst_49 {dimension_numbers = #tpu.dot_dimension_numbers<[1], [0], [0], [1], [0, 0, 1, 1], [], []>} : vector<8x128xbf16>, vector<128x512xbf16>, vector<8x512xf32> -> vector<8x512xf32>
    %246 = arith.addf %243, %245 : vector<8x512xf32>
    %247 = vector.extract_strided_slice %246 {offsets = [0, 0], sizes = [8, 384], strides = [1, 1]} : vector<8x512xf32> to vector<8x384xf32>
    %248 = arith.negf %247 : vector<8x384xf32>
    %249 = math.exp %248 : vector<8x384xf32>
    %cst_50 = arith.constant 1.000000e+00 : f32
    %250 = vector.broadcast %cst_50 : f32 to vector<8x384xf32>
    %251 = arith.addf %250, %249 : vector<8x384xf32>
    %252 = arith.divf %250, %251 : vector<8x384xf32>
    %253 = vector.extract_strided_slice %246 {offsets = [0, 384], sizes = [8, 128], strides = [1, 1]} : vector<8x512xf32> to vector<8x128xf32>
    %254 = math.tanh %253 : vector<8x128xf32>
    %255 = vector.extract_strided_slice %252 {offsets = [0, 128], sizes = [8, 128], strides = [1, 1]} : vector<8x384xf32> to vector<8x128xf32>
    %256 = arith.mulf %255, %217 : vector<8x128xf32>
    %257 = vector.extract_strided_slice %252 {offsets = [0, 0], sizes = [8, 128], strides = [1, 1]} : vector<8x384xf32> to vector<8x128xf32>
    %258 = arith.mulf %257, %254 : vector<8x128xf32>
    %259 = arith.addf %256, %258 : vector<8x128xf32>
    %260 = vector.extract_strided_slice %252 {offsets = [0, 256], sizes = [8, 128], strides = [1, 1]} : vector<8x384xf32> to vector<8x128xf32>
    %261 = math.tanh %259 : vector<8x128xf32>
    %262 = arith.mulf %260, %261 : vector<8x128xf32>
    %263 = arith.truncf %262 : vector<8x128xf32> to vector<8x128xbf16>
    %cst_51 = arith.constant dense<0.000000e+00> : vector<8x512xf32>
    %264 = tpu.matmul %263, %22, %cst_51 {dimension_numbers = #tpu.dot_dimension_numbers<[1], [0], [0], [1], [0, 0, 1, 1], [], []>} : vector<8x128xbf16>, vector<128x512xbf16>, vector<8x512xf32> -> vector<8x512xf32>
    %265 = arith.truncf %242 : vector<8x128xf32> to vector<8x128xbf16>
    %cst_52 = arith.constant dense<0.000000e+00> : vector<8x512xf32>
    %266 = tpu.matmul %265, %23, %cst_52 {dimension_numbers = #tpu.dot_dimension_numbers<[1], [0], [0], [1], [0, 0, 1, 1], [], []>} : vector<8x128xbf16>, vector<128x512xbf16>, vector<8x512xf32> -> vector<8x512xf32>
    %267 = arith.addf %264, %266 : vector<8x512xf32>
    %268 = arith.addf %267, %24 : vector<8x512xf32>
    %269 = vector.extract_strided_slice %268 {offsets = [0, 0], sizes = [8, 384], strides = [1, 1]} : vector<8x512xf32> to vector<8x384xf32>
    %270 = arith.negf %269 : vector<8x384xf32>
    %271 = math.exp %270 : vector<8x384xf32>
    %cst_53 = arith.constant 1.000000e+00 : f32
    %272 = vector.broadcast %cst_53 : f32 to vector<8x384xf32>
    %273 = arith.addf %272, %271 : vector<8x384xf32>
    %274 = arith.divf %272, %273 : vector<8x384xf32>
    %275 = vector.extract_strided_slice %268 {offsets = [0, 384], sizes = [8, 128], strides = [1, 1]} : vector<8x512xf32> to vector<8x128xf32>
    %276 = math.tanh %275 : vector<8x128xf32>
    %277 = vector.extract_strided_slice %274 {offsets = [0, 128], sizes = [8, 128], strides = [1, 1]} : vector<8x384xf32> to vector<8x128xf32>
    %278 = arith.mulf %277, %239 : vector<8x128xf32>
    %279 = vector.extract_strided_slice %274 {offsets = [0, 0], sizes = [8, 128], strides = [1, 1]} : vector<8x384xf32> to vector<8x128xf32>
    %280 = arith.mulf %279, %276 : vector<8x128xf32>
    %281 = arith.addf %278, %280 : vector<8x128xf32>
    %282 = vector.extract_strided_slice %274 {offsets = [0, 256], sizes = [8, 128], strides = [1, 1]} : vector<8x384xf32> to vector<8x128xf32>
    %283 = math.tanh %281 : vector<8x128xf32>
    %284 = arith.mulf %282, %283 : vector<8x128xf32>
    %285 = vector.extract_strided_slice %20 {offsets = [48, 0], sizes = [8, 512], strides = [1, 1]} : vector<64x512xf32> to vector<8x512xf32>
    %286 = arith.truncf %262 : vector<8x128xf32> to vector<8x128xbf16>
    %cst_54 = arith.constant dense<0.000000e+00> : vector<8x512xf32>
    %287 = tpu.matmul %286, %21, %cst_54 {dimension_numbers = #tpu.dot_dimension_numbers<[1], [0], [0], [1], [0, 0, 1, 1], [], []>} : vector<8x128xbf16>, vector<128x512xbf16>, vector<8x512xf32> -> vector<8x512xf32>
    %288 = arith.addf %285, %287 : vector<8x512xf32>
    %289 = vector.extract_strided_slice %288 {offsets = [0, 0], sizes = [8, 384], strides = [1, 1]} : vector<8x512xf32> to vector<8x384xf32>
    %290 = arith.negf %289 : vector<8x384xf32>
    %291 = math.exp %290 : vector<8x384xf32>
    %cst_55 = arith.constant 1.000000e+00 : f32
    %292 = vector.broadcast %cst_55 : f32 to vector<8x384xf32>
    %293 = arith.addf %292, %291 : vector<8x384xf32>
    %294 = arith.divf %292, %293 : vector<8x384xf32>
    %295 = vector.extract_strided_slice %288 {offsets = [0, 384], sizes = [8, 128], strides = [1, 1]} : vector<8x512xf32> to vector<8x128xf32>
    %296 = math.tanh %295 : vector<8x128xf32>
    %297 = vector.extract_strided_slice %294 {offsets = [0, 128], sizes = [8, 128], strides = [1, 1]} : vector<8x384xf32> to vector<8x128xf32>
    %298 = arith.mulf %297, %259 : vector<8x128xf32>
    %299 = vector.extract_strided_slice %294 {offsets = [0, 0], sizes = [8, 128], strides = [1, 1]} : vector<8x384xf32> to vector<8x128xf32>
    %300 = arith.mulf %299, %296 : vector<8x128xf32>
    %301 = arith.addf %298, %300 : vector<8x128xf32>
    %302 = vector.extract_strided_slice %294 {offsets = [0, 256], sizes = [8, 128], strides = [1, 1]} : vector<8x384xf32> to vector<8x128xf32>
    %303 = math.tanh %301 : vector<8x128xf32>
    %304 = arith.mulf %302, %303 : vector<8x128xf32>
    %305 = arith.truncf %304 : vector<8x128xf32> to vector<8x128xbf16>
    %cst_56 = arith.constant dense<0.000000e+00> : vector<8x512xf32>
    %306 = tpu.matmul %305, %22, %cst_56 {dimension_numbers = #tpu.dot_dimension_numbers<[1], [0], [0], [1], [0, 0, 1, 1], [], []>} : vector<8x128xbf16>, vector<128x512xbf16>, vector<8x512xf32> -> vector<8x512xf32>
    %307 = arith.truncf %284 : vector<8x128xf32> to vector<8x128xbf16>
    %cst_57 = arith.constant dense<0.000000e+00> : vector<8x512xf32>
    %308 = tpu.matmul %307, %23, %cst_57 {dimension_numbers = #tpu.dot_dimension_numbers<[1], [0], [0], [1], [0, 0, 1, 1], [], []>} : vector<8x128xbf16>, vector<128x512xbf16>, vector<8x512xf32> -> vector<8x512xf32>
    %309 = arith.addf %306, %308 : vector<8x512xf32>
    %310 = arith.addf %309, %24 : vector<8x512xf32>
    %311 = vector.extract_strided_slice %310 {offsets = [0, 0], sizes = [8, 384], strides = [1, 1]} : vector<8x512xf32> to vector<8x384xf32>
    %312 = arith.negf %311 : vector<8x384xf32>
    %313 = math.exp %312 : vector<8x384xf32>
    %cst_58 = arith.constant 1.000000e+00 : f32
    %314 = vector.broadcast %cst_58 : f32 to vector<8x384xf32>
    %315 = arith.addf %314, %313 : vector<8x384xf32>
    %316 = arith.divf %314, %315 : vector<8x384xf32>
    %317 = vector.extract_strided_slice %310 {offsets = [0, 384], sizes = [8, 128], strides = [1, 1]} : vector<8x512xf32> to vector<8x128xf32>
    %318 = math.tanh %317 : vector<8x128xf32>
    %319 = vector.extract_strided_slice %316 {offsets = [0, 128], sizes = [8, 128], strides = [1, 1]} : vector<8x384xf32> to vector<8x128xf32>
    %320 = arith.mulf %319, %281 : vector<8x128xf32>
    %321 = vector.extract_strided_slice %316 {offsets = [0, 0], sizes = [8, 128], strides = [1, 1]} : vector<8x384xf32> to vector<8x128xf32>
    %322 = arith.mulf %321, %318 : vector<8x128xf32>
    %323 = arith.addf %320, %322 : vector<8x128xf32>
    %324 = vector.extract_strided_slice %316 {offsets = [0, 256], sizes = [8, 128], strides = [1, 1]} : vector<8x384xf32> to vector<8x128xf32>
    %325 = math.tanh %323 : vector<8x128xf32>
    %326 = arith.mulf %324, %325 : vector<8x128xf32>
    %327 = vector.extract_strided_slice %20 {offsets = [56, 0], sizes = [8, 512], strides = [1, 1]} : vector<64x512xf32> to vector<8x512xf32>
    %328 = arith.truncf %304 : vector<8x128xf32> to vector<8x128xbf16>
    %cst_59 = arith.constant dense<0.000000e+00> : vector<8x512xf32>
    %329 = tpu.matmul %328, %21, %cst_59 {dimension_numbers = #tpu.dot_dimension_numbers<[1], [0], [0], [1], [0, 0, 1, 1], [], []>} : vector<8x128xbf16>, vector<128x512xbf16>, vector<8x512xf32> -> vector<8x512xf32>
    %330 = arith.addf %327, %329 : vector<8x512xf32>
    %331 = vector.extract_strided_slice %330 {offsets = [0, 0], sizes = [8, 384], strides = [1, 1]} : vector<8x512xf32> to vector<8x384xf32>
    %332 = arith.negf %331 : vector<8x384xf32>
    %333 = math.exp %332 : vector<8x384xf32>
    %cst_60 = arith.constant 1.000000e+00 : f32
    %334 = vector.broadcast %cst_60 : f32 to vector<8x384xf32>
    %335 = arith.addf %334, %333 : vector<8x384xf32>
    %336 = arith.divf %334, %335 : vector<8x384xf32>
    %337 = vector.extract_strided_slice %330 {offsets = [0, 384], sizes = [8, 128], strides = [1, 1]} : vector<8x512xf32> to vector<8x128xf32>
    %338 = math.tanh %337 : vector<8x128xf32>
    %339 = vector.extract_strided_slice %336 {offsets = [0, 128], sizes = [8, 128], strides = [1, 1]} : vector<8x384xf32> to vector<8x128xf32>
    %340 = arith.mulf %339, %301 : vector<8x128xf32>
    %341 = vector.extract_strided_slice %336 {offsets = [0, 0], sizes = [8, 128], strides = [1, 1]} : vector<8x384xf32> to vector<8x128xf32>
    %342 = arith.mulf %341, %338 : vector<8x128xf32>
    %343 = arith.addf %340, %342 : vector<8x128xf32>
    %344 = vector.extract_strided_slice %336 {offsets = [0, 256], sizes = [8, 128], strides = [1, 1]} : vector<8x384xf32> to vector<8x128xf32>
    %345 = math.tanh %343 : vector<8x128xf32>
    %346 = arith.mulf %344, %345 : vector<8x128xf32>
    %347 = arith.truncf %346 : vector<8x128xf32> to vector<8x128xbf16>
    %cst_61 = arith.constant dense<0.000000e+00> : vector<8x512xf32>
    %348 = tpu.matmul %347, %22, %cst_61 {dimension_numbers = #tpu.dot_dimension_numbers<[1], [0], [0], [1], [0, 0, 1, 1], [], []>} : vector<8x128xbf16>, vector<128x512xbf16>, vector<8x512xf32> -> vector<8x512xf32>
    %349 = arith.truncf %326 : vector<8x128xf32> to vector<8x128xbf16>
    %cst_62 = arith.constant dense<0.000000e+00> : vector<8x512xf32>
    %350 = tpu.matmul %349, %23, %cst_62 {dimension_numbers = #tpu.dot_dimension_numbers<[1], [0], [0], [1], [0, 0, 1, 1], [], []>} : vector<8x128xbf16>, vector<128x512xbf16>, vector<8x512xf32> -> vector<8x512xf32>
    %351 = arith.addf %348, %350 : vector<8x512xf32>
    %352 = arith.addf %351, %24 : vector<8x512xf32>
    %353 = vector.extract_strided_slice %352 {offsets = [0, 0], sizes = [8, 384], strides = [1, 1]} : vector<8x512xf32> to vector<8x384xf32>
    %354 = arith.negf %353 : vector<8x384xf32>
    %355 = math.exp %354 : vector<8x384xf32>
    %cst_63 = arith.constant 1.000000e+00 : f32
    %356 = vector.broadcast %cst_63 : f32 to vector<8x384xf32>
    %357 = arith.addf %356, %355 : vector<8x384xf32>
    %358 = arith.divf %356, %357 : vector<8x384xf32>
    %359 = vector.extract_strided_slice %352 {offsets = [0, 384], sizes = [8, 128], strides = [1, 1]} : vector<8x512xf32> to vector<8x128xf32>
    %360 = math.tanh %359 : vector<8x128xf32>
    %361 = vector.extract_strided_slice %358 {offsets = [0, 128], sizes = [8, 128], strides = [1, 1]} : vector<8x384xf32> to vector<8x128xf32>
    %362 = arith.mulf %361, %323 : vector<8x128xf32>
    %363 = vector.extract_strided_slice %358 {offsets = [0, 0], sizes = [8, 128], strides = [1, 1]} : vector<8x384xf32> to vector<8x128xf32>
    %364 = arith.mulf %363, %360 : vector<8x128xf32>
    %365 = arith.addf %362, %364 : vector<8x128xf32>
    %366 = vector.extract_strided_slice %358 {offsets = [0, 256], sizes = [8, 128], strides = [1, 1]} : vector<8x384xf32> to vector<8x128xf32>
    %367 = math.tanh %365 : vector<8x128xf32>
    %368 = arith.mulf %366, %367 : vector<8x128xf32>
    %369 = arith.truncf %368 : vector<8x128xf32> to vector<8x128xbf16>
    %c576 = arith.constant 576 : index
    %c0_64 = arith.constant 0 : index
    %370 = vector.load %arg2[%c576, %c0_64] : memref<704x512xbf16, #tpu.memory_space<vmem>>, vector<128x128xbf16>
    %cst_65 = arith.constant dense<0.000000e+00> : vector<8x128xf32>
    %371 = tpu.matmul %369, %370, %cst_65 {dimension_numbers = #tpu.dot_dimension_numbers<[1], [0], [0], [1], [0, 0, 1, 1], [], []>} : vector<8x128xbf16>, vector<128x128xbf16>, vector<8x128xf32> -> vector<8x128xf32>
    %c8 = arith.constant 8 : index
    %c0_66 = arith.constant 0 : index
    %372 = vector.load %arg3[%c8, %c0_66] : memref<32x512xf32, #tpu.memory_space<vmem>>, vector<8x128xf32>
    %373 = arith.addf %371, %372 : vector<8x128xf32>
    %cst_67 = arith.constant dense<0xFF800000> : vector<8xf32>
    %374 = vector.multi_reduction <maximumf>, %373, %cst_67 [1] : vector<8x128xf32> to vector<8xf32>
    %375 = vector.shape_cast %374 : vector<8xf32> to vector<8x1xf32>
    %376 = vector.broadcast %375 : vector<8x1xf32> to vector<8x128xf32>
    %377 = arith.subf %373, %376 : vector<8x128xf32>
    %378 = math.exp %377 : vector<8x128xf32>
    %cst_68 = arith.constant dense<0.000000e+00> : vector<8xf32>
    %379 = vector.multi_reduction <add>, %378, %cst_68 [1] : vector<8x128xf32> to vector<8xf32>
    %380 = vector.shape_cast %379 : vector<8xf32> to vector<8x1xf32>
    %381 = math.log %380 : vector<8x1xf32>
    %382 = vector.broadcast %381 : vector<8x1xf32> to vector<8x128xf32>
    %383 = arith.subf %377, %382 : vector<8x128xf32>
    %c0_69 = arith.constant 0 : index
    %c0_70 = arith.constant 0 : index
    %384 = vector.load %arg6[%c0_69, %c0_70] : memref<8x128xf32, #tpu.memory_space<vmem>>, vector<8x128xf32>
    tpu.vector_store %arg6[%c0_69, %c0_70], %383 {strides = array<i32>} : memref<8x128xf32, #tpu.memory_space<vmem>>, vector<8x128xf32>,
    return
  }
  func.func @transform_0(%arg0: i32) -> (i32, i32) {
    %c0_i32 = arith.constant 0 : i32
    %c0_i32_0 = arith.constant 0 : i32
    %c0_i32_1 = arith.constant 0 : i32
    return %c0_i32, %c0_i32_0 : i32, i32
  }
  func.func @transform_1(%arg0: i32) -> (i32, i32) {
    %c0_i32 = arith.constant 0 : i32
    %c0_i32_0 = arith.constant 0 : i32
    %c0_i32_1 = arith.constant 0 : i32
    return %c0_i32, %c0_i32_0 : i32, i32
  }
  func.func @transform_2(%arg0: i32) -> (i32, i32) {
    %c0_i32 = arith.constant 0 : i32
    %c0_i32_0 = arith.constant 0 : i32
    %c0_i32_1 = arith.constant 0 : i32
    return %c0_i32, %c0_i32_0 : i32, i32
  }
  func.func @transform_3(%arg0: i32) -> (i32, i32, i32) {
    %c0_i32 = arith.constant 0 : i32
    %c0_i32_0 = arith.constant 0 : i32
    %c0_i32_1 = arith.constant 0 : i32
    %c0_i32_2 = arith.constant 0 : i32
    return %c0_i32, %c0_i32_0, %c0_i32_1 : i32, i32, i32
  }
  func.func @transform_4(%arg0: i32) -> (i32, i32, i32) {
    %c0_i32 = arith.constant 0 : i32
    %c0_i32_0 = arith.constant 0 : i32
    %c0_i32_1 = arith.constant 0 : i32
    %c0_i32_2 = arith.constant 0 : i32
    return %c0_i32, %c0_i32_0, %c0_i32_1 : i32, i32, i32
  }
  func.func @transform_5(%arg0: i32) -> (i32, i32) {
    %c0_i32 = arith.constant 0 : i32
    %c0_i32_0 = arith.constant 0 : i32
    %c0_i32_1 = arith.constant 0 : i32
    return %c0_i32, %c0_i32_0 : i32, i32
  }
}

</mosaic_0001>

<llo_original>
// kernel: network_forward.1
$region0: #{network_forward.1}
  #allocation0 [shape = 'u32[]', space=smem, size = 0x4, offset = 0x4, fixed_abs, tag = 'smem constant byte address 0x4 - core index']
  #allocation1 [shape = 'u32[144,128]{1,0:T(1,128)}', space=vmem, size = 0x12000, scoped, tag = 'internal scratch']
  %s0 = inlined_call_operand.vmem [shape: bf16[64,64], index: 0, kind: input, shape index: {}]
  %s1 = inlined_call_operand.hbm [shape: bf16[704,512], index: 1, kind: input, shape index: {}]
  %s2 = inlined_call_operand.vmem [shape: f32[32,512], index: 2, kind: input, shape index: {}]
  %s3 = inlined_call_operand.vmem [shape: f32[2,8,128], index: 3, kind: input, shape index: {}]
  %s4 = inlined_call_operand.vmem [shape: f32[2,8,128], index: 4, kind: input, shape index: {}]
  %s5 = inlined_call_operand.vmem [shape: f32[8,128], index: 5, kind: output, shape index: {}]
  %s6 = sld [smem:[#allocation0]]
  $region34: #{network_forward.1} parent=0
    _
  %s8 = ssub.s32 1, %s6
  %s9 = scalar_select 0, %s8, %s6
  $region1: #{network_forward.1} parent=0
    #allocation2 [shape = 'u8[720896]{0}', space=vmem, size = 0xb0000, scoped, tag = 'input window, operand 1, single buffered']
    #allocation3 [shape = 's32[1]{0}', space=sflag, size = 0x4, scoped, tag = 'scoped memory for network_forward.1']
    %10 = vsyncpa [#allocation3], 0
    // Predicated region
    $region2: #{network_forward.1} parent=1 // pred_check
      _
    $region3: #{network_forward.1} parent=1 // pred_check_branch
      %12 = sbr.rel (0) target = $region5
    $region4: #{network_forward.1} parent=1 // pred_region
      _
    $region5: #{network_forward.1} parent=1 // pred_fallthru
      _
    // Predicated region
    $region6: #{network_forward.1} parent=1 // pred_check
      _
    $region7: #{network_forward.1} parent=1 // pred_check_branch
      %14 = sbr.rel (0) target = $region9
    $region8: #{network_forward.1} parent=1 // pred_region
      %s16 = ssub.s32 22528, 22528
      %17 = vsyncadd [#allocation3], %s16
      %s18 = sshll.u32 [#allocation2], 4
      %s19 = int_to_ptr.vmem [resolvable:$true] %s18
      %24 = dma.hbm_to_vmem [thread:$0]  %s1, 22528, %s19, [#allocation3], 256, 256, 16
    $region9: #{network_forward.1} parent=1 // pred_fallthru
      _
    // Predicated region
    $region10: #{network_forward.1} parent=1 // pred_check
      _
    $region11: #{network_forward.1} parent=1 // pred_check_branch
      %26 = sbr.rel (0) target = $region13
    $region12: #{network_forward.1} parent=1 // pred_region
      _
    $region13: #{network_forward.1} parent=1 // pred_fallthru
      _
    // Predicated region
    $region14: #{network_forward.1} parent=1 // pred_check
      _
    $region15: #{network_forward.1} parent=1 // pred_check_branch
      %28 = sbr.rel (0) target = $region17
    $region16: #{network_forward.1} parent=1 // pred_region
      _
    $region17: #{network_forward.1} parent=1 // pred_fallthru
      _
    // Predicated region
    $region18: #{network_forward.1} parent=1 // pred_check
      _
    $region19: #{network_forward.1} parent=1 // pred_check_branch
      %30 = sbr.rel (0) target = $region21
    $region20: #{network_forward.1} parent=1 // pred_region
      _
    $region21: #{network_forward.1} parent=1 // pred_fallthru
      _
    // Predicated region
    $region22: #{network_forward.1} parent=1 // pred_check
      _
    $region23: #{network_forward.1} parent=1 // pred_check_branch
      %32 = sbr.rel (0) target = $region25
    $region24: #{network_forward.1} parent=1 // pred_region
      %33 = dma.done [#allocation3], 22528
    $region25: #{network_forward.1} parent=1 // pred_fallthru
      _
    %v35 = vld [vmem:[%s0] sm:$0xf]
    %v36 = vld [vmem:[%s0 + $0x4] sm:$0xf]
    %v37 = vld [vmem:[%s0 + $0x8] sm:$0xf]
    %v38 = vld [vmem:[%s0 + $0xc] sm:$0xf]
    %v39 = vld [vmem:[%s0 + $0x10] sm:$0xf]
    %v40 = vld [vmem:[%s0 + $0x14] sm:$0xf]
    %v41 = vld [vmem:[%s0 + $0x18] sm:$0xf]
    %v42 = vld [vmem:[%s0 + $0x1c] sm:$0xf]
    %v43 = vld [vmem:[#allocation2] sm:$0xff]
    %v44 = vld [vmem:[#allocation2 + $0x8] sm:$0xff]
    %v45 = vld [vmem:[#allocation2 + $0x10] sm:$0xff]
    %v46 = vld [vmem:[#allocation2 + $0x18] sm:$0xff]
    %v47 = vld [vmem:[#allocation2 + $0x20] sm:$0xff]
    %v48 = vld [vmem:[#allocation2 + $0x28] sm:$0xff]
    %v49 = vld [vmem:[#allocation2 + $0x30] sm:$0xff]
    %v50 = vld [vmem:[#allocation2 + $0x38] sm:$0xff]
    %v51 = vld [vmem:[#allocation2 + $0x40] sm:$0xff]
    %v52 = vld [vmem:[#allocation2 + $0x48] sm:$0xff]
    %v53 = vld [vmem:[#allocation2 + $0x50] sm:$0xff]
    %v54 = vld [vmem:[#allocation2 + $0x58] sm:$0xff]
    %v55 = vld [vmem:[#allocation2 + $0x60] sm:$0xff]
    %v56 = vld [vmem:[#allocation2 + $0x68] sm:$0xff]
    %v57 = vld [vmem:[#allocation2 + $0x70] sm:$0xff]
    %v58 = vld [vmem:[#allocation2 + $0x78] sm:$0xff]
    %v67 = vunpack.c.l.b16 %v35
    %v68 = vunpack.c.l.b16 %v36
    %v69 = vunpack.c.l.b16 %v37
    %v70 = vunpack.c.l.b16 %v38
    %v71 = vunpack.c.l.b16 %v39
    %v72 = vunpack.c.l.b16 %v40
    %v73 = vunpack.c.l.b16 %v41
    %v74 = vunpack.c.l.b16 %v42
    %v75 = vpack.c.b16 %v68, %v67
    %v76 = vpack.c.b16 %v70, %v69
    %v77 = vpack.c.b16 %v72, %v71
    %v78 = vpack.c.b16 %v74, %v73
    %v95 = vunpack.c.l.b16 %v43
    %v96 = vunpack.c.h.b16 %v43
    %v97 = vunpack.c.l.b16 %v44
    %v98 = vunpack.c.h.b16 %v44
    %v99 = vunpack.c.l.b16 %v45
    %v100 = vunpack.c.h.b16 %v45
    %v101 = vunpack.c.l.b16 %v46
    %v102 = vunpack.c.h.b16 %v46
    %v103 = vunpack.c.l.b16 %v47
    %v104 = vunpack.c.h.b16 %v47
    %v105 = vunpack.c.l.b16 %v48
    %v106 = vunpack.c.h.b16 %v48
    %v107 = vunpack.c.l.b16 %v49
    %v108 = vunpack.c.h.b16 %v49
    %v109 = vunpack.c.l.b16 %v50
    %v110 = vunpack.c.h.b16 %v50
    %v111 = vunpack.c.l.b16 %v51
    %v112 = vunpack.c.h.b16 %v51
    %v113 = vunpack.c.l.b16 %v52
    %v114 = vunpack.c.h.b16 %v52
    %v115 = vunpack.c.l.b16 %v53
    %v116 = vunpack.c.h.b16 %v53
    %v117 = vunpack.c.l.b16 %v54
    %v118 = vunpack.c.h.b16 %v54
    %v119 = vunpack.c.l.b16 %v55
    %v120 = vunpack.c.h.b16 %v55
    %v121 = vunpack.c.l.b16 %v56
    %v122 = vunpack.c.h.b16 %v56
    %v123 = vunpack.c.l.b16 %v57
    %v124 = vunpack.c.h.b16 %v57
    %v125 = vunpack.c.l.b16 %v58
    %v126 = vunpack.c.h.b16 %v58
    %v127 = vpack.c.b16 %v99, %v95
    %v128 = vpack.c.b16 %v100, %v96
    %v129 = vpack.c.b16 %v101, %v97
    %v130 = vpack.c.b16 %v102, %v98
    %v131 = vpack.c.b16 %v107, %v103
    %v132 = vpack.c.b16 %v108, %v104
    %v133 = vpack.c.b16 %v109, %v105
    %v134 = vpack.c.b16 %v110, %v106
    %v135 = vpack.c.b16 %v115, %v111
    %v136 = vpack.c.b16 %v116, %v112
    %v137 = vpack.c.b16 %v117, %v113
    %v138 = vpack.c.b16 %v118, %v114
    %v139 = vpack.c.b16 %v123, %v119
    %v140 = vpack.c.b16 %v124, %v120
    %v141 = vpack.c.b16 %v125, %v121
    %v142 = vpack.c.b16 %v126, %v122
    %vm159 = vcmask 523264
    %v161 = vsel %vm159, %v75, 0
    %v164 = vsel %vm159, %v76, 0
    %v167 = vsel %vm159, %v77, 0
    %v170 = vsel %vm159, %v78, 0
    %172 = vmatprep.subr.bf16.mxu0 %v128
    %173 = vmatpush1.bf16.msra.mxu0 %v127
    %174 = vmatprep.subr.bf16.mxu0 %v132
    %175 = vmatpush1.bf16.msra.mxu0 %v131
    %176 = vmatprep.subr.bf16.mxu0 %v136
    %177 = vmatpush1.bf16.msra.mxu0 %v135
    %178 = vmatprep.subr.bf16.mxu0 %v140
    %179 = vmatpush1.bf16.msra.mxu0 %v139
    %180 = vmatprep.subr.bf16.mxu0 0
    %181 = vmatpush1.bf16.msra.mxu0 0
    %182 = vmatprep.subr.bf16.mxu0 0
    %183 = vmatpush1.bf16.msra.mxu0 0
    %184 = vmatprep.subr.bf16.mxu0 0
    %185 = vmatpush1.bf16.msra.mxu0 0
    %186 = vmatprep.subr.bf16.mxu0 0
    %187 = vmatpush1.bf16.msra.mxu0 0
    %188 = vmatprep.subr.bf16.mxu0 0
    %189 = vmatpush1.bf16.msra.mxu0 0
    %190 = vmatprep.subr.bf16.mxu0 0
    %191 = vmatpush1.bf16.msra.mxu0 0
    %192 = vmatprep.subr.bf16.mxu0 0
    %193 = vmatpush1.bf16.msra.mxu0 0
    %194 = vmatprep.subr.bf16.mxu0 0
    %195 = vmatpush1.bf16.msra.mxu0 0
    %196 = vmatprep.subr.bf16.mxu0 0
    %197 = vmatpush1.bf16.msra.mxu0 0
    %198 = vmatprep.subr.bf16.mxu0 0
    %199 = vmatpush1.bf16.msra.mxu0 0
    %200 = vmatprep.subr.bf16.mxu0 0
    %201 = vmatpush1.bf16.msra.mxu0 0
    %202 = vmatprep.subr.bf16.mxu0 0
    %203 = vmatpush1.bf16.msra.mxu0 0
    %204 = vmatprep.mubr.bf16.mxu0 0
    %205 = vmatmul.mubr.bf16.gmra.mrb[0].mxu0 %v161
    %v206 = vpop.f32.mrb[0].mxu0
    %v207 = vadd.f32 0.0, %v206
    %v208 = vpop.f32.mrb[0].mxu0
    %v209 = vadd.f32 0.0, %v208
    %v210 = vpop.f32.mrb[0].mxu0
    %v211 = vadd.f32 0.0, %v210
    %v212 = vpop.f32.mrb[0].mxu0
    %v213 = vadd.f32 0.0, %v212
    %214 = vmatprep.mubr.bf16.mxu0 0
    %215 = vmatmul.mubr.bf16.gmra.mrb[0].mxu0 %v164
    %v216 = vpop.f32.mrb[0].mxu0
    %v217 = vadd.f32 0.0, %v216
    %v218 = vpop.f32.mrb[0].mxu0
    %v219 = vadd.f32 0.0, %v218
    %v220 = vpop.f32.mrb[0].mxu0
    %v221 = vadd.f32 0.0, %v220
    %v222 = vpop.f32.mrb[0].mxu0
    %v223 = vadd.f32 0.0, %v222
    %224 = vmatprep.mubr.bf16.mxu0 0
    %225 = vmatmul.mubr.bf16.gmra.mrb[0].mxu0 %v167
    %v226 = vpop.f32.mrb[0].mxu0
    %v227 = vadd.f32 0.0, %v226
    %v228 = vpop.f32.mrb[0].mxu0
    %v229 = vadd.f32 0.0, %v228
    %v230 = vpop.f32.mrb[0].mxu0
    %v231 = vadd.f32 0.0, %v230
    %v232 = vpop.f32.mrb[0].mxu0
    %v233 = vadd.f32 0.0, %v232
    %234 = vmatprep.mubr.bf16.mxu0 0
    %235 = vmatmul.mubr.bf16.gmra.mrb[0].mxu0 %v170
    %v236 = vpop.f32.mrb[0].mxu0
    %v237 = vadd.f32 0.0, %v236
    %v238 = vpop.f32.mrb[0].mxu0
    %v239 = vadd.f32 0.0, %v238
    %v240 = vpop.f32.mrb[0].mxu0
    %v241 = vadd.f32 0.0, %v240
    %v242 = vpop.f32.mrb[0].mxu0
    %v243 = vadd.f32 0.0, %v242
    %244 = vdwg.mxu0
    %245 = vmatprep.subr.bf16.mxu0 %v130
    %246 = vmatpush1.bf16.msra.mxu0 %v129
    %247 = vmatprep.subr.bf16.mxu0 %v134
    %248 = vmatpush1.bf16.msra.mxu0 %v133
    %249 = vmatprep.subr.bf16.mxu0 %v138
    %250 = vmatpush1.bf16.msra.mxu0 %v137
    %251 = vmatprep.subr.bf16.mxu0 %v142
    %252 = vmatpush1.bf16.msra.mxu0 %v141
    %253 = vmatprep.subr.bf16.mxu0 0
    %254 = vmatpush1.bf16.msra.mxu0 0
    %255 = vmatprep.subr.bf16.mxu0 0
    %256 = vmatpush1.bf16.msra.mxu0 0
    %257 = vmatprep.subr.bf16.mxu0 0
    %258 = vmatpush1.bf16.msra.mxu0 0
    %259 = vmatprep.subr.bf16.mxu0 0
    %260 = vmatpush1.bf16.msra.mxu0 0
    %261 = vmatprep.subr.bf16.mxu0 0
    %262 = vmatpush1.bf16.msra.mxu0 0
    %263 = vmatprep.subr.bf16.mxu0 0
    %264 = vmatpush1.bf16.msra.mxu0 0
    %265 = vmatprep.subr.bf16.mxu0 0
    %266 = vmatpush1.bf16.msra.mxu0 0
    %267 = vmatprep.subr.bf16.mxu0 0
    %268 = vmatpush1.bf16.msra.mxu0 0
    %269 = vmatprep.subr.bf16.mxu0 0
    %270 = vmatpush1.bf16.msra.mxu0 0
    %271 = vmatprep.subr.bf16.mxu0 0
    %272 = vmatpush1.bf16.msra.mxu0 0
    %273 = vmatprep.subr.bf16.mxu0 0
    %274 = vmatpush1.bf16.msra.mxu0 0
    %275 = vmatprep.subr.bf16.mxu0 0
    %276 = vmatpush1.bf16.msra.mxu0 0
    %277 = vmatprep.mubr.bf16.mxu0 0
    %278 = vmatmul.mubr.bf16.gmra.mrb[0].mxu0 %v161
    %v279 = vpop.f32.mrb[0].mxu0
    %v280 = vadd.f32 0.0, %v279
    %v281 = vpop.f32.mrb[0].mxu0
    %v282 = vadd.f32 0.0, %v281
    %v283 = vpop.f32.mrb[0].mxu0
    %v284 = vadd.f32 0.0, %v283
    %v285 = vpop.f32.mrb[0].mxu0
    %v286 = vadd.f32 0.0, %v285
    %287 = vmatprep.mubr.bf16.mxu0 0
    %288 = vmatmul.mubr.bf16.gmra.mrb[0].mxu0 %v164
    %v289 = vpop.f32.mrb[0].mxu0
    %v290 = vadd.f32 0.0, %v289
    %v291 = vpop.f32.mrb[0].mxu0
    %v292 = vadd.f32 0.0, %v291
    %v293 = vpop.f32.mrb[0].mxu0
    %v294 = vadd.f32 0.0, %v293
    %v295 = vpop.f32.mrb[0].mxu0
    %v296 = vadd.f32 0.0, %v295
    %297 = vmatprep.mubr.bf16.mxu0 0
    %298 = vmatmul.mubr.bf16.gmra.mrb[0].mxu0 %v167
    %v299 = vpop.f32.mrb[0].mxu0
    %v300 = vadd.f32 0.0, %v299
    %v301 = vpop.f32.mrb[0].mxu0
    %v302 = vadd.f32 0.0, %v301
    %v303 = vpop.f32.mrb[0].mxu0
    %v304 = vadd.f32 0.0, %v303
    %v305 = vpop.f32.mrb[0].mxu0
    %v306 = vadd.f32 0.0, %v305
    %307 = vmatprep.mubr.bf16.mxu0 0
    %308 = vmatmul.mubr.bf16.gmra.mrb[0].mxu0 %v170
    %v309 = vpop.f32.mrb[0].mxu0
    %v310 = vadd.f32 0.0, %v309
    %v311 = vpop.f32.mrb[0].mxu0
    %v312 = vadd.f32 0.0, %v311
    %v313 = vpop.f32.mrb[0].mxu0
    %v314 = vadd.f32 0.0, %v313
    %v315 = vpop.f32.mrb[0].mxu0
    %v316 = vadd.f32 0.0, %v315
    %317 = vdwg.mxu0
    %v318 = vmax.f32 %v207, %v209
    %v319 = vmax.f32 %v211, %v213
    %v320 = vmax.f32 %v217, %v219
    %v321 = vmax.f32 %v221, %v223
    %v322 = vmax.f32 %v227, %v229
    %v323 = vmax.f32 %v231, %v233
    %v324 = vmax.f32 %v237, %v239
    %v325 = vmax.f32 %v241, %v243
    %v326 = vmax.f32 %v280, %v282
    %v327 = vmax.f32 %v284, %v286
    %v328 = vmax.f32 %v290, %v292
    %v329 = vmax.f32 %v294, %v296
    %v330 = vmax.f32 %v300, %v302
    %v331 = vmax.f32 %v304, %v306
    %v332 = vmax.f32 %v310, %v312
    %v333 = vmax.f32 %v314, %v316
    %v334 = vmax.f32 %v318, %v326
    %v335 = vmax.f32 %v319, %v327
    %v336 = vmax.f32 %v320, %v328
    %v337 = vmax.f32 %v321, %v329
    %v338 = vmax.f32 %v322, %v330
    %v339 = vmax.f32 %v323, %v331
    %v340 = vmax.f32 %v324, %v332
    %v341 = vmax.f32 %v325, %v333
    %v342 = vld [vmem:[%s2 + $0x40] ss:$0 sm:$0xff]
    %v343 = vadd.f32 %v334, %v342
    %v344 = vadd.f32 %v335, %v342
    %v345 = vadd.f32 %v336, %v342
    %v346 = vadd.f32 %v337, %v342
    %v347 = vadd.f32 %v338, %v342
    %v348 = vadd.f32 %v339, %v342
    %v349 = vadd.f32 %v340, %v342
    %v350 = vadd.f32 %v341, %v342
    %v351 = vmax.f32 %v343, 0.0
    %v352 = vmax.f32 %v344, 0.0
    %v353 = vmax.f32 %v345, 0.0
    %v354 = vmax.f32 %v346, 0.0
    %v355 = vmax.f32 %v347, 0.0
    %v356 = vmax.f32 %v348, 0.0
    %v357 = vmax.f32 %v349, 0.0
    %v358 = vmax.f32 %v350, 0.0
    %v359 = vpack.c.bf16 %v352, %v351
    %v360 = vpack.c.bf16 %v354, %v353
    %v361 = vpack.c.bf16 %v356, %v355
    %v362 = vpack.c.bf16 %v358, %v357
    %v363 = vld [vmem:[#allocation2 + $0x80] sm:$0xff]
    %v364 = vld [vmem:[#allocation2 + $0x88] sm:$0xff]
    %v365 = vld [vmem:[#allocation2 + $0x90] sm:$0xff]
    %v366 = vld [vmem:[#allocation2 + $0x98] sm:$0xff]
    %v367 = vld [vmem:[#allocation2 + $0xa0] sm:$0xff]
    %v368 = vld [vmem:[#allocation2 + $0xa8] sm:$0xff]
    %v369 = vld [vmem:[#allocation2 + $0xb0] sm:$0xff]
    %v370 = vld [vmem:[#allocation2 + $0xb8] sm:$0xff]
    %v371 = vld [vmem:[#allocation2 + $0xc0] sm:$0xff]
    %v372 = vld [vmem:[#allocation2 + $0xc8] sm:$0xff]
    %v373 = vld [vmem:[#allocation2 + $0xd0] sm:$0xff]
    %v374 = vld [vmem:[#allocation2 + $0xd8] sm:$0xff]
    %v375 = vld [vmem:[#allocation2 + $0xe0] sm:$0xff]
    %v376 = vld [vmem:[#allocation2 + $0xe8] sm:$0xff]
    %v377 = vld [vmem:[#allocation2 + $0xf0] sm:$0xff]
    %v378 = vld [vmem:[#allocation2 + $0xf8] sm:$0xff]
    %v379 = vld [vmem:[#allocation2 + $0x100] sm:$0xff]
    %v380 = vld [vmem:[#allocation2 + $0x108] sm:$0xff]
    %v381 = vld [vmem:[#allocation2 + $0x110] sm:$0xff]
    %v382 = vld [vmem:[#allocation2 + $0x118] sm:$0xff]
    %v383 = vld [vmem:[#allocation2 + $0x120] sm:$0xff]
    %v384 = vld [vmem:[#allocation2 + $0x128] sm:$0xff]
    %v385 = vld [vmem:[#allocation2 + $0x130] sm:$0xff]
    %v386 = vld [vmem:[#allocation2 + $0x138] sm:$0xff]
    %v387 = vld [vmem:[#allocation2 + $0x140] sm:$0xff]
    %v388 = vld [vmem:[#allocation2 + $0x148] sm:$0xff]
    %v389 = vld [vmem:[#allocation2 + $0x150] sm:$0xff]
    %v390 = vld [vmem:[#allocation2 + $0x158] sm:$0xff]
    %v391 = vld [vmem:[#allocation2 + $0x160] sm:$0xff]
    %v392 = vld [vmem:[#allocation2 + $0x168] sm:$0xff]
    %v393 = vld [vmem:[#allocation2 + $0x170] sm:$0xff]
    %v394 = vld [vmem:[#allocation2 + $0x178] sm:$0xff]
    %s395 = scalar_lea.vmem %s2, 96
    %v396 = vld [vmem:[%s395] ss:$8 sm:$0xf]
    %v398 = vlaneseq
    %v399 = vshrl.u32 %v398, 7
    %v400 = vsub.s32 0, %v399
    %v401 = vrot.slane %v396, %v400
    %v402 = vlaneseq
    %v403 = vshrl.u32 %v402, 7
    %v404 = vsub.s32 1, %v403
    %v405 = vrot.slane %v396, %v404
    %v406 = vlaneseq
    %v407 = vshrl.u32 %v406, 7
    %v408 = vsub.s32 2, %v407
    %v409 = vrot.slane %v396, %v408
    %v410 = vlaneseq
    %v411 = vshrl.u32 %v410, 7
    %v412 = vsub.s32 3, %v411
    %v413 = vrot.slane %v396, %v412
    %v450 = vunpack.c.l.b16 %v363
    %v451 = vunpack.c.h.b16 %v363
    %v452 = vunpack.c.l.b16 %v364
    %v453 = vunpack.c.h.b16 %v364
    %v454 = vunpack.c.l.b16 %v365
    %v455 = vunpack.c.h.b16 %v365
    %v456 = vunpack.c.l.b16 %v366
    %v457 = vunpack.c.h.b16 %v366
    %v458 = vunpack.c.l.b16 %v367
    %v459 = vunpack.c.h.b16 %v367
    %v460 = vunpack.c.l.b16 %v368
    %v461 = vunpack.c.h.b16 %v368
    %v462 = vunpack.c.l.b16 %v369
    %v463 = vunpack.c.h.b16 %v369
    %v464 = vunpack.c.l.b16 %v370
    %v465 = vunpack.c.h.b16 %v370
    %v466 = vunpack.c.l.b16 %v371
    %v467 = vunpack.c.h.b16 %v371
    %v468 = vunpack.c.l.b16 %v372
    %v469 = vunpack.c.h.b16 %v372
    %v470 = vunpack.c.l.b16 %v373
    %v471 = vunpack.c.h.b16 %v373
    %v472 = vunpack.c.l.b16 %v374
    %v473 = vunpack.c.h.b16 %v374
    %v474 = vunpack.c.l.b16 %v375
    %v475 = vunpack.c.h.b16 %v375
    %v476 = vunpack.c.l.b16 %v376
    %v477 = vunpack.c.h.b16 %v376
    %v478 = vunpack.c.l.b16 %v377
    %v479 = vunpack.c.h.b16 %v377
    %v480 = vunpack.c.l.b16 %v378
    %v481 = vunpack.c.h.b16 %v378
    %v482 = vunpack.c.l.b16 %v379
    %v483 = vunpack.c.h.b16 %v379
    %v484 = vunpack.c.l.b16 %v380
    %v485 = vunpack.c.h.b16 %v380
    %v486 = vunpack.c.l.b16 %v381
    %v487 = vunpack.c.h.b16 %v381
    %v488 = vunpack.c.l.b16 %v382
    %v489 = vunpack.c.h.b16 %v382
    %v490 = vunpack.c.l.b16 %v383
    %v491 = vunpack.c.h.b16 %v383
    %v492 = vunpack.c.l.b16 %v384
    %v493 = vunpack.c.h.b16 %v384
    %v494 = vunpack.c.l.b16 %v385
    %v495 = vunpack.c.h.b16 %v385
    %v496 = vunpack.c.l.b16 %v386
    %v497 = vunpack.c.h.b16 %v386
    %v498 = vunpack.c.l.b16 %v387
    %v499 = vunpack.c.h.b16 %v387
    %v500 = vunpack.c.l.b16 %v388
    %v501 = vunpack.c.h.b16 %v388
    %v502 = vunpack.c.l.b16 %v389
    %v503 = vunpack.c.h.b16 %v389
    %v504 = vunpack.c.l.b16 %v390
    %v505 = vunpack.c.h.b16 %v390
    %v506 = vunpack.c.l.b16 %v391
    %v507 = vunpack.c.h.b16 %v391
    %v508 = vunpack.c.l.b16 %v392
    %v509 = vunpack.c.h.b16 %v392
    %v510 = vunpack.c.l.b16 %v393
    %v511 = vunpack.c.h.b16 %v393
    %v512 = vunpack.c.l.b16 %v394
    %v513 = vunpack.c.h.b16 %v394
    %v514 = vpack.c.b16 %v454, %v450
    %v515 = vpack.c.b16 %v455, %v451
    %v516 = vpack.c.b16 %v456, %v452
    %v517 = vpack.c.b16 %v457, %v453
    %v518 = vpack.c.b16 %v462, %v458
    %v519 = vpack.c.b16 %v463, %v459
    %v520 = vpack.c.b16 %v464, %v460
    %v521 = vpack.c.b16 %v465, %v461
    %v522 = vpack.c.b16 %v470, %v466
    %v523 = vpack.c.b16 %v471, %v467
    %v524 = vpack.c.b16 %v472, %v468
    %v525 = vpack.c.b16 %v473, %v469
    %v526 = vpack.c.b16 %v478, %v474
    %v527 = vpack.c.b16 %v479, %v475
    %v528 = vpack.c.b16 %v480, %v476
    %v529 = vpack.c.b16 %v481, %v477
    %v530 = vpack.c.b16 %v486, %v482
    %v531 = vpack.c.b16 %v487, %v483
    %v532 = vpack.c.b16 %v488, %v484
    %v533 = vpack.c.b16 %v489, %v485
    %v534 = vpack.c.b16 %v494, %v490
    %v535 = vpack.c.b16 %v495, %v491
    %v536 = vpack.c.b16 %v496, %v492
    %v537 = vpack.c.b16 %v497, %v493
    %v538 = vpack.c.b16 %v502, %v498
    %v539 = vpack.c.b16 %v503, %v499
    %v540 = vpack.c.b16 %v504, %v500
    %v541 = vpack.c.b16 %v505, %v501
    %v542 = vpack.c.b16 %v510, %v506
    %v543 = vpack.c.b16 %v511, %v507
    %v544 = vpack.c.b16 %v512, %v508
    %v545 = vpack.c.b16 %v513, %v509
    %578 = vmatprep.subr.bf16.mxu0 %v515
    %579 = vmatpush1.bf16.msra.mxu0 %v514
    %580 = vmatprep.subr.bf16.mxu0 %v519
    %581 = vmatpush1.bf16.msra.mxu0 %v518
    %582 = vmatprep.subr.bf16.mxu0 %v523
    %583 = vmatpush1.bf16.msra.mxu0 %v522
    %584 = vmatprep.subr.bf16.mxu0 %v527
    %585 = vmatpush1.bf16.msra.mxu0 %v526
    %586 = vmatprep.subr.bf16.mxu0 %v531
    %587 = vmatpush1.bf16.msra.mxu0 %v530
    %588 = vmatprep.subr.bf16.mxu0 %v535
    %589 = vmatpush1.bf16.msra.mxu0 %v534
    %590 = vmatprep.subr.bf16.mxu0 %v539
    %591 = vmatpush1.bf16.msra.mxu0 %v538
    %592 = vmatprep.subr.bf16.mxu0 %v543
    %593 = vmatpush1.bf16.msra.mxu0 %v542
    %594 = vmatprep.subr.bf16.mxu0 0
    %595 = vmatpush1.bf16.msra.mxu0 0
    %596 = vmatprep.subr.bf16.mxu0 0
    %597 = vmatpush1.bf16.msra.mxu0 0
    %598 = vmatprep.subr.bf16.mxu0 0
    %599 = vmatpush1.bf16.msra.mxu0 0
    %600 = vmatprep.subr.bf16.mxu0 0
    %601 = vmatpush1.bf16.msra.mxu0 0
    %602 = vmatprep.subr.bf16.mxu0 0
    %603 = vmatpush1.bf16.msra.mxu0 0
    %604 = vmatprep.subr.bf16.mxu0 0
    %605 = vmatpush1.bf16.msra.mxu0 0
    %606 = vmatprep.subr.bf16.mxu0 0
    %607 = vmatpush1.bf16.msra.mxu0 0
    %608 = vmatprep.subr.bf16.mxu0 0
    %609 = vmatpush1.bf16.msra.mxu0 0
    %610 = vmatprep.mubr.bf16.mxu0 0
    %611 = vmatmul.mubr.bf16.gmra.mrb[0].mxu0 %v359
    %v612 = vpop.f32.mrb[0].mxu0
    %v613 = vadd.f32 %v401, %v612
    %v614 = vpop.f32.mrb[0].mxu0
    %v615 = vadd.f32 %v405, %v614
    %v616 = vpop.f32.mrb[0].mxu0
    %v617 = vadd.f32 %v401, %v616
    %v618 = vpop.f32.mrb[0].mxu0
    %v619 = vadd.f32 %v405, %v618
    %620 = vmatprep.mubr.bf16.mxu0 0
    %621 = vmatmul.mubr.bf16.gmra.mrb[0].mxu0 %v360
    %v622 = vpop.f32.mrb[0].mxu0
    %v623 = vadd.f32 %v401, %v622
    %v624 = vpop.f32.mrb[0].mxu0
    %v625 = vadd.f32 %v405, %v624
    %v626 = vpop.f32.mrb[0].mxu0
    %v627 = vadd.f32 %v401, %v626
    %v628 = vpop.f32.mrb[0].mxu0
    %v629 = vadd.f32 %v405, %v628
    %630 = vmatprep.mubr.bf16.mxu0 0
    %631 = vmatmul.mubr.bf16.gmra.mrb[0].mxu0 %v361
    %v632 = vpop.f32.mrb[0].mxu0
    %v633 = vadd.f32 %v401, %v632
    %v634 = vpop.f32.mrb[0].mxu0
    %v635 = vadd.f32 %v405, %v634
    %v636 = vpop.f32.mrb[0].mxu0
    %v637 = vadd.f32 %v401, %v636
    %v638 = vpop.f32.mrb[0].mxu0
    %v639 = vadd.f32 %v405, %v638
    %640 = vmatprep.mubr.bf16.mxu0 0
    %641 = vmatmul.mubr.bf16.gmra.mrb[0].mxu0 %v362
    %v642 = vpop.f32.mrb[0].mxu0
    %v643 = vadd.f32 %v401, %v642
    %v644 = vpop.f32.mrb[0].mxu0
    %v645 = vadd.f32 %v405, %v644
    %v646 = vpop.f32.mrb[0].mxu0
    %v647 = vadd.f32 %v401, %v646
    %v648 = vpop.f32.mrb[0].mxu0
    %v649 = vadd.f32 %v405, %v648
    %650 = vdwg.mxu0
    %651 = vmatprep.subr.bf16.mxu0 %v517
    %652 = vmatpush1.bf16.msra.mxu0 %v516
    %653 = vmatprep.subr.bf16.mxu0 %v521
    %654 = vmatpush1.bf16.msra.mxu0 %v520
    %655 = vmatprep.subr.bf16.mxu0 %v525
    %656 = vmatpush1.bf16.msra.mxu0 %v524
    %657 = vmatprep.subr.bf16.mxu0 %v529
    %658 = vmatpush1.bf16.msra.mxu0 %v528
    %659 = vmatprep.subr.bf16.mxu0 %v533
    %660 = vmatpush1.bf16.msra.mxu0 %v532
    %661 = vmatprep.subr.bf16.mxu0 %v537
    %662 = vmatpush1.bf16.msra.mxu0 %v536
    %663 = vmatprep.subr.bf16.mxu0 %v541
    %664 = vmatpush1.bf16.msra.mxu0 %v540
    %665 = vmatprep.subr.bf16.mxu0 %v545
    %666 = vmatpush1.bf16.msra.mxu0 %v544
    %667 = vmatprep.subr.bf16.mxu0 0
    %668 = vmatpush1.bf16.msra.mxu0 0
    %669 = vmatprep.subr.bf16.mxu0 0
    %670 = vmatpush1.bf16.msra.mxu0 0
    %671 = vmatprep.subr.bf16.mxu0 0
    %672 = vmatpush1.bf16.msra.mxu0 0
    %673 = vmatprep.subr.bf16.mxu0 0
    %674 = vmatpush1.bf16.msra.mxu0 0
    %675 = vmatprep.subr.bf16.mxu0 0
    %676 = vmatpush1.bf16.msra.mxu0 0
    %677 = vmatprep.subr.bf16.mxu0 0
    %678 = vmatpush1.bf16.msra.mxu0 0
    %679 = vmatprep.subr.bf16.mxu0 0
    %680 = vmatpush1.bf16.msra.mxu0 0
    %681 = vmatprep.subr.bf16.mxu0 0
    %682 = vmatpush1.bf16.msra.mxu0 0
    %683 = vmatprep.mubr.bf16.mxu0 0
    %684 = vmatmul.mubr.bf16.gmra.mrb[0].mxu0 %v359
    %v685 = vpop.f32.mrb[0].mxu0
    %v686 = vadd.f32 %v409, %v685
    %v687 = vpop.f32.mrb[0].mxu0
    %v688 = vadd.f32 %v413, %v687
    %v689 = vpop.f32.mrb[0].mxu0
    %v690 = vadd.f32 %v409, %v689
    %v691 = vpop.f32.mrb[0].mxu0
    %v692 = vadd.f32 %v413, %v691
    %693 = vmatprep.mubr.bf16.mxu0 0
    %694 = vmatmul.mubr.bf16.gmra.mrb[0].mxu0 %v360
    %v695 = vpop.f32.mrb[0].mxu0
    %v696 = vadd.f32 %v409, %v695
    %v697 = vpop.f32.mrb[0].mxu0
    %v698 = vadd.f32 %v413, %v697
    %v699 = vpop.f32.mrb[0].mxu0
    %v700 = vadd.f32 %v409, %v699
    %v701 = vpop.f32.mrb[0].mxu0
    %v702 = vadd.f32 %v413, %v701
    %703 = vmatprep.mubr.bf16.mxu0 0
    %704 = vmatmul.mubr.bf16.gmra.mrb[0].mxu0 %v361
    %v705 = vpop.f32.mrb[0].mxu0
    %v706 = vadd.f32 %v409, %v705
    %v707 = vpop.f32.mrb[0].mxu0
    %v708 = vadd.f32 %v413, %v707
    %v709 = vpop.f32.mrb[0].mxu0
    %v710 = vadd.f32 %v409, %v709
    %v711 = vpop.f32.mrb[0].mxu0
    %v712 = vadd.f32 %v413, %v711
    %713 = vmatprep.mubr.bf16.mxu0 0
    %714 = vmatmul.mubr.bf16.gmra.mrb[0].mxu0 %v362
    %v715 = vpop.f32.mrb[0].mxu0
    %v716 = vadd.f32 %v409, %v715
    %v717 = vpop.f32.mrb[0].mxu0
    %v718 = vadd.f32 %v413, %v717
    %v719 = vpop.f32.mrb[0].mxu0
    %v720 = vadd.f32 %v409, %v719
    %v721 = vpop.f32.mrb[0].mxu0
    %v722 = vadd.f32 %v413, %v721
    %723 = vdwg.mxu0
    %v724 = vld [vmem:[#allocation2 + $0x180] sm:$0xff]
    %v725 = vld [vmem:[#allocation2 + $0x188] sm:$0xff]
    %v726 = vld [vmem:[#allocation2 + $0x190] sm:$0xff]
    %v727 = vld [vmem:[#allocation2 + $0x198] sm:$0xff]
    %v728 = vld [vmem:[#allocation2 + $0x1a0] sm:$0xff]
    %v729 = vld [vmem:[#allocation2 + $0x1a8] sm:$0xff]
    %v730 = vld [vmem:[#allocation2 + $0x1b0] sm:$0xff]
    %v731 = vld [vmem:[#allocation2 + $0x1b8] sm:$0xff]
    %v732 = vld [vmem:[#allocation2 + $0x1c0] sm:$0xff]
    %v733 = vld [vmem:[#allocation2 + $0x1c8] sm:$0xff]
    %v734 = vld [vmem:[#allocation2 + $0x1d0] sm:$0xff]
    %v735 = vld [vmem:[#allocation2 + $0x1d8] sm:$0xff]
    %v736 = vld [vmem:[#allocation2 + $0x1e0] sm:$0xff]
    %v737 = vld [vmem:[#allocation2 + $0x1e8] sm:$0xff]
    %v738 = vld [vmem:[#allocation2 + $0x1f0] sm:$0xff]
    %v739 = vld [vmem:[#allocation2 + $0x1f8] sm:$0xff]
    %v740 = vld [vmem:[#allocation2 + $0x200] sm:$0xff]
    %v741 = vld [vmem:[#allocation2 + $0x208] sm:$0xff]
    %v742 = vld [vmem:[#allocation2 + $0x210] sm:$0xff]
    %v743 = vld [vmem:[#allocation2 + $0x218] sm:$0xff]
    %v744 = vld [vmem:[#allocation2 + $0x220] sm:$0xff]
    %v745 = vld [vmem:[#allocation2 + $0x228] sm:$0xff]
    %v746 = vld [vmem:[#allocation2 + $0x230] sm:$0xff]
    %v747 = vld [vmem:[#allocation2 + $0x238] sm:$0xff]
    %v748 = vld [vmem:[#allocation2 + $0x240] sm:$0xff]
    %v749 = vld [vmem:[#allocation2 + $0x248] sm:$0xff]
    %v750 = vld [vmem:[#allocation2 + $0x250] sm:$0xff]
    %v751 = vld [vmem:[#allocation2 + $0x258] sm:$0xff]
    %v752 = vld [vmem:[#allocation2 + $0x260] sm:$0xff]
    %v753 = vld [vmem:[#allocation2 + $0x268] sm:$0xff]
    %v754 = vld [vmem:[#allocation2 + $0x270] sm:$0xff]
    %v755 = vld [vmem:[#allocation2 + $0x278] sm:$0xff]
    %v756 = vld [vmem:[#allocation2 + $0x280] sm:$0xff]
    %v757 = vld [vmem:[#allocation2 + $0x288] sm:$0xff]
    %v758 = vld [vmem:[#allocation2 + $0x290] sm:$0xff]
    %v759 = vld [vmem:[#allocation2 + $0x298] sm:$0xff]
    %v760 = vld [vmem:[#allocation2 + $0x2a0] sm:$0xff]
    %v761 = vld [vmem:[#allocation2 + $0x2a8] sm:$0xff]
    %v762 = vld [vmem:[#allocation2 + $0x2b0] sm:$0xff]
    %v763 = vld [vmem:[#allocation2 + $0x2b8] sm:$0xff]
    %v764 = vld [vmem:[#allocation2 + $0x2c0] sm:$0xff]
    %v765 = vld [vmem:[#allocation2 + $0x2c8] sm:$0xff]
    %v766 = vld [vmem:[#allocation2 + $0x2d0] sm:$0xff]
    %v767 = vld [vmem:[#allocation2 + $0x2d8] sm:$0xff]
    %v768 = vld [vmem:[#allocation2 + $0x2e0] sm:$0xff]
    %v769 = vld [vmem:[#allocation2 + $0x2e8] sm:$0xff]
    %v770 = vld [vmem:[#allocation2 + $0x2f0] sm:$0xff]
    %v771 = vld [vmem:[#allocation2 + $0x2f8] sm:$0xff]
    %v772 = vld [vmem:[#allocation2 + $0x300] sm:$0xff]
    %v773 = vld [vmem:[#allocation2 + $0x308] sm:$0xff]
    %v774 = vld [vmem:[#allocation2 + $0x310] sm:$0xff]
    %v775 = vld [vmem:[#allocation2 + $0x318] sm:$0xff]
    %v776 = vld [vmem:[#allocation2 + $0x320] sm:$0xff]
    %v777 = vld [vmem:[#allocation2 + $0x328] sm:$0xff]
    %v778 = vld [vmem:[#allocation2 + $0x330] sm:$0xff]
    %v779 = vld [vmem:[#allocation2 + $0x338] sm:$0xff]
    %v780 = vld [vmem:[#allocation2 + $0x340] sm:$0xff]
    %v781 = vld [vmem:[#allocation2 + $0x348] sm:$0xff]
    %v782 = vld [vmem:[#allocation2 + $0x350] sm:$0xff]
    %v783 = vld [vmem:[#allocation2 + $0x358] sm:$0xff]
    %v784 = vld [vmem:[#allocation2 + $0x360] sm:$0xff]
    %v785 = vld [vmem:[#allocation2 + $0x368] sm:$0xff]
    %v786 = vld [vmem:[#allocation2 + $0x370] sm:$0xff]
    %v787 = vld [vmem:[#allocation2 + $0x378] sm:$0xff]
    %v788 = vld [vmem:[#allocation2 + $0x380] sm:$0xff]
    %v789 = vld [vmem:[#allocation2 + $0x388] sm:$0xff]
    %v790 = vld [vmem:[#allocation2 + $0x390] sm:$0xff]
    %v791 = vld [vmem:[#allocation2 + $0x398] sm:$0xff]
    %v792 = vld [vmem:[#allocation2 + $0x3a0] sm:$0xff]
    %v793 = vld [vmem:[#allocation2 + $0x3a8] sm:$0xff]
    %v794 = vld [vmem:[#allocation2 + $0x3b0] sm:$0xff]
    %v795 = vld [vmem:[#allocation2 + $0x3b8] sm:$0xff]
    %v796 = vld [vmem:[#allocation2 + $0x3c0] sm:$0xff]
    %v797 = vld [vmem:[#allocation2 + $0x3c8] sm:$0xff]
    %v798 = vld [vmem:[#allocation2 + $0x3d0] sm:$0xff]
    %v799 = vld [vmem:[#allocation2 + $0x3d8] sm:$0xff]
    %v800 = vld [vmem:[#allocation2 + $0x3e0] sm:$0xff]
    %v801 = vld [vmem:[#allocation2 + $0x3e8] sm:$0xff]
    %v802 = vld [vmem:[#allocation2 + $0x3f0] sm:$0xff]
    %v803 = vld [vmem:[#allocation2 + $0x3f8] sm:$0xff]
    %v804 = vld [vmem:[#allocation2 + $0x400] sm:$0xff]
    %v805 = vld [vmem:[#allocation2 + $0x408] sm:$0xff]
    %v806 = vld [vmem:[#allocation2 + $0x410] sm:$0xff]
    %v807 = vld [vmem:[#allocation2 + $0x418] sm:$0xff]
    %v808 = vld [vmem:[#allocation2 + $0x420] sm:$0xff]
    %v809 = vld [vmem:[#allocation2 + $0x428] sm:$0xff]
    %v810 = vld [vmem:[#allocation2 + $0x430] sm:$0xff]
    %v811 = vld [vmem:[#allocation2 + $0x438] sm:$0xff]
    %v812 = vld [vmem:[#allocation2 + $0x440] sm:$0xff]
    %v813 = vld [vmem:[#allocation2 + $0x448] sm:$0xff]
    %v814 = vld [vmem:[#allocation2 + $0x450] sm:$0xff]
    %v815 = vld [vmem:[#allocation2 + $0x458] sm:$0xff]
    %v816 = vld [vmem:[#allocation2 + $0x460] sm:$0xff]
    %v817 = vld [vmem:[#allocation2 + $0x468] sm:$0xff]
    %v818 = vld [vmem:[#allocation2 + $0x470] sm:$0xff]
    %v819 = vld [vmem:[#allocation2 + $0x478] sm:$0xff]
    %v820 = vld [vmem:[%s2] sm:$0xff]
    %v821 = vld [vmem:[%s2 + $0x8] sm:$0xff]
    %v822 = vld [vmem:[%s2 + $0x10] sm:$0xff]
    %v823 = vld [vmem:[%s2 + $0x18] sm:$0xff]
    %v824 = vld [vmem:[%s3] sm:$0xff]
    %v825 = vld [vmem:[%s4] sm:$0xff]
    %s826 = scalar_lea.vmem %s3, 8
    %v827 = vld [vmem:[%s826] sm:$0xff]
    %s828 = scalar_lea.vmem %s4, 8
    %v829 = vld [vmem:[%s828] sm:$0xff]
    %v830 = vpack.c.bf16 %v824, %v824
    %v863 = vunpack.c.l.b16 %v724
    %v864 = vunpack.c.h.b16 %v724
    %v865 = vunpack.c.l.b16 %v725
    %v866 = vunpack.c.h.b16 %v725
    %v867 = vunpack.c.l.b16 %v726
    %v868 = vunpack.c.h.b16 %v726
    %v869 = vunpack.c.l.b16 %v727
    %v870 = vunpack.c.h.b16 %v727
    %v871 = vunpack.c.l.b16 %v728
    %v872 = vunpack.c.h.b16 %v728
    %v873 = vunpack.c.l.b16 %v729
    %v874 = vunpack.c.h.b16 %v729
    %v875 = vunpack.c.l.b16 %v730
    %v876 = vunpack.c.h.b16 %v730
    %v877 = vunpack.c.l.b16 %v731
    %v878 = vunpack.c.h.b16 %v731
    %v879 = vunpack.c.l.b16 %v732
    %v880 = vunpack.c.h.b16 %v732
    %v881 = vunpack.c.l.b16 %v733
    %v882 = vunpack.c.h.b16 %v733
    %v883 = vunpack.c.l.b16 %v734
    %v884 = vunpack.c.h.b16 %v734
    %v885 = vunpack.c.l.b16 %v735
    %v886 = vunpack.c.h.b16 %v735
    %v887 = vunpack.c.l.b16 %v736
    %v888 = vunpack.c.h.b16 %v736
    %v889 = vunpack.c.l.b16 %v737
    %v890 = vunpack.c.h.b16 %v737
    %v891 = vunpack.c.l.b16 %v738
    %v892 = vunpack.c.h.b16 %v738
    %v893 = vunpack.c.l.b16 %v739
    %v894 = vunpack.c.h.b16 %v739
    %v895 = vunpack.c.l.b16 %v740
    %v896 = vunpack.c.h.b16 %v740
    %v897 = vunpack.c.l.b16 %v741
    %v898 = vunpack.c.h.b16 %v741
    %v899 = vunpack.c.l.b16 %v742
    %v900 = vunpack.c.h.b16 %v742
    %v901 = vunpack.c.l.b16 %v743
    %v902 = vunpack.c.h.b16 %v743
    %v903 = vunpack.c.l.b16 %v744
    %v904 = vunpack.c.h.b16 %v744
    %v905 = vunpack.c.l.b16 %v745
    %v906 = vunpack.c.h.b16 %v745
    %v907 = vunpack.c.l.b16 %v746
    %v908 = vunpack.c.h.b16 %v746
    %v909 = vunpack.c.l.b16 %v747
    %v910 = vunpack.c.h.b16 %v747
    %v911 = vunpack.c.l.b16 %v748
    %v912 = vunpack.c.h.b16 %v748
    %v913 = vunpack.c.l.b16 %v749
    %v914 = vunpack.c.h.b16 %v749
    %v915 = vunpack.c.l.b16 %v750
    %v916 = vunpack.c.h.b16 %v750
    %v917 = vunpack.c.l.b16 %v751
    %v918 = vunpack.c.h.b16 %v751
    %v919 = vunpack.c.l.b16 %v752
    %v920 = vunpack.c.h.b16 %v752
    %v921 = vunpack.c.l.b16 %v753
    %v922 = vunpack.c.h.b16 %v753
    %v923 = vunpack.c.l.b16 %v754
    %v924 = vunpack.c.h.b16 %v754
    %v925 = vunpack.c.l.b16 %v755
    %v926 = vunpack.c.h.b16 %v755
    %v927 = vpack.c.b16 %v867, %v863
    %v928 = vpack.c.b16 %v868, %v864
    %v929 = vpack.c.b16 %v869, %v865
    %v930 = vpack.c.b16 %v870, %v866
    %v931 = vpack.c.b16 %v875, %v871
    %v932 = vpack.c.b16 %v876, %v872
    %v933 = vpack.c.b16 %v877, %v873
    %v934 = vpack.c.b16 %v878, %v874
    %v935 = vpack.c.b16 %v883, %v879
    %v936 = vpack.c.b16 %v884, %v880
    %v937 = vpack.c.b16 %v885, %v881
    %v938 = vpack.c.b16 %v886, %v882
    %v939 = vpack.c.b16 %v891, %v887
    %v940 = vpack.c.b16 %v892, %v888
    %v941 = vpack.c.b16 %v893, %v889
    %v942 = vpack.c.b16 %v894, %v890
    %v943 = vpack.c.b16 %v899, %v895
    %v944 = vpack.c.b16 %v900, %v896
    %v945 = vpack.c.b16 %v901, %v897
    %v946 = vpack.c.b16 %v902, %v898
    %v947 = vpack.c.b16 %v907, %v903
    %v948 = vpack.c.b16 %v908, %v904
    %v949 = vpack.c.b16 %v909, %v905
    %v950 = vpack.c.b16 %v910, %v906
    %v951 = vpack.c.b16 %v915, %v911
    %v952 = vpack.c.b16 %v916, %v912
    %v953 = vpack.c.b16 %v917, %v913
    %v954 = vpack.c.b16 %v918, %v914
    %v955 = vpack.c.b16 %v923, %v919
    %v956 = vpack.c.b16 %v924, %v920
    %v957 = vpack.c.b16 %v925, %v921
    %v958 = vpack.c.b16 %v926, %v922
    %991 = vmatprep.subr.bf16.mxu0 %v928
    %992 = vmatpush1.bf16.msra.mxu0 %v927
    %993 = vmatprep.subr.bf16.mxu0 %v932
    %994 = vmatpush1.bf16.msra.mxu0 %v931
    %995 = vmatprep.subr.bf16.mxu0 %v936
    %996 = vmatpush1.bf16.msra.mxu0 %v935
    %997 = vmatprep.subr.bf16.mxu0 %v940
    %998 = vmatpush1.bf16.msra.mxu0 %v939
    %999 = vmatprep.subr.bf16.mxu0 %v944
    %1000 = vmatpush1.bf16.msra.mxu0 %v943
    %1001 = vmatprep.subr.bf16.mxu0 %v948
    %1002 = vmatpush1.bf16.msra.mxu0 %v947
    %1003 = vmatprep.subr.bf16.mxu0 %v952
    %1004 = vmatpush1.bf16.msra.mxu0 %v951
    %1005 = vmatprep.subr.bf16.mxu0 %v956
    %1006 = vmatpush1.bf16.msra.mxu0 %v955
    %1007 = vmatprep.subr.bf16.mxu0 0
    %1008 = vmatpush1.bf16.msra.mxu0 0
    %1009 = vmatprep.subr.bf16.mxu0 0
    %1010 = vmatpush1.bf16.msra.mxu0 0
    %1011 = vmatprep.subr.bf16.mxu0 0
    %1012 = vmatpush1.bf16.msra.mxu0 0
    %1013 = vmatprep.subr.bf16.mxu0 0
    %1014 = vmatpush1.bf16.msra.mxu0 0
    %1015 = vmatprep.subr.bf16.mxu0 0
    %1016 = vmatpush1.bf16.msra.mxu0 0
    %1017 = vmatprep.subr.bf16.mxu0 0
    %1018 = vmatpush1.bf16.msra.mxu0 0
    %1019 = vmatprep.subr.bf16.mxu0 0
    %1020 = vmatpush1.bf16.msra.mxu0 0
    %1021 = vmatprep.subr.bf16.mxu0 0
    %1022 = vmatpush1.bf16.msra.mxu0 0
    %1023 = vmatprep.mubr.bf16.mxu0 0
    %1024 = vmatmul.mubr.bf16.gmra.mrb[0].mxu0 %v830
    %v1025 = vpop.f32.mrb[0].mxu0
    %v1026 = vadd.f32 0.0, %v1025
    %v1027 = vpop.f32.mrb[0].mxu0
    %v1028 = vadd.f32 0.0, %v1027
    %v1029 = vpop.f32.mrb[0].mxu0
    %v1030 = vpop.f32.mrb[0].mxu0
    %1031 = vdwg.mxu0
    %1032 = vmatprep.subr.bf16.mxu0 %v930
    %1033 = vmatpush1.bf16.msra.mxu0 %v929
    %1034 = vmatprep.subr.bf16.mxu0 %v934
    %1035 = vmatpush1.bf16.msra.mxu0 %v933
    %1036 = vmatprep.subr.bf16.mxu0 %v938
    %1037 = vmatpush1.bf16.msra.mxu0 %v937
    %1038 = vmatprep.subr.bf16.mxu0 %v942
    %1039 = vmatpush1.bf16.msra.mxu0 %v941
    %1040 = vmatprep.subr.bf16.mxu0 %v946
    %1041 = vmatpush1.bf16.msra.mxu0 %v945
    %1042 = vmatprep.subr.bf16.mxu0 %v950
    %1043 = vmatpush1.bf16.msra.mxu0 %v949
    %1044 = vmatprep.subr.bf16.mxu0 %v954
    %1045 = vmatpush1.bf16.msra.mxu0 %v953
    %1046 = vmatprep.subr.bf16.mxu0 %v958
    %1047 = vmatpush1.bf16.msra.mxu0 %v957
    %1048 = vmatprep.subr.bf16.mxu0 0
    %1049 = vmatpush1.bf16.msra.mxu0 0
    %1050 = vmatprep.subr.bf16.mxu0 0
    %1051 = vmatpush1.bf16.msra.mxu0 0
    %1052 = vmatprep.subr.bf16.mxu0 0
    %1053 = vmatpush1.bf16.msra.mxu0 0
    %1054 = vmatprep.subr.bf16.mxu0 0
    %1055 = vmatpush1.bf16.msra.mxu0 0
    %1056 = vmatprep.subr.bf16.mxu0 0
    %1057 = vmatpush1.bf16.msra.mxu0 0
    %1058 = vmatprep.subr.bf16.mxu0 0
    %1059 = vmatpush1.bf16.msra.mxu0 0
    %1060 = vmatprep.subr.bf16.mxu0 0
    %1061 = vmatpush1.bf16.msra.mxu0 0
    %1062 = vmatprep.subr.bf16.mxu0 0
    %1063 = vmatpush1.bf16.msra.mxu0 0
    %1064 = vmatprep.mubr.bf16.mxu0 0
    %1065 = vmatmul.mubr.bf16.gmra.mrb[0].mxu0 %v830
    %v1066 = vpop.f32.mrb[0].mxu0
    %v1067 = vadd.f32 0.0, %v1066
    %v1068 = vpop.f32.mrb[0].mxu0
    %v1069 = vadd.f32 0.0, %v1068
    %v1070 = vpop.f32.mrb[0].mxu0
    %v1071 = vpop.f32.mrb[0].mxu0
    %1072 = vdwg.mxu0
    %v1073 = vadd.f32 %v613, %v1026
    %v1074 = vadd.f32 %v615, %v1028
    %v1075 = vadd.f32 %v686, %v1067
    %v1076 = vadd.f32 %v688, %v1069
    %v1077 = vxor.u32 %v1073, 2147483648
    %v1078 = vxor.u32 %v1074, 2147483648
    %v1079 = vxor.u32 %v1075, 2147483648
    %v1080 = vmul.f32 %v1077, 1.442695
    %v1081 = vpow.pop %v1080
    %v1082 = vmul.f32 %v1078, 1.442695
    %v1083 = vpow.pop %v1082
    %v1084 = vmul.f32 %v1079, 1.442695
    %v1085 = vpow.pop %v1084
    %v1086 = vadd.f32 %v1081, 1.0
    %v1087 = vadd.f32 %v1083, 1.0
    %v1088 = vadd.f32 %v1085, 1.0
    %v1089 = vrcp.pop %v1086
    %v1090 = vmul.f32 1.0, %v1089
    %v1091 = vrcp.pop %v1087
    %v1092 = vmul.f32 1.0, %v1091
    %v1093 = vrcp.pop %v1088
    %v1094 = vmul.f32 1.0, %v1093
    %v1095 = vtanh.pop %v1076
    %v1096 = vmul.f32 %v1092, %v825
    %v1097 = vmul.f32 %v1090, %v1095
    %v1098 = vadd.f32 %v1096, %v1097
    %v1099 = vtanh.pop %v1098
    %v1100 = vmul.f32 %v1094, %v1099
    %v1101 = vpack.c.bf16 %v1100, %v1100
    %v1102 = vpack.c.bf16 %v827, %v827
    %v1135 = vunpack.c.l.b16 %v788
    %v1136 = vunpack.c.h.b16 %v788
    %v1137 = vunpack.c.l.b16 %v789
    %v1138 = vunpack.c.h.b16 %v789
    %v1139 = vunpack.c.l.b16 %v790
    %v1140 = vunpack.c.h.b16 %v790
    %v1141 = vunpack.c.l.b16 %v791
    %v1142 = vunpack.c.h.b16 %v791
    %v1143 = vunpack.c.l.b16 %v792
    %v1144 = vunpack.c.h.b16 %v792
    %v1145 = vunpack.c.l.b16 %v793
    %v1146 = vunpack.c.h.b16 %v793
    %v1147 = vunpack.c.l.b16 %v794
    %v1148 = vunpack.c.h.b16 %v794
    %v1149 = vunpack.c.l.b16 %v795
    %v1150 = vunpack.c.h.b16 %v795
    %v1151 = vunpack.c.l.b16 %v796
    %v1152 = vunpack.c.h.b16 %v796
    %v1153 = vunpack.c.l.b16 %v797
    %v1154 = vunpack.c.h.b16 %v797
    %v1155 = vunpack.c.l.b16 %v798
    %v1156 = vunpack.c.h.b16 %v798
    %v1157 = vunpack.c.l.b16 %v799
    %v1158 = vunpack.c.h.b16 %v799
    %v1159 = vunpack.c.l.b16 %v800
    %v1160 = vunpack.c.h.b16 %v800
    %v1161 = vunpack.c.l.b16 %v801
    %v1162 = vunpack.c.h.b16 %v801
    %v1163 = vunpack.c.l.b16 %v802
    %v1164 = vunpack.c.h.b16 %v802
    %v1165 = vunpack.c.l.b16 %v803
    %v1166 = vunpack.c.h.b16 %v803
    %v1167 = vunpack.c.l.b16 %v804
    %v1168 = vunpack.c.h.b16 %v804
    %v1169 = vunpack.c.l.b16 %v805
    %v1170 = vunpack.c.h.b16 %v805
    %v1171 = vunpack.c.l.b16 %v806
    %v1172 = vunpack.c.h.b16 %v806
    %v1173 = vunpack.c.l.b16 %v807
    %v1174 = vunpack.c.h.b16 %v807
    %v1175 = vunpack.c.l.b16 %v808
    %v1176 = vunpack.c.h.b16 %v808
    %v1177 = vunpack.c.l.b16 %v809
    %v1178 = vunpack.c.h.b16 %v809
    %v1179 = vunpack.c.l.b16 %v810
    %v1180 = vunpack.c.h.b16 %v810
    %v1181 = vunpack.c.l.b16 %v811
    %v1182 = vunpack.c.h.b16 %v811
    %v1183 = vunpack.c.l.b16 %v812
    %v1184 = vunpack.c.h.b16 %v812
    %v1185 = vunpack.c.l.b16 %v813
    %v1186 = vunpack.c.h.b16 %v813
    %v1187 = vunpack.c.l.b16 %v814
    %v1188 = vunpack.c.h.b16 %v814
    %v1189 = vunpack.c.l.b16 %v815
    %v1190 = vunpack.c.h.b16 %v815
    %v1191 = vunpack.c.l.b16 %v816
    %v1192 = vunpack.c.h.b16 %v816
    %v1193 = vunpack.c.l.b16 %v817
    %v1194 = vunpack.c.h.b16 %v817
    %v1195 = vunpack.c.l.b16 %v818
    %v1196 = vunpack.c.h.b16 %v818
    %v1197 = vunpack.c.l.b16 %v819
    %v1198 = vunpack.c.h.b16 %v819
    %v1199 = vpack.c.b16 %v1139, %v1135
    %v1200 = vpack.c.b16 %v1140, %v1136
    %v1201 = vpack.c.b16 %v1141, %v1137
    %v1202 = vpack.c.b16 %v1142, %v1138
    %v1203 = vpack.c.b16 %v1147, %v1143
    %v1204 = vpack.c.b16 %v1148, %v1144
    %v1205 = vpack.c.b16 %v1149, %v1145
    %v1206 = vpack.c.b16 %v1150, %v1146
    %v1207 = vpack.c.b16 %v1155, %v1151
    %v1208 = vpack.c.b16 %v1156, %v1152
    %v1209 = vpack.c.b16 %v1157, %v1153
    %v1210 = vpack.c.b16 %v1158, %v1154
    %v1211 = vpack.c.b16 %v1163, %v1159
    %v1212 = vpack.c.b16 %v1164, %v1160
    %v1213 = vpack.c.b16 %v1165, %v1161
    %v1214 = vpack.c.b16 %v1166, %v1162
    %v1215 = vpack.c.b16 %v1171, %v1167
    %v1216 = vpack.c.b16 %v1172, %v1168
    %v1217 = vpack.c.b16 %v1173, %v1169
    %v1218 = vpack.c.b16 %v1174, %v1170
    %v1219 = vpack.c.b16 %v1179, %v1175
    %v1220 = vpack.c.b16 %v1180, %v1176
    %v1221 = vpack.c.b16 %v1181, %v1177
    %v1222 = vpack.c.b16 %v1182, %v1178
    %v1223 = vpack.c.b16 %v1187, %v1183
    %v1224 = vpack.c.b16 %v1188, %v1184
    %v1225 = vpack.c.b16 %v1189, %v1185
    %v1226 = vpack.c.b16 %v1190, %v1186
    %v1227 = vpack.c.b16 %v1195, %v1191
    %v1228 = vpack.c.b16 %v1196, %v1192
    %v1229 = vpack.c.b16 %v1197, %v1193
    %v1230 = vpack.c.b16 %v1198, %v1194
    %1263 = vmatprep.subr.bf16.mxu0 %v1200
    %1264 = vmatpush1.bf16.msra.mxu0 %v1199
    %1265 = vmatprep.subr.bf16.mxu0 %v1204
    %1266 = vmatpush1.bf16.msra.mxu0 %v1203
    %1267 = vmatprep.subr.bf16.mxu0 %v1208
    %1268 = vmatpush1.bf16.msra.mxu0 %v1207
    %1269 = vmatprep.subr.bf16.mxu0 %v1212
    %1270 = vmatpush1.bf16.msra.mxu0 %v1211
    %1271 = vmatprep.subr.bf16.mxu0 %v1216
    %1272 = vmatpush1.bf16.msra.mxu0 %v1215
    %1273 = vmatprep.subr.bf16.mxu0 %v1220
    %1274 = vmatpush1.bf16.msra.mxu0 %v1219
    %1275 = vmatprep.subr.bf16.mxu0 %v1224
    %1276 = vmatpush1.bf16.msra.mxu0 %v1223
    %1277 = vmatprep.subr.bf16.mxu0 %v1228
    %1278 = vmatpush1.bf16.msra.mxu0 %v1227
    %1279 = vmatprep.subr.bf16.mxu0 0
    %1280 = vmatpush1.bf16.msra.mxu0 0
    %1281 = vmatprep.subr.bf16.mxu0 0
    %1282 = vmatpush1.bf16.msra.mxu0 0
    %1283 = vmatprep.subr.bf16.mxu0 0
    %1284 = vmatpush1.bf16.msra.mxu0 0
    %1285 = vmatprep.subr.bf16.mxu0 0
    %1286 = vmatpush1.bf16.msra.mxu0 0
    %1287 = vmatprep.subr.bf16.mxu0 0
    %1288 = vmatpush1.bf16.msra.mxu0 0
    %1289 = vmatprep.subr.bf16.mxu0 0
    %1290 = vmatpush1.bf16.msra.mxu0 0
    %1291 = vmatprep.subr.bf16.mxu0 0
    %1292 = vmatpush1.bf16.msra.mxu0 0
    %1293 = vmatprep.subr.bf16.mxu0 0
    %1294 = vmatpush1.bf16.msra.mxu0 0
    %1295 = vmatprep.mubr.bf16.mxu0 0
    %1296 = vmatmul.mubr.bf16.gmra.mrb[0].mxu0 %v1102
    %v1297 = vpop.f32.mrb[0].mxu0
    %v1298 = vadd.f32 0.0, %v1297
    %v1299 = vpop.f32.mrb[0].mxu0
    %v1300 = vadd.f32 0.0, %v1299
    %v1301 = vpop.f32.mrb[0].mxu0
    %v1302 = vpop.f32.mrb[0].mxu0
    %1303 = vdwg.mxu0
    %1304 = vmatprep.subr.bf16.mxu0 %v1202
    %1305 = vmatpush1.bf16.msra.mxu0 %v1201
    %1306 = vmatprep.subr.bf16.mxu0 %v1206
    %1307 = vmatpush1.bf16.msra.mxu0 %v1205
    %1308 = vmatprep.subr.bf16.mxu0 %v1210
    %1309 = vmatpush1.bf16.msra.mxu0 %v1209
    %1310 = vmatprep.subr.bf16.mxu0 %v1214
    %1311 = vmatpush1.bf16.msra.mxu0 %v1213
    %1312 = vmatprep.subr.bf16.mxu0 %v1218
    %1313 = vmatpush1.bf16.msra.mxu0 %v1217
    %1314 = vmatprep.subr.bf16.mxu0 %v1222
    %1315 = vmatpush1.bf16.msra.mxu0 %v1221
    %1316 = vmatprep.subr.bf16.mxu0 %v1226
    %1317 = vmatpush1.bf16.msra.mxu0 %v1225
    %1318 = vmatprep.subr.bf16.mxu0 %v1230
    %1319 = vmatpush1.bf16.msra.mxu0 %v1229
    %1320 = vmatprep.subr.bf16.mxu0 0
    %1321 = vmatpush1.bf16.msra.mxu0 0
    %1322 = vmatprep.subr.bf16.mxu0 0
    %1323 = vmatpush1.bf16.msra.mxu0 0
    %1324 = vmatprep.subr.bf16.mxu0 0
    %1325 = vmatpush1.bf16.msra.mxu0 0
    %1326 = vmatprep.subr.bf16.mxu0 0
    %1327 = vmatpush1.bf16.msra.mxu0 0
    %1328 = vmatprep.subr.bf16.mxu0 0
    %1329 = vmatpush1.bf16.msra.mxu0 0
    %1330 = vmatprep.subr.bf16.mxu0 0
    %1331 = vmatpush1.bf16.msra.mxu0 0
    %1332 = vmatprep.subr.bf16.mxu0 0
    %1333 = vmatpush1.bf16.msra.mxu0 0
    %1334 = vmatprep.subr.bf16.mxu0 0
    %1335 = vmatpush1.bf16.msra.mxu0 0
    %1336 = vmatprep.mubr.bf16.mxu0 0
    %1337 = vmatmul.mubr.bf16.gmra.mrb[0].mxu0 %v1102
    %v1338 = vpop.f32.mrb[0].mxu0
    %v1339 = vadd.f32 0.0, %v1338
    %v1340 = vpop.f32.mrb[0].mxu0
    %v1341 = vadd.f32 0.0, %v1340
    %v1342 = vpop.f32.mrb[0].mxu0
    %v1343 = vpop.f32.mrb[0].mxu0
    %1344 = vdwg.mxu0
    %v1377 = vunpack.c.l.b16 %v756
    %v1378 = vunpack.c.h.b16 %v756
    %v1379 = vunpack.c.l.b16 %v757
    %v1380 = vunpack.c.h.b16 %v757
    %v1381 = vunpack.c.l.b16 %v758
    %v1382 = vunpack.c.h.b16 %v758
    %v1383 = vunpack.c.l.b16 %v759
    %v1384 = vunpack.c.h.b16 %v759
    %v1385 = vunpack.c.l.b16 %v760
    %v1386 = vunpack.c.h.b16 %v760
    %v1387 = vunpack.c.l.b16 %v761
    %v1388 = vunpack.c.h.b16 %v761
    %v1389 = vunpack.c.l.b16 %v762
    %v1390 = vunpack.c.h.b16 %v762
    %v1391 = vunpack.c.l.b16 %v763
    %v1392 = vunpack.c.h.b16 %v763
    %v1393 = vunpack.c.l.b16 %v764
    %v1394 = vunpack.c.h.b16 %v764
    %v1395 = vunpack.c.l.b16 %v765
    %v1396 = vunpack.c.h.b16 %v765
    %v1397 = vunpack.c.l.b16 %v766
    %v1398 = vunpack.c.h.b16 %v766
    %v1399 = vunpack.c.l.b16 %v767
    %v1400 = vunpack.c.h.b16 %v767
    %v1401 = vunpack.c.l.b16 %v768
    %v1402 = vunpack.c.h.b16 %v768
    %v1403 = vunpack.c.l.b16 %v769
    %v1404 = vunpack.c.h.b16 %v769
    %v1405 = vunpack.c.l.b16 %v770
    %v1406 = vunpack.c.h.b16 %v770
    %v1407 = vunpack.c.l.b16 %v771
    %v1408 = vunpack.c.h.b16 %v771
    %v1409 = vunpack.c.l.b16 %v772
    %v1410 = vunpack.c.h.b16 %v772
    %v1411 = vunpack.c.l.b16 %v773
    %v1412 = vunpack.c.h.b16 %v773
    %v1413 = vunpack.c.l.b16 %v774
    %v1414 = vunpack.c.h.b16 %v774
    %v1415 = vunpack.c.l.b16 %v775
    %v1416 = vunpack.c.h.b16 %v775
    %v1417 = vunpack.c.l.b16 %v776
    %v1418 = vunpack.c.h.b16 %v776
    %v1419 = vunpack.c.l.b16 %v777
    %v1420 = vunpack.c.h.b16 %v777
    %v1421 = vunpack.c.l.b16 %v778
    %v1422 = vunpack.c.h.b16 %v778
    %v1423 = vunpack.c.l.b16 %v779
    %v1424 = vunpack.c.h.b16 %v779
    %v1425 = vunpack.c.l.b16 %v780
    %v1426 = vunpack.c.h.b16 %v780
    %v1427 = vunpack.c.l.b16 %v781
    %v1428 = vunpack.c.h.b16 %v781
    %v1429 = vunpack.c.l.b16 %v782
    %v1430 = vunpack.c.h.b16 %v782
    %v1431 = vunpack.c.l.b16 %v783
    %v1432 = vunpack.c.h.b16 %v783
    %v1433 = vunpack.c.l.b16 %v784
    %v1434 = vunpack.c.h.b16 %v784
    %v1435 = vunpack.c.l.b16 %v785
    %v1436 = vunpack.c.h.b16 %v785
    %v1437 = vunpack.c.l.b16 %v786
    %v1438 = vunpack.c.h.b16 %v786
    %v1439 = vunpack.c.l.b16 %v787
    %v1440 = vunpack.c.h.b16 %v787
    %v1441 = vpack.c.b16 %v1381, %v1377
    %v1442 = vpack.c.b16 %v1382, %v1378
    %v1443 = vpack.c.b16 %v1383, %v1379
    %v1444 = vpack.c.b16 %v1384, %v1380
    %v1445 = vpack.c.b16 %v1389, %v1385
    %v1446 = vpack.c.b16 %v1390, %v1386
    %v1447 = vpack.c.b16 %v1391, %v1387
    %v1448 = vpack.c.b16 %v1392, %v1388
    %v1449 = vpack.c.b16 %v1397, %v1393
    %v1450 = vpack.c.b16 %v1398, %v1394
    %v1451 = vpack.c.b16 %v1399, %v1395
    %v1452 = vpack.c.b16 %v1400, %v1396
    %v1453 = vpack.c.b16 %v1405, %v1401
    %v1454 = vpack.c.b16 %v1406, %v1402
    %v1455 = vpack.c.b16 %v1407, %v1403
    %v1456 = vpack.c.b16 %v1408, %v1404
    %v1457 = vpack.c.b16 %v1413, %v1409
    %v1458 = vpack.c.b16 %v1414, %v1410
    %v1459 = vpack.c.b16 %v1415, %v1411
    %v1460 = vpack.c.b16 %v1416, %v1412
    %v1461 = vpack.c.b16 %v1421, %v1417
    %v1462 = vpack.c.b16 %v1422, %v1418
    %v1463 = vpack.c.b16 %v1423, %v1419
    %v1464 = vpack.c.b16 %v1424, %v1420
    %v1465 = vpack.c.b16 %v1429, %v1425
    %v1466 = vpack.c.b16 %v1430, %v1426
    %v1467 = vpack.c.b16 %v1431, %v1427
    %v1468 = vpack.c.b16 %v1432, %v1428
    %v1469 = vpack.c.b16 %v1437, %v1433
    %v1470 = vpack.c.b16 %v1438, %v1434
    %v1471 = vpack.c.b16 %v1439, %v1435
    %v1472 = vpack.c.b16 %v1440, %v1436
    %1505 = vmatprep.subr.bf16.mxu0 %v1442
    %1506 = vmatpush1.bf16.msra.mxu0 %v1441
    %1507 = vmatprep.subr.bf16.mxu0 %v1446
    %1508 = vmatpush1.bf16.msra.mxu0 %v1445
    %1509 = vmatprep.subr.bf16.mxu0 %v1450
    %1510 = vmatpush1.bf16.msra.mxu0 %v1449
    %1511 = vmatprep.subr.bf16.mxu0 %v1454
    %1512 = vmatpush1.bf16.msra.mxu0 %v1453
    %1513 = vmatprep.subr.bf16.mxu0 %v1458
    %1514 = vmatpush1.bf16.msra.mxu0 %v1457
    %1515 = vmatprep.subr.bf16.mxu0 %v1462
    %1516 = vmatpush1.bf16.msra.mxu0 %v1461
    %1517 = vmatprep.subr.bf16.mxu0 %v1466
    %1518 = vmatpush1.bf16.msra.mxu0 %v1465
    %1519 = vmatprep.subr.bf16.mxu0 %v1470
    %1520 = vmatpush1.bf16.msra.mxu0 %v1469
    %1521 = vmatprep.subr.bf16.mxu0 0
    %1522 = vmatpush1.bf16.msra.mxu0 0
    %1523 = vmatprep.subr.bf16.mxu0 0
    %1524 = vmatpush1.bf16.msra.mxu0 0
    %1525 = vmatprep.subr.bf16.mxu0 0
    %1526 = vmatpush1.bf16.msra.mxu0 0
    %1527 = vmatprep.subr.bf16.mxu0 0
    %1528 = vmatpush1.bf16.msra.mxu0 0
    %1529 = vmatprep.subr.bf16.mxu0 0
    %1530 = vmatpush1.bf16.msra.mxu0 0
    %1531 = vmatprep.subr.bf16.mxu0 0
    %1532 = vmatpush1.bf16.msra.mxu0 0
    %1533 = vmatprep.subr.bf16.mxu0 0
    %1534 = vmatpush1.bf16.msra.mxu0 0
    %1535 = vmatprep.subr.bf16.mxu0 0
    %1536 = vmatpush1.bf16.msra.mxu0 0
    %1537 = vmatprep.mubr.bf16.mxu0 0
    %1538 = vmatmul.mubr.bf16.gmra.mrb[0].mxu0 %v1101
    %v1539 = vpop.f32.mrb[0].mxu0
    %v1540 = vadd.f32 %v1298, %v1539
    %v1541 = vpop.f32.mrb[0].mxu0
    %v1542 = vadd.f32 %v1300, %v1541
    %v1543 = vpop.f32.mrb[0].mxu0
    %v1544 = vpop.f32.mrb[0].mxu0
    %1545 = vdwg.mxu0
    %1546 = vmatprep.subr.bf16.mxu0 %v1444
    %1547 = vmatpush1.bf16.msra.mxu0 %v1443
    %1548 = vmatprep.subr.bf16.mxu0 %v1448
    %1549 = vmatpush1.bf16.msra.mxu0 %v1447
    %1550 = vmatprep.subr.bf16.mxu0 %v1452
    %1551 = vmatpush1.bf16.msra.mxu0 %v1451
    %1552 = vmatprep.subr.bf16.mxu0 %v1456
    %1553 = vmatpush1.bf16.msra.mxu0 %v1455
    %1554 = vmatprep.subr.bf16.mxu0 %v1460
    %1555 = vmatpush1.bf16.msra.mxu0 %v1459
    %1556 = vmatprep.subr.bf16.mxu0 %v1464
    %1557 = vmatpush1.bf16.msra.mxu0 %v1463
    %1558 = vmatprep.subr.bf16.mxu0 %v1468
    %1559 = vmatpush1.bf16.msra.mxu0 %v1467
    %1560 = vmatprep.subr.bf16.mxu0 %v1472
    %1561 = vmatpush1.bf16.msra.mxu0 %v1471
    %1562 = vmatprep.subr.bf16.mxu0 0
    %1563 = vmatpush1.bf16.msra.mxu0 0
    %1564 = vmatprep.subr.bf16.mxu0 0
    %1565 = vmatpush1.bf16.msra.mxu0 0
    %1566 = vmatprep.subr.bf16.mxu0 0
    %1567 = vmatpush1.bf16.msra.mxu0 0
    %1568 = vmatprep.subr.bf16.mxu0 0
    %1569 = vmatpush1.bf16.msra.mxu0 0
    %1570 = vmatprep.subr.bf16.mxu0 0
    %1571 = vmatpush1.bf16.msra.mxu0 0
    %1572 = vmatprep.subr.bf16.mxu0 0
    %1573 = vmatpush1.bf16.msra.mxu0 0
    %1574 = vmatprep.subr.bf16.mxu0 0
    %1575 = vmatpush1.bf16.msra.mxu0 0
    %1576 = vmatprep.subr.bf16.mxu0 0
    %1577 = vmatpush1.bf16.msra.mxu0 0
    %1578 = vmatprep.mubr.bf16.mxu0 0
    %1579 = vmatmul.mubr.bf16.gmra.mrb[0].mxu0 %v1101
    %v1580 = vpop.f32.mrb[0].mxu0
    %v1581 = vadd.f32 %v1339, %v1580
    %v1582 = vpop.f32.mrb[0].mxu0
    %v1583 = vadd.f32 %v1341, %v1582
    %v1584 = vpop.f32.mrb[0].mxu0
    %v1585 = vpop.f32.mrb[0].mxu0
    %1586 = vdwg.mxu0
    %v1587 = vadd.f32 %v1540, %v820
    %v1588 = vadd.f32 %v1542, %v821
    %v1589 = vadd.f32 %v1581, %v822
    %v1590 = vadd.f32 %v1583, %v823
    %v1591 = vxor.u32 %v1587, 2147483648
    %v1592 = vxor.u32 %v1588, 2147483648
    %v1593 = vxor.u32 %v1589, 2147483648
    %v1594 = vmul.f32 %v1591, 1.442695
    %v1595 = vpow.pop %v1594
    %v1596 = vmul.f32 %v1592, 1.442695
    %v1597 = vpow.pop %v1596
    %v1598 = vmul.f32 %v1593, 1.442695
    %v1599 = vpow.pop %v1598
    %v1600 = vadd.f32 %v1595, 1.0
    %v1601 = vadd.f32 %v1597, 1.0
    %v1602 = vadd.f32 %v1599, 1.0
    %v1603 = vrcp.pop %v1600
    %v1604 = vmul.f32 1.0, %v1603
    %v1605 = vrcp.pop %v1601
    %v1606 = vmul.f32 1.0, %v1605
    %v1607 = vrcp.pop %v1602
    %v1608 = vmul.f32 1.0, %v1607
    %v1609 = vtanh.pop %v1590
    %v1610 = vmul.f32 %v1606, %v829
    %v1611 = vmul.f32 %v1604, %v1609
    %v1612 = vadd.f32 %v1610, %v1611
    %v1613 = vtanh.pop %v1612
    %v1614 = vmul.f32 %v1608, %v1613
    %1615 = vmatprep.subr.bf16.mxu0 %v928
    %1616 = vmatpush1.bf16.msra.mxu0 %v927
    %1617 = vmatprep.subr.bf16.mxu0 %v932
    %1618 = vmatpush1.bf16.msra.mxu0 %v931
    %1619 = vmatprep.subr.bf16.mxu0 %v936
    %1620 = vmatpush1.bf16.msra.mxu0 %v935
    %1621 = vmatprep.subr.bf16.mxu0 %v940
    %1622 = vmatpush1.bf16.msra.mxu0 %v939
    %1623 = vmatprep.subr.bf16.mxu0 %v944
    %1624 = vmatpush1.bf16.msra.mxu0 %v943
    %1625 = vmatprep.subr.bf16.mxu0 %v948
    %1626 = vmatpush1.bf16.msra.mxu0 %v947
    %1627 = vmatprep.subr.bf16.mxu0 %v952
    %1628 = vmatpush1.bf16.msra.mxu0 %v951
    %1629 = vmatprep.subr.bf16.mxu0 %v956
    %1630 = vmatpush1.bf16.msra.mxu0 %v955
    %1631 = vmatprep.subr.bf16.mxu0 0
    %1632 = vmatpush1.bf16.msra.mxu0 0
    %1633 = vmatprep.subr.bf16.mxu0 0
    %1634 = vmatpush1.bf16.msra.mxu0 0
    %1635 = vmatprep.subr.bf16.mxu0 0
    %1636 = vmatpush1.bf16.msra.mxu0 0
    %1637 = vmatprep.subr.bf16.mxu0 0
    %1638 = vmatpush1.bf16.msra.mxu0 0
    %1639 = vmatprep.subr.bf16.mxu0 0
    %1640 = vmatpush1.bf16.msra.mxu0 0
    %1641 = vmatprep.subr.bf16.mxu0 0
    %1642 = vmatpush1.bf16.msra.mxu0 0
    %1643 = vmatprep.subr.bf16.mxu0 0
    %1644 = vmatpush1.bf16.msra.mxu0 0
    %1645 = vmatprep.subr.bf16.mxu0 0
    %1646 = vmatpush1.bf16.msra.mxu0 0
    %1647 = vmatprep.mubr.bf16.mxu0 0
    %1648 = vmatmul.mubr.bf16.gmra.mrb[0].mxu0 %v1101
    %v1649 = vpop.f32.mrb[0].mxu0
    %v1650 = vadd.f32 0.0, %v1649
    %v1651 = vpop.f32.mrb[0].mxu0
    %v1652 = vadd.f32 0.0, %v1651
    %v1653 = vpop.f32.mrb[0].mxu0
    %v1654 = vpop.f32.mrb[0].mxu0
    %1655 = vdwg.mxu0
    %1656 = vmatprep.subr.bf16.mxu0 %v930
    %1657 = vmatpush1.bf16.msra.mxu0 %v929
    %1658 = vmatprep.subr.bf16.mxu0 %v934
    %1659 = vmatpush1.bf16.msra.mxu0 %v933
    %1660 = vmatprep.subr.bf16.mxu0 %v938
    %1661 = vmatpush1.bf16.msra.mxu0 %v937
    %1662 = vmatprep.subr.bf16.mxu0 %v942
    %1663 = vmatpush1.bf16.msra.mxu0 %v941
    %1664 = vmatprep.subr.bf16.mxu0 %v946
    %1665 = vmatpush1.bf16.msra.mxu0 %v945
    %1666 = vmatprep.subr.bf16.mxu0 %v950
    %1667 = vmatpush1.bf16.msra.mxu0 %v949
    %1668 = vmatprep.subr.bf16.mxu0 %v954
    %1669 = vmatpush1.bf16.msra.mxu0 %v953
    %1670 = vmatprep.subr.bf16.mxu0 %v958
    %1671 = vmatpush1.bf16.msra.mxu0 %v957
    %1672 = vmatprep.subr.bf16.mxu0 0
    %1673 = vmatpush1.bf16.msra.mxu0 0
    %1674 = vmatprep.subr.bf16.mxu0 0
    %1675 = vmatpush1.bf16.msra.mxu0 0
    %1676 = vmatprep.subr.bf16.mxu0 0
    %1677 = vmatpush1.bf16.msra.mxu0 0
    %1678 = vmatprep.subr.bf16.mxu0 0
    %1679 = vmatpush1.bf16.msra.mxu0 0
    %1680 = vmatprep.subr.bf16.mxu0 0
    %1681 = vmatpush1.bf16.msra.mxu0 0
    %1682 = vmatprep.subr.bf16.mxu0 0
    %1683 = vmatpush1.bf16.msra.mxu0 0
    %1684 = vmatprep.subr.bf16.mxu0 0
    %1685 = vmatpush1.bf16.msra.mxu0 0
    %1686 = vmatprep.subr.bf16.mxu0 0
    %1687 = vmatpush1.bf16.msra.mxu0 0
    %1688 = vmatprep.mubr.bf16.mxu0 0
    %1689 = vmatmul.mubr.bf16.gmra.mrb[0].mxu0 %v1101
    %v1690 = vpop.f32.mrb[0].mxu0
    %v1691 = vadd.f32 0.0, %v1690
    %v1692 = vpop.f32.mrb[0].mxu0
    %v1693 = vadd.f32 0.0, %v1692
    %v1694 = vpop.f32.mrb[0].mxu0
    %v1695 = vpop.f32.mrb[0].mxu0
    %1696 = vdwg.mxu0
    %v1697 = vadd.f32 %v617, %v1650
    %v1698 = vadd.f32 %v619, %v1652
    %v1699 = vadd.f32 %v690, %v1691
    %v1700 = vadd.f32 %v692, %v1693
    %v1701 = vxor.u32 %v1697, 2147483648
    %v1702 = vxor.u32 %v1698, 2147483648
    %v1703 = vxor.u32 %v1699, 2147483648
    %v1704 = vmul.f32 %v1701, 1.442695
    %v1705 = vpow.pop %v1704
    %v1706 = vmul.f32 %v1702, 1.442695
    %v1707 = vpow.pop %v1706
    %v1708 = vmul.f32 %v1703, 1.442695
    %v1709 = vpow.pop %v1708
    %v1710 = vadd.f32 %v1705, 1.0
    %v1711 = vadd.f32 %v1707, 1.0
    %v1712 = vadd.f32 %v1709, 1.0
    %v1713 = vrcp.pop %v1710
    %v1714 = vmul.f32 1.0, %v1713
    %v1715 = vrcp.pop %v1711
    %v1716 = vmul.f32 1.0, %v1715
    %v1717 = vrcp.pop %v1712
    %v1718 = vmul.f32 1.0, %v1717
    %v1719 = vtanh.pop %v1700
    %v1720 = vmul.f32 %v1716, %v1098
    %v1721 = vmul.f32 %v1714, %v1719
    %v1722 = vadd.f32 %v1720, %v1721
    %v1723 = vtanh.pop %v1722
    %v1724 = vmul.f32 %v1718, %v1723
    %v1725 = vpack.c.bf16 %v1724, %v1724
    %v1726 = vpack.c.bf16 %v1614, %v1614
    %1727 = vmatprep.subr.bf16.mxu0 %v1200
    %1728 = vmatpush1.bf16.msra.mxu0 %v1199
    %1729 = vmatprep.subr.bf16.mxu0 %v1204
    %1730 = vmatpush1.bf16.msra.mxu0 %v1203
    %1731 = vmatprep.subr.bf16.mxu0 %v1208
    %1732 = vmatpush1.bf16.msra.mxu0 %v1207
    %1733 = vmatprep.subr.bf16.mxu0 %v1212
    %1734 = vmatpush1.bf16.msra.mxu0 %v1211
    %1735 = vmatprep.subr.bf16.mxu0 %v1216
    %1736 = vmatpush1.bf16.msra.mxu0 %v1215
    %1737 = vmatprep.subr.bf16.mxu0 %v1220
    %1738 = vmatpush1.bf16.msra.mxu0 %v1219
    %1739 = vmatprep.subr.bf16.mxu0 %v1224
    %1740 = vmatpush1.bf16.msra.mxu0 %v1223
    %1741 = vmatprep.subr.bf16.mxu0 %v1228
    %1742 = vmatpush1.bf16.msra.mxu0 %v1227
    %1743 = vmatprep.subr.bf16.mxu0 0
    %1744 = vmatpush1.bf16.msra.mxu0 0
    %1745 = vmatprep.subr.bf16.mxu0 0
    %1746 = vmatpush1.bf16.msra.mxu0 0
    %1747 = vmatprep.subr.bf16.mxu0 0
    %1748 = vmatpush1.bf16.msra.mxu0 0
    %1749 = vmatprep.subr.bf16.mxu0 0
    %1750 = vmatpush1.bf16.msra.mxu0 0
    %1751 = vmatprep.subr.bf16.mxu0 0
    %1752 = vmatpush1.bf16.msra.mxu0 0
    %1753 = vmatprep.subr.bf16.mxu0 0
    %1754 = vmatpush1.bf16.msra.mxu0 0
    %1755 = vmatprep.subr.bf16.mxu0 0
    %1756 = vmatpush1.bf16.msra.mxu0 0
    %1757 = vmatprep.subr.bf16.mxu0 0
    %1758 = vmatpush1.bf16.msra.mxu0 0
    %1759 = vmatprep.mubr.bf16.mxu0 0
    %1760 = vmatmul.mubr.bf16.gmra.mrb[0].mxu0 %v1726
    %v1761 = vpop.f32.mrb[0].mxu0
    %v1762 = vadd.f32 0.0, %v1761
    %v1763 = vpop.f32.mrb[0].mxu0
    %v1764 = vadd.f32 0.0, %v1763
    %v1765 = vpop.f32.mrb[0].mxu0
    %v1766 = vpop.f32.mrb[0].mxu0
    %1767 = vdwg.mxu0
    %1768 = vmatprep.subr.bf16.mxu0 %v1202
    %1769 = vmatpush1.bf16.msra.mxu0 %v1201
    %1770 = vmatprep.subr.bf16.mxu0 %v1206
    %1771 = vmatpush1.bf16.msra.mxu0 %v1205
    %1772 = vmatprep.subr.bf16.mxu0 %v1210
    %1773 = vmatpush1.bf16.msra.mxu0 %v1209
    %1774 = vmatprep.subr.bf16.mxu0 %v1214
    %1775 = vmatpush1.bf16.msra.mxu0 %v1213
    %1776 = vmatprep.subr.bf16.mxu0 %v1218
    %1777 = vmatpush1.bf16.msra.mxu0 %v1217
    %1778 = vmatprep.subr.bf16.mxu0 %v1222
    %1779 = vmatpush1.bf16.msra.mxu0 %v1221
    %1780 = vmatprep.subr.bf16.mxu0 %v1226
    %1781 = vmatpush1.bf16.msra.mxu0 %v1225
    %1782 = vmatprep.subr.bf16.mxu0 %v1230
    %1783 = vmatpush1.bf16.msra.mxu0 %v1229
    %1784 = vmatprep.subr.bf16.mxu0 0
    %1785 = vmatpush1.bf16.msra.mxu0 0
    %1786 = vmatprep.subr.bf16.mxu0 0
    %1787 = vmatpush1.bf16.msra.mxu0 0
    %1788 = vmatprep.subr.bf16.mxu0 0
    %1789 = vmatpush1.bf16.msra.mxu0 0
    %1790 = vmatprep.subr.bf16.mxu0 0
    %1791 = vmatpush1.bf16.msra.mxu0 0
    %1792 = vmatprep.subr.bf16.mxu0 0
    %1793 = vmatpush1.bf16.msra.mxu0 0
    %1794 = vmatprep.subr.bf16.mxu0 0
    %1795 = vmatpush1.bf16.msra.mxu0 0
    %1796 = vmatprep.subr.bf16.mxu0 0
    %1797 = vmatpush1.bf16.msra.mxu0 0
    %1798 = vmatprep.subr.bf16.mxu0 0
    %1799 = vmatpush1.bf16.msra.mxu0 0
    %1800 = vmatprep.mubr.bf16.mxu0 0
    %1801 = vmatmul.mubr.bf16.gmra.mrb[0].mxu0 %v1726
    %v1802 = vpop.f32.mrb[0].mxu0
    %v1803 = vadd.f32 0.0, %v1802
    %v1804 = vpop.f32.mrb[0].mxu0
    %v1805 = vadd.f32 0.0, %v1804
    %v1806 = vpop.f32.mrb[0].mxu0
    %v1807 = vpop.f32.mrb[0].mxu0
    %1808 = vdwg.mxu0
    %1809 = vmatprep.subr.bf16.mxu0 %v1442
    %1810 = vmatpush1.bf16.msra.mxu0 %v1441
    %1811 = vmatprep.subr.bf16.mxu0 %v1446
    %1812 = vmatpush1.bf16.msra.mxu0 %v1445
    %1813 = vmatprep.subr.bf16.mxu0 %v1450
    %1814 = vmatpush1.bf16.msra.mxu0 %v1449
    %1815 = vmatprep.subr.bf16.mxu0 %v1454
    %1816 = vmatpush1.bf16.msra.mxu0 %v1453
    %1817 = vmatprep.subr.bf16.mxu0 %v1458
    %1818 = vmatpush1.bf16.msra.mxu0 %v1457
    %1819 = vmatprep.subr.bf16.mxu0 %v1462
    %1820 = vmatpush1.bf16.msra.mxu0 %v1461
    %1821 = vmatprep.subr.bf16.mxu0 %v1466
    %1822 = vmatpush1.bf16.msra.mxu0 %v1465
    %1823 = vmatprep.subr.bf16.mxu0 %v1470
    %1824 = vmatpush1.bf16.msra.mxu0 %v1469
    %1825 = vmatprep.subr.bf16.mxu0 0
    %1826 = vmatpush1.bf16.msra.mxu0 0
    %1827 = vmatprep.subr.bf16.mxu0 0
    %1828 = vmatpush1.bf16.msra.mxu0 0
    %1829 = vmatprep.subr.bf16.mxu0 0
    %1830 = vmatpush1.bf16.msra.mxu0 0
    %1831 = vmatprep.subr.bf16.mxu0 0
    %1832 = vmatpush1.bf16.msra.mxu0 0
    %1833 = vmatprep.subr.bf16.mxu0 0
    %1834 = vmatpush1.bf16.msra.mxu0 0
    %1835 = vmatprep.subr.bf16.mxu0 0
    %1836 = vmatpush1.bf16.msra.mxu0 0
    %1837 = vmatprep.subr.bf16.mxu0 0
    %1838 = vmatpush1.bf16.msra.mxu0 0
    %1839 = vmatprep.subr.bf16.mxu0 0
    %1840 = vmatpush1.bf16.msra.mxu0 0
    %1841 = vmatprep.mubr.bf16.mxu0 0
    %1842 = vmatmul.mubr.bf16.gmra.mrb[0].mxu0 %v1725
    %v1843 = vpop.f32.mrb[0].mxu0
    %v1844 = vadd.f32 %v1762, %v1843
    %v1845 = vpop.f32.mrb[0].mxu0
    %v1846 = vadd.f32 %v1764, %v1845
    %v1847 = vpop.f32.mrb[0].mxu0
    %v1848 = vpop.f32.mrb[0].mxu0
    %1849 = vdwg.mxu0
    %1850 = vmatprep.subr.bf16.mxu0 %v1444
    %1851 = vmatpush1.bf16.msra.mxu0 %v1443
    %1852 = vmatprep.subr.bf16.mxu0 %v1448
    %1853 = vmatpush1.bf16.msra.mxu0 %v1447
    %1854 = vmatprep.subr.bf16.mxu0 %v1452
    %1855 = vmatpush1.bf16.msra.mxu0 %v1451
    %1856 = vmatprep.subr.bf16.mxu0 %v1456
    %1857 = vmatpush1.bf16.msra.mxu0 %v1455
    %1858 = vmatprep.subr.bf16.mxu0 %v1460
    %1859 = vmatpush1.bf16.msra.mxu0 %v1459
    %1860 = vmatprep.subr.bf16.mxu0 %v1464
    %1861 = vmatpush1.bf16.msra.mxu0 %v1463
    %1862 = vmatprep.subr.bf16.mxu0 %v1468
    %1863 = vmatpush1.bf16.msra.mxu0 %v1467
    %1864 = vmatprep.subr.bf16.mxu0 %v1472
    %1865 = vmatpush1.bf16.msra.mxu0 %v1471
    %1866 = vmatprep.subr.bf16.mxu0 0
    %1867 = vmatpush1.bf16.msra.mxu0 0
    %1868 = vmatprep.subr.bf16.mxu0 0
    %1869 = vmatpush1.bf16.msra.mxu0 0
    %1870 = vmatprep.subr.bf16.mxu0 0
    %1871 = vmatpush1.bf16.msra.mxu0 0
    %1872 = vmatprep.subr.bf16.mxu0 0
    %1873 = vmatpush1.bf16.msra.mxu0 0
    %1874 = vmatprep.subr.bf16.mxu0 0
    %1875 = vmatpush1.bf16.msra.mxu0 0
    %1876 = vmatprep.subr.bf16.mxu0 0
    %1877 = vmatpush1.bf16.msra.mxu0 0
    %1878 = vmatprep.subr.bf16.mxu0 0
    %1879 = vmatpush1.bf16.msra.mxu0 0
    %1880 = vmatprep.subr.bf16.mxu0 0
    %1881 = vmatpush1.bf16.msra.mxu0 0
    %1882 = vmatprep.mubr.bf16.mxu0 0
    %1883 = vmatmul.mubr.bf16.gmra.mrb[0].mxu0 %v1725
    %v1884 = vpop.f32.mrb[0].mxu0
    %v1885 = vadd.f32 %v1803, %v1884
    %v1886 = vpop.f32.mrb[0].mxu0
    %v1887 = vadd.f32 %v1805, %v1886
    %v1888 = vpop.f32.mrb[0].mxu0
    %v1889 = vpop.f32.mrb[0].mxu0
    %1890 = vdwg.mxu0
    %v1891 = vadd.f32 %v1844, %v820
    %v1892 = vadd.f32 %v1846, %v821
    %v1893 = vadd.f32 %v1885, %v822
    %v1894 = vadd.f32 %v1887, %v823
    %v1895 = vxor.u32 %v1891, 2147483648
    %v1896 = vxor.u32 %v1892, 2147483648
    %v1897 = vxor.u32 %v1893, 2147483648
    %v1898 = vmul.f32 %v1895, 1.442695
    %v1899 = vpow.pop %v1898
    %v1900 = vmul.f32 %v1896, 1.442695
    %v1901 = vpow.pop %v1900
    %v1902 = vmul.f32 %v1897, 1.442695
    %v1903 = vpow.pop %v1902
    %v1904 = vadd.f32 %v1899, 1.0
    %v1905 = vadd.f32 %v1901, 1.0
    %v1906 = vadd.f32 %v1903, 1.0
    %v1907 = vrcp.pop %v1904
    %v1908 = vmul.f32 1.0, %v1907
    %v1909 = vrcp.pop %v1905
    %v1910 = vmul.f32 1.0, %v1909
    %v1911 = vrcp.pop %v1906
    %v1912 = vmul.f32 1.0, %v1911
    %v1913 = vtanh.pop %v1894
    %v1914 = vmul.f32 %v1910, %v1612
    %v1915 = vmul.f32 %v1908, %v1913
    %v1916 = vadd.f32 %v1914, %v1915
    %v1917 = vtanh.pop %v1916
    %v1918 = vmul.f32 %v1912, %v1917
    %1919 = vmatprep.subr.bf16.mxu0 %v928
    %1920 = vmatpush1.bf16.msra.mxu0 %v927
    %1921 = vmatprep.subr.bf16.mxu0 %v932
    %1922 = vmatpush1.bf16.msra.mxu0 %v931
    %1923 = vmatprep.subr.bf16.mxu0 %v936
    %1924 = vmatpush1.bf16.msra.mxu0 %v935
    %1925 = vmatprep.subr.bf16.mxu0 %v940
    %1926 = vmatpush1.bf16.msra.mxu0 %v939
    %1927 = vmatprep.subr.bf16.mxu0 %v944
    %1928 = vmatpush1.bf16.msra.mxu0 %v943
    %1929 = vmatprep.subr.bf16.mxu0 %v948
    %1930 = vmatpush1.bf16.msra.mxu0 %v947
    %1931 = vmatprep.subr.bf16.mxu0 %v952
    %1932 = vmatpush1.bf16.msra.mxu0 %v951
    %1933 = vmatprep.subr.bf16.mxu0 %v956
    %1934 = vmatpush1.bf16.msra.mxu0 %v955
    %1935 = vmatprep.subr.bf16.mxu0 0
    %1936 = vmatpush1.bf16.msra.mxu0 0
    %1937 = vmatprep.subr.bf16.mxu0 0
    %1938 = vmatpush1.bf16.msra.mxu0 0
    %1939 = vmatprep.subr.bf16.mxu0 0
    %1940 = vmatpush1.bf16.msra.mxu0 0
    %1941 = vmatprep.subr.bf16.mxu0 0
    %1942 = vmatpush1.bf16.msra.mxu0 0
    %1943 = vmatprep.subr.bf16.mxu0 0
    %1944 = vmatpush1.bf16.msra.mxu0 0
    %1945 = vmatprep.subr.bf16.mxu0 0
    %1946 = vmatpush1.bf16.msra.mxu0 0
    %1947 = vmatprep.subr.bf16.mxu0 0
    %1948 = vmatpush1.bf16.msra.mxu0 0
    %1949 = vmatprep.subr.bf16.mxu0 0
    %1950 = vmatpush1.bf16.msra.mxu0 0
    %1951 = vmatprep.mubr.bf16.mxu0 0
    %1952 = vmatmul.mubr.bf16.gmra.mrb[0].mxu0 %v1725
    %v1953 = vpop.f32.mrb[0].mxu0
    %v1954 = vadd.f32 0.0, %v1953
    %v1955 = vpop.f32.mrb[0].mxu0
    %v1956 = vadd.f32 0.0, %v1955
    %v1957 = vpop.f32.mrb[0].mxu0
    %v1958 = vpop.f32.mrb[0].mxu0
    %1959 = vdwg.mxu0
    %1960 = vmatprep.subr.bf16.mxu0 %v930
    %1961 = vmatpush1.bf16.msra.mxu0 %v929
    %1962 = vmatprep.subr.bf16.mxu0 %v934
    %1963 = vmatpush1.bf16.msra.mxu0 %v933
    %1964 = vmatprep.subr.bf16.mxu0 %v938
    %1965 = vmatpush1.bf16.msra.mxu0 %v937
    %1966 = vmatprep.subr.bf16.mxu0 %v942
    %1967 = vmatpush1.bf16.msra.mxu0 %v941
    %1968 = vmatprep.subr.bf16.mxu0 %v946
    %1969 = vmatpush1.bf16.msra.mxu0 %v945
    %1970 = vmatprep.subr.bf16.mxu0 %v950
    %1971 = vmatpush1.bf16.msra.mxu0 %v949
    %1972 = vmatprep.subr.bf16.mxu0 %v954
    %1973 = vmatpush1.bf16.msra.mxu0 %v953
    %1974 = vmatprep.subr.bf16.mxu0 %v958
    %1975 = vmatpush1.bf16.msra.mxu0 %v957
    %1976 = vmatprep.subr.bf16.mxu0 0
    %1977 = vmatpush1.bf16.msra.mxu0 0
    %1978 = vmatprep.subr.bf16.mxu0 0
    %1979 = vmatpush1.bf16.msra.mxu0 0
    %1980 = vmatprep.subr.bf16.mxu0 0
    %1981 = vmatpush1.bf16.msra.mxu0 0
    %1982 = vmatprep.subr.bf16.mxu0 0
    %1983 = vmatpush1.bf16.msra.mxu0 0
    %1984 = vmatprep.subr.bf16.mxu0 0
    %1985 = vmatpush1.bf16.msra.mxu0 0
    %1986 = vmatprep.subr.bf16.mxu0 0
    %1987 = vmatpush1.bf16.msra.mxu0 0
    %1988 = vmatprep.subr.bf16.mxu0 0
    %1989 = vmatpush1.bf16.msra.mxu0 0
    %1990 = vmatprep.subr.bf16.mxu0 0
    %1991 = vmatpush1.bf16.msra.mxu0 0
    %1992 = vmatprep.mubr.bf16.mxu0 0
    %1993 = vmatmul.mubr.bf16.gmra.mrb[0].mxu0 %v1725
    %v1994 = vpop.f32.mrb[0].mxu0
    %v1995 = vadd.f32 0.0, %v1994
    %v1996 = vpop.f32.mrb[0].mxu0
    %v1997 = vadd.f32 0.0, %v1996
    %v1998 = vpop.f32.mrb[0].mxu0
    %v1999 = vpop.f32.mrb[0].mxu0
    %2000 = vdwg.mxu0
    %v2001 = vadd.f32 %v623, %v1954
    %v2002 = vadd.f32 %v625, %v1956
    %v2003 = vadd.f32 %v696, %v1995
    %v2004 = vadd.f32 %v698, %v1997
    %v2005 = vxor.u32 %v2001, 2147483648
    %v2006 = vxor.u32 %v2002, 2147483648
    %v2007 = vxor.u32 %v2003, 2147483648
    %v2008 = vmul.f32 %v2005, 1.442695
    %v2009 = vpow.pop %v2008
    %v2010 = vmul.f32 %v2006, 1.442695
    %v2011 = vpow.pop %v2010
    %v2012 = vmul.f32 %v2007, 1.442695
    %v2013 = vpow.pop %v2012
    %v2014 = vadd.f32 %v2009, 1.0
    %v2015 = vadd.f32 %v2011, 1.0
    %v2016 = vadd.f32 %v2013, 1.0
    %v2017 = vrcp.pop %v2014
    %v2018 = vmul.f32 1.0, %v2017
    %v2019 = vrcp.pop %v2015
    %v2020 = vmul.f32 1.0, %v2019
    %v2021 = vrcp.pop %v2016
    %v2022 = vmul.f32 1.0, %v2021
    %v2023 = vtanh.pop %v2004
    %v2024 = vmul.f32 %v2020, %v1722
    %v2025 = vmul.f32 %v2018, %v2023
    %v2026 = vadd.f32 %v2024, %v2025
    %v2027 = vtanh.pop %v2026
    %v2028 = vmul.f32 %v2022, %v2027
    %v2029 = vpack.c.bf16 %v2028, %v2028
    %v2030 = vpack.c.bf16 %v1918, %v1918
    %2031 = vmatprep.subr.bf16.mxu0 %v1200
    %2032 = vmatpush1.bf16.msra.mxu0 %v1199
    %2033 = vmatprep.subr.bf16.mxu0 %v1204
    %2034 = vmatpush1.bf16.msra.mxu0 %v1203
    %2035 = vmatprep.subr.bf16.mxu0 %v1208
    %2036 = vmatpush1.bf16.msra.mxu0 %v1207
    %2037 = vmatprep.subr.bf16.mxu0 %v1212
    %2038 = vmatpush1.bf16.msra.mxu0 %v1211
    %2039 = vmatprep.subr.bf16.mxu0 %v1216
    %2040 = vmatpush1.bf16.msra.mxu0 %v1215
    %2041 = vmatprep.subr.bf16.mxu0 %v1220
    %2042 = vmatpush1.bf16.msra.mxu0 %v1219
    %2043 = vmatprep.subr.bf16.mxu0 %v1224
    %2044 = vmatpush1.bf16.msra.mxu0 %v1223
    %2045 = vmatprep.subr.bf16.mxu0 %v1228
    %2046 = vmatpush1.bf16.msra.mxu0 %v1227
    %2047 = vmatprep.subr.bf16.mxu0 0
    %2048 = vmatpush1.bf16.msra.mxu0 0
    %2049 = vmatprep.subr.bf16.mxu0 0
    %2050 = vmatpush1.bf16.msra.mxu0 0
    %2051 = vmatprep.subr.bf16.mxu0 0
    %2052 = vmatpush1.bf16.msra.mxu0 0
    %2053 = vmatprep.subr.bf16.mxu0 0
    %2054 = vmatpush1.bf16.msra.mxu0 0
    %2055 = vmatprep.subr.bf16.mxu0 0
    %2056 = vmatpush1.bf16.msra.mxu0 0
    %2057 = vmatprep.subr.bf16.mxu0 0
    %2058 = vmatpush1.bf16.msra.mxu0 0
    %2059 = vmatprep.subr.bf16.mxu0 0
    %2060 = vmatpush1.bf16.msra.mxu0 0
    %2061 = vmatprep.subr.bf16.mxu0 0
    %2062 = vmatpush1.bf16.msra.mxu0 0
    %2063 = vmatprep.mubr.bf16.mxu0 0
    %2064 = vmatmul.mubr.bf16.gmra.mrb[0].mxu0 %v2030
    %v2065 = vpop.f32.mrb[0].mxu0
    %v2066 = vadd.f32 0.0, %v2065
    %v2067 = vpop.f32.mrb[0].mxu0
    %v2068 = vadd.f32 0.0, %v2067
    %v2069 = vpop.f32.mrb[0].mxu0
    %v2070 = vpop.f32.mrb[0].mxu0
    %2071 = vdwg.mxu0
    %2072 = vmatprep.subr.bf16.mxu0 %v1202
    %2073 = vmatpush1.bf16.msra.mxu0 %v1201
    %2074 = vmatprep.subr.bf16.mxu0 %v1206
    %2075 = vmatpush1.bf16.msra.mxu0 %v1205
    %2076 = vmatprep.subr.bf16.mxu0 %v1210
    %2077 = vmatpush1.bf16.msra.mxu0 %v1209
    %2078 = vmatprep.subr.bf16.mxu0 %v1214
    %2079 = vmatpush1.bf16.msra.mxu0 %v1213
    %2080 = vmatprep.subr.bf16.mxu0 %v1218
    %2081 = vmatpush1.bf16.msra.mxu0 %v1217
    %2082 = vmatprep.subr.bf16.mxu0 %v1222
    %2083 = vmatpush1.bf16.msra.mxu0 %v1221
    %2084 = vmatprep.subr.bf16.mxu0 %v1226
    %2085 = vmatpush1.bf16.msra.mxu0 %v1225
    %2086 = vmatprep.subr.bf16.mxu0 %v1230
    %2087 = vmatpush1.bf16.msra.mxu0 %v1229
    %2088 = vmatprep.subr.bf16.mxu0 0
    %2089 = vmatpush1.bf16.msra.mxu0 0
    %2090 = vmatprep.subr.bf16.mxu0 0
    %2091 = vmatpush1.bf16.msra.mxu0 0
    %2092 = vmatprep.subr.bf16.mxu0 0
    %2093 = vmatpush1.bf16.msra.mxu0 0
    %2094 = vmatprep.subr.bf16.mxu0 0
    %2095 = vmatpush1.bf16.msra.mxu0 0
    %2096 = vmatprep.subr.bf16.mxu0 0
    %2097 = vmatpush1.bf16.msra.mxu0 0
    %2098 = vmatprep.subr.bf16.mxu0 0
    %2099 = vmatpush1.bf16.msra.mxu0 0
    %2100 = vmatprep.subr.bf16.mxu0 0
    %2101 = vmatpush1.bf16.msra.mxu0 0
    %2102 = vmatprep.subr.bf16.mxu0 0
    %2103 = vmatpush1.bf16.msra.mxu0 0
    %2104 = vmatprep.mubr.bf16.mxu0 0
    %2105 = vmatmul.mubr.bf16.gmra.mrb[0].mxu0 %v2030
    %v2106 = vpop.f32.mrb[0].mxu0
    %v2107 = vadd.f32 0.0, %v2106
    %v2108 = vpop.f32.mrb[0].mxu0
    %v2109 = vadd.f32 0.0, %v2108
    %v2110 = vpop.f32.mrb[0].mxu0
    %v2111 = vpop.f32.mrb[0].mxu0
    %2112 = vdwg.mxu0
    %2113 = vmatprep.subr.bf16.mxu0 %v1442
    %2114 = vmatpush1.bf16.msra.mxu0 %v1441
    %2115 = vmatprep.subr.bf16.mxu0 %v1446
    %2116 = vmatpush1.bf16.msra.mxu0 %v1445
    %2117 = vmatprep.subr.bf16.mxu0 %v1450
    %2118 = vmatpush1.bf16.msra.mxu0 %v1449
    %2119 = vmatprep.subr.bf16.mxu0 %v1454
    %2120 = vmatpush1.bf16.msra.mxu0 %v1453
    %2121 = vmatprep.subr.bf16.mxu0 %v1458
    %2122 = vmatpush1.bf16.msra.mxu0 %v1457
    %2123 = vmatprep.subr.bf16.mxu0 %v1462
    %2124 = vmatpush1.bf16.msra.mxu0 %v1461
    %2125 = vmatprep.subr.bf16.mxu0 %v1466
    %2126 = vmatpush1.bf16.msra.mxu0 %v1465
    %2127 = vmatprep.subr.bf16.mxu0 %v1470
    %2128 = vmatpush1.bf16.msra.mxu0 %v1469
    %2129 = vmatprep.subr.bf16.mxu0 0
    %2130 = vmatpush1.bf16.msra.mxu0 0
    %2131 = vmatprep.subr.bf16.mxu0 0
    %2132 = vmatpush1.bf16.msra.mxu0 0
    %2133 = vmatprep.subr.bf16.mxu0 0
    %2134 = vmatpush1.bf16.msra.mxu0 0
    %2135 = vmatprep.subr.bf16.mxu0 0
    %2136 = vmatpush1.bf16.msra.mxu0 0
    %2137 = vmatprep.subr.bf16.mxu0 0
    %2138 = vmatpush1.bf16.msra.mxu0 0
    %2139 = vmatprep.subr.bf16.mxu0 0
    %2140 = vmatpush1.bf16.msra.mxu0 0
    %2141 = vmatprep.subr.bf16.mxu0 0
    %2142 = vmatpush1.bf16.msra.mxu0 0
    %2143 = vmatprep.subr.bf16.mxu0 0
    %2144 = vmatpush1.bf16.msra.mxu0 0
    %2145 = vmatprep.mubr.bf16.mxu0 0
    %2146 = vmatmul.mubr.bf16.gmra.mrb[0].mxu0 %v2029
    %v2147 = vpop.f32.mrb[0].mxu0
    %v2148 = vadd.f32 %v2066, %v2147
    %v2149 = vpop.f32.mrb[0].mxu0
    %v2150 = vadd.f32 %v2068, %v2149
    %v2151 = vpop.f32.mrb[0].mxu0
    %v2152 = vpop.f32.mrb[0].mxu0
    %2153 = vdwg.mxu0
    %2154 = vmatprep.subr.bf16.mxu0 %v1444
    %2155 = vmatpush1.bf16.msra.mxu0 %v1443
    %2156 = vmatprep.subr.bf16.mxu0 %v1448
    %2157 = vmatpush1.bf16.msra.mxu0 %v1447
    %2158 = vmatprep.subr.bf16.mxu0 %v1452
    %2159 = vmatpush1.bf16.msra.mxu0 %v1451
    %2160 = vmatprep.subr.bf16.mxu0 %v1456
    %2161 = vmatpush1.bf16.msra.mxu0 %v1455
    %2162 = vmatprep.subr.bf16.mxu0 %v1460
    %2163 = vmatpush1.bf16.msra.mxu0 %v1459
    %2164 = vmatprep.subr.bf16.mxu0 %v1464
    %2165 = vmatpush1.bf16.msra.mxu0 %v1463
    %2166 = vmatprep.subr.bf16.mxu0 %v1468
    %2167 = vmatpush1.bf16.msra.mxu0 %v1467
    %2168 = vmatprep.subr.bf16.mxu0 %v1472
    %2169 = vmatpush1.bf16.msra.mxu0 %v1471
    %2170 = vmatprep.subr.bf16.mxu0 0
    %2171 = vmatpush1.bf16.msra.mxu0 0
    %2172 = vmatprep.subr.bf16.mxu0 0
    %2173 = vmatpush1.bf16.msra.mxu0 0
    %2174 = vmatprep.subr.bf16.mxu0 0
    %2175 = vmatpush1.bf16.msra.mxu0 0
    %2176 = vmatprep.subr.bf16.mxu0 0
    %2177 = vmatpush1.bf16.msra.mxu0 0
    %2178 = vmatprep.subr.bf16.mxu0 0
    %2179 = vmatpush1.bf16.msra.mxu0 0
    %2180 = vmatprep.subr.bf16.mxu0 0
    %2181 = vmatpush1.bf16.msra.mxu0 0
    %2182 = vmatprep.subr.bf16.mxu0 0
    %2183 = vmatpush1.bf16.msra.mxu0 0
    %2184 = vmatprep.subr.bf16.mxu0 0
    %2185 = vmatpush1.bf16.msra.mxu0 0
    %2186 = vmatprep.mubr.bf16.mxu0 0
    %2187 = vmatmul.mubr.bf16.gmra.mrb[0].mxu0 %v2029
    %v2188 = vpop.f32.mrb[0].mxu0
    %v2189 = vadd.f32 %v2107, %v2188
    %v2190 = vpop.f32.mrb[0].mxu0
    %v2191 = vadd.f32 %v2109, %v2190
    %v2192 = vpop.f32.mrb[0].mxu0
    %v2193 = vpop.f32.mrb[0].mxu0
    %2194 = vdwg.mxu0
    %v2195 = vadd.f32 %v2148, %v820
    %v2196 = vadd.f32 %v2150, %v821
    %v2197 = vadd.f32 %v2189, %v822
    %v2198 = vadd.f32 %v2191, %v823
    %v2199 = vxor.u32 %v2195, 2147483648
    %v2200 = vxor.u32 %v2196, 2147483648
    %v2201 = vxor.u32 %v2197, 2147483648
    %v2202 = vmul.f32 %v2199, 1.442695
    %v2203 = vpow.pop %v2202
    %v2204 = vmul.f32 %v2200, 1.442695
    %v2205 = vpow.pop %v2204
    %v2206 = vmul.f32 %v2201, 1.442695
    %v2207 = vpow.pop %v2206
    %v2208 = vadd.f32 %v2203, 1.0
    %v2209 = vadd.f32 %v2205, 1.0
    %v2210 = vadd.f32 %v2207, 1.0
    %v2211 = vrcp.pop %v2208
    %v2212 = vmul.f32 1.0, %v2211
    %v2213 = vrcp.pop %v2209
    %v2214 = vmul.f32 1.0, %v2213
    %v2215 = vrcp.pop %v2210
    %v2216 = vmul.f32 1.0, %v2215
    %v2217 = vtanh.pop %v2198
    %v2218 = vmul.f32 %v2214, %v1916
    %v2219 = vmul.f32 %v2212, %v2217
    %v2220 = vadd.f32 %v2218, %v2219
    %v2221 = vtanh.pop %v2220
    %v2222 = vmul.f32 %v2216, %v2221
    %2223 = vmatprep.subr.bf16.mxu0 %v928
    %2224 = vmatpush1.bf16.msra.mxu0 %v927
    %2225 = vmatprep.subr.bf16.mxu0 %v932
    %2226 = vmatpush1.bf16.msra.mxu0 %v931
    %2227 = vmatprep.subr.bf16.mxu0 %v936
    %2228 = vmatpush1.bf16.msra.mxu0 %v935
    %2229 = vmatprep.subr.bf16.mxu0 %v940
    %2230 = vmatpush1.bf16.msra.mxu0 %v939
    %2231 = vmatprep.subr.bf16.mxu0 %v944
    %2232 = vmatpush1.bf16.msra.mxu0 %v943
    %2233 = vmatprep.subr.bf16.mxu0 %v948
    %2234 = vmatpush1.bf16.msra.mxu0 %v947
    %2235 = vmatprep.subr.bf16.mxu0 %v952
    %2236 = vmatpush1.bf16.msra.mxu0 %v951
    %2237 = vmatprep.subr.bf16.mxu0 %v956
    %2238 = vmatpush1.bf16.msra.mxu0 %v955
    %2239 = vmatprep.subr.bf16.mxu0 0
    %2240 = vmatpush1.bf16.msra.mxu0 0
    %2241 = vmatprep.subr.bf16.mxu0 0
    %2242 = vmatpush1.bf16.msra.mxu0 0
    %2243 = vmatprep.subr.bf16.mxu0 0
    %2244 = vmatpush1.bf16.msra.mxu0 0
    %2245 = vmatprep.subr.bf16.mxu0 0
    %2246 = vmatpush1.bf16.msra.mxu0 0
    %2247 = vmatprep.subr.bf16.mxu0 0
    %2248 = vmatpush1.bf16.msra.mxu0 0
    %2249 = vmatprep.subr.bf16.mxu0 0
    %2250 = vmatpush1.bf16.msra.mxu0 0
    %2251 = vmatprep.subr.bf16.mxu0 0
    %2252 = vmatpush1.bf16.msra.mxu0 0
    %2253 = vmatprep.subr.bf16.mxu0 0
    %2254 = vmatpush1.bf16.msra.mxu0 0
    %2255 = vmatprep.mubr.bf16.mxu0 0
    %2256 = vmatmul.mubr.bf16.gmra.mrb[0].mxu0 %v2029
    %v2257 = vpop.f32.mrb[0].mxu0
    %v2258 = vadd.f32 0.0, %v2257
    %v2259 = vpop.f32.mrb[0].mxu0
    %v2260 = vadd.f32 0.0, %v2259
    %v2261 = vpop.f32.mrb[0].mxu0
    %v2262 = vpop.f32.mrb[0].mxu0
    %2263 = vdwg.mxu0
    %2264 = vmatprep.subr.bf16.mxu0 %v930
    %2265 = vmatpush1.bf16.msra.mxu0 %v929
    %2266 = vmatprep.subr.bf16.mxu0 %v934
    %2267 = vmatpush1.bf16.msra.mxu0 %v933
    %2268 = vmatprep.subr.bf16.mxu0 %v938
    %2269 = vmatpush1.bf16.msra.mxu0 %v937
    %2270 = vmatprep.subr.bf16.mxu0 %v942
    %2271 = vmatpush1.bf16.msra.mxu0 %v941
    %2272 = vmatprep.subr.bf16.mxu0 %v946
    %2273 = vmatpush1.bf16.msra.mxu0 %v945
    %2274 = vmatprep.subr.bf16.mxu0 %v950
    %2275 = vmatpush1.bf16.msra.mxu0 %v949
    %2276 = vmatprep.subr.bf16.mxu0 %v954
    %2277 = vmatpush1.bf16.msra.mxu0 %v953
    %2278 = vmatprep.subr.bf16.mxu0 %v958
    %2279 = vmatpush1.bf16.msra.mxu0 %v957
    %2280 = vmatprep.subr.bf16.mxu0 0
    %2281 = vmatpush1.bf16.msra.mxu0 0
    %2282 = vmatprep.subr.bf16.mxu0 0
    %2283 = vmatpush1.bf16.msra.mxu0 0
    %2284 = vmatprep.subr.bf16.mxu0 0
    %2285 = vmatpush1.bf16.msra.mxu0 0
    %2286 = vmatprep.subr.bf16.mxu0 0
    %2287 = vmatpush1.bf16.msra.mxu0 0
    %2288 = vmatprep.subr.bf16.mxu0 0
    %2289 = vmatpush1.bf16.msra.mxu0 0
    %2290 = vmatprep.subr.bf16.mxu0 0
    %2291 = vmatpush1.bf16.msra.mxu0 0
    %2292 = vmatprep.subr.bf16.mxu0 0
    %2293 = vmatpush1.bf16.msra.mxu0 0
    %2294 = vmatprep.subr.bf16.mxu0 0
    %2295 = vmatpush1.bf16.msra.mxu0 0
    %2296 = vmatprep.mubr.bf16.mxu0 0
    %2297 = vmatmul.mubr.bf16.gmra.mrb[0].mxu0 %v2029
    %v2298 = vpop.f32.mrb[0].mxu0
    %v2299 = vadd.f32 0.0, %v2298
    %v2300 = vpop.f32.mrb[0].mxu0
    %v2301 = vadd.f32 0.0, %v2300
    %v2302 = vpop.f32.mrb[0].mxu0
    %v2303 = vpop.f32.mrb[0].mxu0
    %2304 = vdwg.mxu0
    %v2305 = vadd.f32 %v627, %v2258
    %v2306 = vadd.f32 %v629, %v2260
    %v2307 = vadd.f32 %v700, %v2299
    %v2308 = vadd.f32 %v702, %v2301
    %v2309 = vxor.u32 %v2305, 2147483648
    %v2310 = vxor.u32 %v2306, 2147483648
    %v2311 = vxor.u32 %v2307, 2147483648
    %v2312 = vmul.f32 %v2309, 1.442695
    %v2313 = vpow.pop %v2312
    %v2314 = vmul.f32 %v2310, 1.442695
    %v2315 = vpow.pop %v2314
    %v2316 = vmul.f32 %v2311, 1.442695
    %v2317 = vpow.pop %v2316
    %v2318 = vadd.f32 %v2313, 1.0
    %v2319 = vadd.f32 %v2315, 1.0
    %v2320 = vadd.f32 %v2317, 1.0
    %v2321 = vrcp.pop %v2318
    %v2322 = vmul.f32 1.0, %v2321
    %v2323 = vrcp.pop %v2319
    %v2324 = vmul.f32 1.0, %v2323
    %v2325 = vrcp.pop %v2320
    %v2326 = vmul.f32 1.0, %v2325
    %v2327 = vtanh.pop %v2308
    %v2328 = vmul.f32 %v2324, %v2026
    %v2329 = vmul.f32 %v2322, %v2327
    %v2330 = vadd.f32 %v2328, %v2329
    %v2331 = vtanh.pop %v2330
    %v2332 = vmul.f32 %v2326, %v2331
    %v2333 = vpack.c.bf16 %v2332, %v2332
    %v2334 = vpack.c.bf16 %v2222, %v2222
    %2335 = vmatprep.subr.bf16.mxu0 %v1200
    %2336 = vmatpush1.bf16.msra.mxu0 %v1199
    %2337 = vmatprep.subr.bf16.mxu0 %v1204
    %2338 = vmatpush1.bf16.msra.mxu0 %v1203
    %2339 = vmatprep.subr.bf16.mxu0 %v1208
    %2340 = vmatpush1.bf16.msra.mxu0 %v1207
    %2341 = vmatprep.subr.bf16.mxu0 %v1212
    %2342 = vmatpush1.bf16.msra.mxu0 %v1211
    %2343 = vmatprep.subr.bf16.mxu0 %v1216
    %2344 = vmatpush1.bf16.msra.mxu0 %v1215
    %2345 = vmatprep.subr.bf16.mxu0 %v1220
    %2346 = vmatpush1.bf16.msra.mxu0 %v1219
    %2347 = vmatprep.subr.bf16.mxu0 %v1224
    %2348 = vmatpush1.bf16.msra.mxu0 %v1223
    %2349 = vmatprep.subr.bf16.mxu0 %v1228
    %2350 = vmatpush1.bf16.msra.mxu0 %v1227
    %2351 = vmatprep.subr.bf16.mxu0 0
    %2352 = vmatpush1.bf16.msra.mxu0 0
    %2353 = vmatprep.subr.bf16.mxu0 0
    %2354 = vmatpush1.bf16.msra.mxu0 0
    %2355 = vmatprep.subr.bf16.mxu0 0
    %2356 = vmatpush1.bf16.msra.mxu0 0
    %2357 = vmatprep.subr.bf16.mxu0 0
    %2358 = vmatpush1.bf16.msra.mxu0 0
    %2359 = vmatprep.subr.bf16.mxu0 0
    %2360 = vmatpush1.bf16.msra.mxu0 0
    %2361 = vmatprep.subr.bf16.mxu0 0
    %2362 = vmatpush1.bf16.msra.mxu0 0
    %2363 = vmatprep.subr.bf16.mxu0 0
    %2364 = vmatpush1.bf16.msra.mxu0 0
    %2365 = vmatprep.subr.bf16.mxu0 0
    %2366 = vmatpush1.bf16.msra.mxu0 0
    %2367 = vmatprep.mubr.bf16.mxu0 0
    %2368 = vmatmul.mubr.bf16.gmra.mrb[0].mxu0 %v2334
    %v2369 = vpop.f32.mrb[0].mxu0
    %v2370 = vadd.f32 0.0, %v2369
    %v2371 = vpop.f32.mrb[0].mxu0
    %v2372 = vadd.f32 0.0, %v2371
    %v2373 = vpop.f32.mrb[0].mxu0
    %v2374 = vpop.f32.mrb[0].mxu0
    %2375 = vdwg.mxu0
    %2376 = vmatprep.subr.bf16.mxu0 %v1202
    %2377 = vmatpush1.bf16.msra.mxu0 %v1201
    %2378 = vmatprep.subr.bf16.mxu0 %v1206
    %2379 = vmatpush1.bf16.msra.mxu0 %v1205
    %2380 = vmatprep.subr.bf16.mxu0 %v1210
    %2381 = vmatpush1.bf16.msra.mxu0 %v1209
    %2382 = vmatprep.subr.bf16.mxu0 %v1214
    %2383 = vmatpush1.bf16.msra.mxu0 %v1213
    %2384 = vmatprep.subr.bf16.mxu0 %v1218
    %2385 = vmatpush1.bf16.msra.mxu0 %v1217
    %2386 = vmatprep.subr.bf16.mxu0 %v1222
    %2387 = vmatpush1.bf16.msra.mxu0 %v1221
    %2388 = vmatprep.subr.bf16.mxu0 %v1226
    %2389 = vmatpush1.bf16.msra.mxu0 %v1225
    %2390 = vmatprep.subr.bf16.mxu0 %v1230
    %2391 = vmatpush1.bf16.msra.mxu0 %v1229
    %2392 = vmatprep.subr.bf16.mxu0 0
    %2393 = vmatpush1.bf16.msra.mxu0 0
    %2394 = vmatprep.subr.bf16.mxu0 0
    %2395 = vmatpush1.bf16.msra.mxu0 0
    %2396 = vmatprep.subr.bf16.mxu0 0
    %2397 = vmatpush1.bf16.msra.mxu0 0
    %2398 = vmatprep.subr.bf16.mxu0 0
    %2399 = vmatpush1.bf16.msra.mxu0 0
    %2400 = vmatprep.subr.bf16.mxu0 0
    %2401 = vmatpush1.bf16.msra.mxu0 0
    %2402 = vmatprep.subr.bf16.mxu0 0
    %2403 = vmatpush1.bf16.msra.mxu0 0
    %2404 = vmatprep.subr.bf16.mxu0 0
    %2405 = vmatpush1.bf16.msra.mxu0 0
    %2406 = vmatprep.subr.bf16.mxu0 0
    %2407 = vmatpush1.bf16.msra.mxu0 0
    %2408 = vmatprep.mubr.bf16.mxu0 0
    %2409 = vmatmul.mubr.bf16.gmra.mrb[0].mxu0 %v2334
    %v2410 = vpop.f32.mrb[0].mxu0
    %v2411 = vadd.f32 0.0, %v2410
    %v2412 = vpop.f32.mrb[0].mxu0
    %v2413 = vadd.f32 0.0, %v2412
    %v2414 = vpop.f32.mrb[0].mxu0
    %v2415 = vpop.f32.mrb[0].mxu0
    %2416 = vdwg.mxu0
    %2417 = vmatprep.subr.bf16.mxu0 %v1442
    %2418 = vmatpush1.bf16.msra.mxu0 %v1441
    %2419 = vmatprep.subr.bf16.mxu0 %v1446
    %2420 = vmatpush1.bf16.msra.mxu0 %v1445
    %2421 = vmatprep.subr.bf16.mxu0 %v1450
    %2422 = vmatpush1.bf16.msra.mxu0 %v1449
    %2423 = vmatprep.subr.bf16.mxu0 %v1454
    %2424 = vmatpush1.bf16.msra.mxu0 %v1453
    %2425 = vmatprep.subr.bf16.mxu0 %v1458
    %2426 = vmatpush1.bf16.msra.mxu0 %v1457
    %2427 = vmatprep.subr.bf16.mxu0 %v1462
    %2428 = vmatpush1.bf16.msra.mxu0 %v1461
    %2429 = vmatprep.subr.bf16.mxu0 %v1466
    %2430 = vmatpush1.bf16.msra.mxu0 %v1465
    %2431 = vmatprep.subr.bf16.mxu0 %v1470
    %2432 = vmatpush1.bf16.msra.mxu0 %v1469
    %2433 = vmatprep.subr.bf16.mxu0 0
    %2434 = vmatpush1.bf16.msra.mxu0 0
    %2435 = vmatprep.subr.bf16.mxu0 0
    %2436 = vmatpush1.bf16.msra.mxu0 0
    %2437 = vmatprep.subr.bf16.mxu0 0
    %2438 = vmatpush1.bf16.msra.mxu0 0
    %2439 = vmatprep.subr.bf16.mxu0 0
    %2440 = vmatpush1.bf16.msra.mxu0 0
    %2441 = vmatprep.subr.bf16.mxu0 0
    %2442 = vmatpush1.bf16.msra.mxu0 0
    %2443 = vmatprep.subr.bf16.mxu0 0
    %2444 = vmatpush1.bf16.msra.mxu0 0
    %2445 = vmatprep.subr.bf16.mxu0 0
    %2446 = vmatpush1.bf16.msra.mxu0 0
    %2447 = vmatprep.subr.bf16.mxu0 0
    %2448 = vmatpush1.bf16.msra.mxu0 0
    %2449 = vmatprep.mubr.bf16.mxu0 0
    %2450 = vmatmul.mubr.bf16.gmra.mrb[0].mxu0 %v2333
    %v2451 = vpop.f32.mrb[0].mxu0
    %v2452 = vadd.f32 %v2370, %v2451
    %v2453 = vpop.f32.mrb[0].mxu0
    %v2454 = vadd.f32 %v2372, %v2453
    %v2455 = vpop.f32.mrb[0].mxu0
    %v2456 = vpop.f32.mrb[0].mxu0
    %2457 = vdwg.mxu0
    %2458 = vmatprep.subr.bf16.mxu0 %v1444
    %2459 = vmatpush1.bf16.msra.mxu0 %v1443
    %2460 = vmatprep.subr.bf16.mxu0 %v1448
    %2461 = vmatpush1.bf16.msra.mxu0 %v1447
    %2462 = vmatprep.subr.bf16.mxu0 %v1452
    %2463 = vmatpush1.bf16.msra.mxu0 %v1451
    %2464 = vmatprep.subr.bf16.mxu0 %v1456
    %2465 = vmatpush1.bf16.msra.mxu0 %v1455
    %2466 = vmatprep.subr.bf16.mxu0 %v1460
    %2467 = vmatpush1.bf16.msra.mxu0 %v1459
    %2468 = vmatprep.subr.bf16.mxu0 %v1464
    %2469 = vmatpush1.bf16.msra.mxu0 %v1463
    %2470 = vmatprep.subr.bf16.mxu0 %v1468
    %2471 = vmatpush1.bf16.msra.mxu0 %v1467
    %2472 = vmatprep.subr.bf16.mxu0 %v1472
    %2473 = vmatpush1.bf16.msra.mxu0 %v1471
    %2474 = vmatprep.subr.bf16.mxu0 0
    %2475 = vmatpush1.bf16.msra.mxu0 0
    %2476 = vmatprep.subr.bf16.mxu0 0
    %2477 = vmatpush1.bf16.msra.mxu0 0
    %2478 = vmatprep.subr.bf16.mxu0 0
    %2479 = vmatpush1.bf16.msra.mxu0 0
    %2480 = vmatprep.subr.bf16.mxu0 0
    %2481 = vmatpush1.bf16.msra.mxu0 0
    %2482 = vmatprep.subr.bf16.mxu0 0
    %2483 = vmatpush1.bf16.msra.mxu0 0
    %2484 = vmatprep.subr.bf16.mxu0 0
    %2485 = vmatpush1.bf16.msra.mxu0 0
    %2486 = vmatprep.subr.bf16.mxu0 0
    %2487 = vmatpush1.bf16.msra.mxu0 0
    %2488 = vmatprep.subr.bf16.mxu0 0
    %2489 = vmatpush1.bf16.msra.mxu0 0
    %2490 = vmatprep.mubr.bf16.mxu0 0
    %2491 = vmatmul.mubr.bf16.gmra.mrb[0].mxu0 %v2333
    %v2492 = vpop.f32.mrb[0].mxu0
    %v2493 = vadd.f32 %v2411, %v2492
    %v2494 = vpop.f32.mrb[0].mxu0
    %v2495 = vadd.f32 %v2413, %v2494
    %v2496 = vpop.f32.mrb[0].mxu0
    %v2497 = vpop.f32.mrb[0].mxu0
    %2498 = vdwg.mxu0
    %v2499 = vadd.f32 %v2452, %v820
    %v2500 = vadd.f32 %v2454, %v821
    %v2501 = vadd.f32 %v2493, %v822
    %v2502 = vadd.f32 %v2495, %v823
    %v2503 = vxor.u32 %v2499, 2147483648
    %v2504 = vxor.u32 %v2500, 2147483648
    %v2505 = vxor.u32 %v2501, 2147483648
    %v2506 = vmul.f32 %v2503, 1.442695
    %v2507 = vpow.pop %v2506
    %v2508 = vmul.f32 %v2504, 1.442695
    %v2509 = vpow.pop %v2508
    %v2510 = vmul.f32 %v2505, 1.442695
    %v2511 = vpow.pop %v2510
    %v2512 = vadd.f32 %v2507, 1.0
    %v2513 = vadd.f32 %v2509, 1.0
    %v2514 = vadd.f32 %v2511, 1.0
    %v2515 = vrcp.pop %v2512
    %v2516 = vmul.f32 1.0, %v2515
    %v2517 = vrcp.pop %v2513
    %v2518 = vmul.f32 1.0, %v2517
    %v2519 = vrcp.pop %v2514
    %v2520 = vmul.f32 1.0, %v2519
    %v2521 = vtanh.pop %v2502
    %v2522 = vmul.f32 %v2518, %v2220
    %v2523 = vmul.f32 %v2516, %v2521
    %v2524 = vadd.f32 %v2522, %v2523
    %v2525 = vtanh.pop %v2524
    %v2526 = vmul.f32 %v2520, %v2525
    %2527 = vmatprep.subr.bf16.mxu0 %v928
    %2528 = vmatpush1.bf16.msra.mxu0 %v927
    %2529 = vmatprep.subr.bf16.mxu0 %v932
    %2530 = vmatpush1.bf16.msra.mxu0 %v931
    %2531 = vmatprep.subr.bf16.mxu0 %v936
    %2532 = vmatpush1.bf16.msra.mxu0 %v935
    %2533 = vmatprep.subr.bf16.mxu0 %v940
    %2534 = vmatpush1.bf16.msra.mxu0 %v939
    %2535 = vmatprep.subr.bf16.mxu0 %v944
    %2536 = vmatpush1.bf16.msra.mxu0 %v943
    %2537 = vmatprep.subr.bf16.mxu0 %v948
    %2538 = vmatpush1.bf16.msra.mxu0 %v947
    %2539 = vmatprep.subr.bf16.mxu0 %v952
    %2540 = vmatpush1.bf16.msra.mxu0 %v951
    %2541 = vmatprep.subr.bf16.mxu0 %v956
    %2542 = vmatpush1.bf16.msra.mxu0 %v955
    %2543 = vmatprep.subr.bf16.mxu0 0
    %2544 = vmatpush1.bf16.msra.mxu0 0
    %2545 = vmatprep.subr.bf16.mxu0 0
    %2546 = vmatpush1.bf16.msra.mxu0 0
    %2547 = vmatprep.subr.bf16.mxu0 0
    %2548 = vmatpush1.bf16.msra.mxu0 0
    %2549 = vmatprep.subr.bf16.mxu0 0
    %2550 = vmatpush1.bf16.msra.mxu0 0
    %2551 = vmatprep.subr.bf16.mxu0 0
    %2552 = vmatpush1.bf16.msra.mxu0 0
    %2553 = vmatprep.subr.bf16.mxu0 0
    %2554 = vmatpush1.bf16.msra.mxu0 0
    %2555 = vmatprep.subr.bf16.mxu0 0
    %2556 = vmatpush1.bf16.msra.mxu0 0
    %2557 = vmatprep.subr.bf16.mxu0 0
    %2558 = vmatpush1.bf16.msra.mxu0 0
    %2559 = vmatprep.mubr.bf16.mxu0 0
    %2560 = vmatmul.mubr.bf16.gmra.mrb[0].mxu0 %v2333
    %v2561 = vpop.f32.mrb[0].mxu0
    %v2562 = vadd.f32 0.0, %v2561
    %v2563 = vpop.f32.mrb[0].mxu0
    %v2564 = vadd.f32 0.0, %v2563
    %v2565 = vpop.f32.mrb[0].mxu0
    %v2566 = vpop.f32.mrb[0].mxu0
    %2567 = vdwg.mxu0
    %2568 = vmatprep.subr.bf16.mxu0 %v930
    %2569 = vmatpush1.bf16.msra.mxu0 %v929
    %2570 = vmatprep.subr.bf16.mxu0 %v934
    %2571 = vmatpush1.bf16.msra.mxu0 %v933
    %2572 = vmatprep.subr.bf16.mxu0 %v938
    %2573 = vmatpush1.bf16.msra.mxu0 %v937
    %2574 = vmatprep.subr.bf16.mxu0 %v942
    %2575 = vmatpush1.bf16.msra.mxu0 %v941
    %2576 = vmatprep.subr.bf16.mxu0 %v946
    %2577 = vmatpush1.bf16.msra.mxu0 %v945
    %2578 = vmatprep.subr.bf16.mxu0 %v950
    %2579 = vmatpush1.bf16.msra.mxu0 %v949
    %2580 = vmatprep.subr.bf16.mxu0 %v954
    %2581 = vmatpush1.bf16.msra.mxu0 %v953
    %2582 = vmatprep.subr.bf16.mxu0 %v958
    %2583 = vmatpush1.bf16.msra.mxu0 %v957
    %2584 = vmatprep.subr.bf16.mxu0 0
    %2585 = vmatpush1.bf16.msra.mxu0 0
    %2586 = vmatprep.subr.bf16.mxu0 0
    %2587 = vmatpush1.bf16.msra.mxu0 0
    %2588 = vmatprep.subr.bf16.mxu0 0
    %2589 = vmatpush1.bf16.msra.mxu0 0
    %2590 = vmatprep.subr.bf16.mxu0 0
    %2591 = vmatpush1.bf16.msra.mxu0 0
    %2592 = vmatprep.subr.bf16.mxu0 0
    %2593 = vmatpush1.bf16.msra.mxu0 0
    %2594 = vmatprep.subr.bf16.mxu0 0
    %2595 = vmatpush1.bf16.msra.mxu0 0
    %2596 = vmatprep.subr.bf16.mxu0 0
    %2597 = vmatpush1.bf16.msra.mxu0 0
    %2598 = vmatprep.subr.bf16.mxu0 0
    %2599 = vmatpush1.bf16.msra.mxu0 0
    %2600 = vmatprep.mubr.bf16.mxu0 0
    %2601 = vmatmul.mubr.bf16.gmra.mrb[0].mxu0 %v2333
    %v2602 = vpop.f32.mrb[0].mxu0
    %v2603 = vadd.f32 0.0, %v2602
    %v2604 = vpop.f32.mrb[0].mxu0
    %v2605 = vadd.f32 0.0, %v2604
    %v2606 = vpop.f32.mrb[0].mxu0
    %v2607 = vpop.f32.mrb[0].mxu0
    %2608 = vdwg.mxu0
    %v2609 = vadd.f32 %v633, %v2562
    %v2610 = vadd.f32 %v635, %v2564
    %v2611 = vadd.f32 %v706, %v2603
    %v2612 = vadd.f32 %v708, %v2605
    %v2613 = vxor.u32 %v2609, 2147483648
    %v2614 = vxor.u32 %v2610, 2147483648
    %v2615 = vxor.u32 %v2611, 2147483648
    %v2616 = vmul.f32 %v2613, 1.442695
    %v2617 = vpow.pop %v2616
    %v2618 = vmul.f32 %v2614, 1.442695
    %v2619 = vpow.pop %v2618
    %v2620 = vmul.f32 %v2615, 1.442695
    %v2621 = vpow.pop %v2620
    %v2622 = vadd.f32 %v2617, 1.0
    %v2623 = vadd.f32 %v2619, 1.0
    %v2624 = vadd.f32 %v2621, 1.0
    %v2625 = vrcp.pop %v2622
    %v2626 = vmul.f32 1.0, %v2625
    %v2627 = vrcp.pop %v2623
    %v2628 = vmul.f32 1.0, %v2627
    %v2629 = vrcp.pop %v2624
    %v2630 = vmul.f32 1.0, %v2629
    %v2631 = vtanh.pop %v2612
    %v2632 = vmul.f32 %v2628, %v2330
    %v2633 = vmul.f32 %v2626, %v2631
    %v2634 = vadd.f32 %v2632, %v2633
    %v2635 = vtanh.pop %v2634
    %v2636 = vmul.f32 %v2630, %v2635
    %v2637 = vpack.c.bf16 %v2636, %v2636
    %v2638 = vpack.c.bf16 %v2526, %v2526
    %2639 = vmatprep.subr.bf16.mxu0 %v1200
    %2640 = vmatpush1.bf16.msra.mxu0 %v1199
    %2641 = vmatprep.subr.bf16.mxu0 %v1204
    %2642 = vmatpush1.bf16.msra.mxu0 %v1203
    %2643 = vmatprep.subr.bf16.mxu0 %v1208
    %2644 = vmatpush1.bf16.msra.mxu0 %v1207
    %2645 = vmatprep.subr.bf16.mxu0 %v1212
    %2646 = vmatpush1.bf16.msra.mxu0 %v1211
    %2647 = vmatprep.subr.bf16.mxu0 %v1216
    %2648 = vmatpush1.bf16.msra.mxu0 %v1215
    %2649 = vmatprep.subr.bf16.mxu0 %v1220
    %2650 = vmatpush1.bf16.msra.mxu0 %v1219
    %2651 = vmatprep.subr.bf16.mxu0 %v1224
    %2652 = vmatpush1.bf16.msra.mxu0 %v1223
    %2653 = vmatprep.subr.bf16.mxu0 %v1228
    %2654 = vmatpush1.bf16.msra.mxu0 %v1227
    %2655 = vmatprep.subr.bf16.mxu0 0
    %2656 = vmatpush1.bf16.msra.mxu0 0
    %2657 = vmatprep.subr.bf16.mxu0 0
    %2658 = vmatpush1.bf16.msra.mxu0 0
    %2659 = vmatprep.subr.bf16.mxu0 0
    %2660 = vmatpush1.bf16.msra.mxu0 0
    %2661 = vmatprep.subr.bf16.mxu0 0
    %2662 = vmatpush1.bf16.msra.mxu0 0
    %2663 = vmatprep.subr.bf16.mxu0 0
    %2664 = vmatpush1.bf16.msra.mxu0 0
    %2665 = vmatprep.subr.bf16.mxu0 0
    %2666 = vmatpush1.bf16.msra.mxu0 0
    %2667 = vmatprep.subr.bf16.mxu0 0
    %2668 = vmatpush1.bf16.msra.mxu0 0
    %2669 = vmatprep.subr.bf16.mxu0 0
    %2670 = vmatpush1.bf16.msra.mxu0 0
    %2671 = vmatprep.mubr.bf16.mxu0 0
    %2672 = vmatmul.mubr.bf16.gmra.mrb[0].mxu0 %v2638
    %v2673 = vpop.f32.mrb[0].mxu0
    %v2674 = vadd.f32 0.0, %v2673
    %v2675 = vpop.f32.mrb[0].mxu0
    %v2676 = vadd.f32 0.0, %v2675
    %v2677 = vpop.f32.mrb[0].mxu0
    %v2678 = vpop.f32.mrb[0].mxu0
    %2679 = vdwg.mxu0
    %2680 = vmatprep.subr.bf16.mxu0 %v1202
    %2681 = vmatpush1.bf16.msra.mxu0 %v1201
    %2682 = vmatprep.subr.bf16.mxu0 %v1206
    %2683 = vmatpush1.bf16.msra.mxu0 %v1205
    %2684 = vmatprep.subr.bf16.mxu0 %v1210
    %2685 = vmatpush1.bf16.msra.mxu0 %v1209
    %2686 = vmatprep.subr.bf16.mxu0 %v1214
    %2687 = vmatpush1.bf16.msra.mxu0 %v1213
    %2688 = vmatprep.subr.bf16.mxu0 %v1218
    %2689 = vmatpush1.bf16.msra.mxu0 %v1217
    %2690 = vmatprep.subr.bf16.mxu0 %v1222
    %2691 = vmatpush1.bf16.msra.mxu0 %v1221
    %2692 = vmatprep.subr.bf16.mxu0 %v1226
    %2693 = vmatpush1.bf16.msra.mxu0 %v1225
    %2694 = vmatprep.subr.bf16.mxu0 %v1230
    %2695 = vmatpush1.bf16.msra.mxu0 %v1229
    %2696 = vmatprep.subr.bf16.mxu0 0
    %2697 = vmatpush1.bf16.msra.mxu0 0
    %2698 = vmatprep.subr.bf16.mxu0 0
    %2699 = vmatpush1.bf16.msra.mxu0 0
    %2700 = vmatprep.subr.bf16.mxu0 0
    %2701 = vmatpush1.bf16.msra.mxu0 0
    %2702 = vmatprep.subr.bf16.mxu0 0
    %2703 = vmatpush1.bf16.msra.mxu0 0
    %2704 = vmatprep.subr.bf16.mxu0 0
    %2705 = vmatpush1.bf16.msra.mxu0 0
    %2706 = vmatprep.subr.bf16.mxu0 0
    %2707 = vmatpush1.bf16.msra.mxu0 0
    %2708 = vmatprep.subr.bf16.mxu0 0
    %2709 = vmatpush1.bf16.msra.mxu0 0
    %2710 = vmatprep.subr.bf16.mxu0 0
    %2711 = vmatpush1.bf16.msra.mxu0 0
    %2712 = vmatprep.mubr.bf16.mxu0 0
    %2713 = vmatmul.mubr.bf16.gmra.mrb[0].mxu0 %v2638
    %v2714 = vpop.f32.mrb[0].mxu0
    %v2715 = vadd.f32 0.0, %v2714
    %v2716 = vpop.f32.mrb[0].mxu0
    %v2717 = vadd.f32 0.0, %v2716
    %v2718 = vpop.f32.mrb[0].mxu0
    %v2719 = vpop.f32.mrb[0].mxu0
    %2720 = vdwg.mxu0
    %2721 = vmatprep.subr.bf16.mxu0 %v1442
    %2722 = vmatpush1.bf16.msra.mxu0 %v1441
    %2723 = vmatprep.subr.bf16.mxu0 %v1446
    %2724 = vmatpush1.bf16.msra.mxu0 %v1445
    %2725 = vmatprep.subr.bf16.mxu0 %v1450
    %2726 = vmatpush1.bf16.msra.mxu0 %v1449
    %2727 = vmatprep.subr.bf16.mxu0 %v1454
    %2728 = vmatpush1.bf16.msra.mxu0 %v1453
    %2729 = vmatprep.subr.bf16.mxu0 %v1458
    %2730 = vmatpush1.bf16.msra.mxu0 %v1457
    %2731 = vmatprep.subr.bf16.mxu0 %v1462
    %2732 = vmatpush1.bf16.msra.mxu0 %v1461
    %2733 = vmatprep.subr.bf16.mxu0 %v1466
    %2734 = vmatpush1.bf16.msra.mxu0 %v1465
    %2735 = vmatprep.subr.bf16.mxu0 %v1470
    %2736 = vmatpush1.bf16.msra.mxu0 %v1469
    %2737 = vmatprep.subr.bf16.mxu0 0
    %2738 = vmatpush1.bf16.msra.mxu0 0
    %2739 = vmatprep.subr.bf16.mxu0 0
    %2740 = vmatpush1.bf16.msra.mxu0 0
    %2741 = vmatprep.subr.bf16.mxu0 0
    %2742 = vmatpush1.bf16.msra.mxu0 0
    %2743 = vmatprep.subr.bf16.mxu0 0
    %2744 = vmatpush1.bf16.msra.mxu0 0
    %2745 = vmatprep.subr.bf16.mxu0 0
    %2746 = vmatpush1.bf16.msra.mxu0 0
    %2747 = vmatprep.subr.bf16.mxu0 0
    %2748 = vmatpush1.bf16.msra.mxu0 0
    %2749 = vmatprep.subr.bf16.mxu0 0
    %2750 = vmatpush1.bf16.msra.mxu0 0
    %2751 = vmatprep.subr.bf16.mxu0 0
    %2752 = vmatpush1.bf16.msra.mxu0 0
    %2753 = vmatprep.mubr.bf16.mxu0 0
    %2754 = vmatmul.mubr.bf16.gmra.mrb[0].mxu0 %v2637
    %v2755 = vpop.f32.mrb[0].mxu0
    %v2756 = vadd.f32 %v2674, %v2755
    %v2757 = vpop.f32.mrb[0].mxu0
    %v2758 = vadd.f32 %v2676, %v2757
    %v2759 = vpop.f32.mrb[0].mxu0
    %v2760 = vpop.f32.mrb[0].mxu0
    %2761 = vdwg.mxu0
    %2762 = vmatprep.subr.bf16.mxu0 %v1444
    %2763 = vmatpush1.bf16.msra.mxu0 %v1443
    %2764 = vmatprep.subr.bf16.mxu0 %v1448
    %2765 = vmatpush1.bf16.msra.mxu0 %v1447
    %2766 = vmatprep.subr.bf16.mxu0 %v1452
    %2767 = vmatpush1.bf16.msra.mxu0 %v1451
    %2768 = vmatprep.subr.bf16.mxu0 %v1456
    %2769 = vmatpush1.bf16.msra.mxu0 %v1455
    %2770 = vmatprep.subr.bf16.mxu0 %v1460
    %2771 = vmatpush1.bf16.msra.mxu0 %v1459
    %2772 = vmatprep.subr.bf16.mxu0 %v1464
    %2773 = vmatpush1.bf16.msra.mxu0 %v1463
    %2774 = vmatprep.subr.bf16.mxu0 %v1468
    %2775 = vmatpush1.bf16.msra.mxu0 %v1467
    %2776 = vmatprep.subr.bf16.mxu0 %v1472
    %2777 = vmatpush1.bf16.msra.mxu0 %v1471
    %2778 = vmatprep.subr.bf16.mxu0 0
    %2779 = vmatpush1.bf16.msra.mxu0 0
    %2780 = vmatprep.subr.bf16.mxu0 0
    %2781 = vmatpush1.bf16.msra.mxu0 0
    %2782 = vmatprep.subr.bf16.mxu0 0
    %2783 = vmatpush1.bf16.msra.mxu0 0
    %2784 = vmatprep.subr.bf16.mxu0 0
    %2785 = vmatpush1.bf16.msra.mxu0 0
    %2786 = vmatprep.subr.bf16.mxu0 0
    %2787 = vmatpush1.bf16.msra.mxu0 0
    %2788 = vmatprep.subr.bf16.mxu0 0
    %2789 = vmatpush1.bf16.msra.mxu0 0
    %2790 = vmatprep.subr.bf16.mxu0 0
    %2791 = vmatpush1.bf16.msra.mxu0 0
    %2792 = vmatprep.subr.bf16.mxu0 0
    %2793 = vmatpush1.bf16.msra.mxu0 0
    %2794 = vmatprep.mubr.bf16.mxu0 0
    %2795 = vmatmul.mubr.bf16.gmra.mrb[0].mxu0 %v2637
    %v2796 = vpop.f32.mrb[0].mxu0
    %v2797 = vadd.f32 %v2715, %v2796
    %v2798 = vpop.f32.mrb[0].mxu0
    %v2799 = vadd.f32 %v2717, %v2798
    %v2800 = vpop.f32.mrb[0].mxu0
    %v2801 = vpop.f32.mrb[0].mxu0
    %2802 = vdwg.mxu0
    %v2803 = vadd.f32 %v2756, %v820
    %v2804 = vadd.f32 %v2758, %v821
    %v2805 = vadd.f32 %v2797, %v822
    %v2806 = vadd.f32 %v2799, %v823
    %v2807 = vxor.u32 %v2803, 2147483648
    %v2808 = vxor.u32 %v2804, 2147483648
    %v2809 = vxor.u32 %v2805, 2147483648
    %v2810 = vmul.f32 %v2807, 1.442695
    %v2811 = vpow.pop %v2810
    %v2812 = vmul.f32 %v2808, 1.442695
    %v2813 = vpow.pop %v2812
    %v2814 = vmul.f32 %v2809, 1.442695
    %v2815 = vpow.pop %v2814
    %v2816 = vadd.f32 %v2811, 1.0
    %v2817 = vadd.f32 %v2813, 1.0
    %v2818 = vadd.f32 %v2815, 1.0
    %v2819 = vrcp.pop %v2816
    %v2820 = vmul.f32 1.0, %v2819
    %v2821 = vrcp.pop %v2817
    %v2822 = vmul.f32 1.0, %v2821
    %v2823 = vrcp.pop %v2818
    %v2824 = vmul.f32 1.0, %v2823
    %v2825 = vtanh.pop %v2806
    %v2826 = vmul.f32 %v2822, %v2524
    %v2827 = vmul.f32 %v2820, %v2825
    %v2828 = vadd.f32 %v2826, %v2827
    %v2829 = vtanh.pop %v2828
    %v2830 = vmul.f32 %v2824, %v2829
    %2831 = vmatprep.subr.bf16.mxu0 %v928
    %2832 = vmatpush1.bf16.msra.mxu0 %v927
    %2833 = vmatprep.subr.bf16.mxu0 %v932
    %2834 = vmatpush1.bf16.msra.mxu0 %v931
    %2835 = vmatprep.subr.bf16.mxu0 %v936
    %2836 = vmatpush1.bf16.msra.mxu0 %v935
    %2837 = vmatprep.subr.bf16.mxu0 %v940
    %2838 = vmatpush1.bf16.msra.mxu0 %v939
    %2839 = vmatprep.subr.bf16.mxu0 %v944
    %2840 = vmatpush1.bf16.msra.mxu0 %v943
    %2841 = vmatprep.subr.bf16.mxu0 %v948
    %2842 = vmatpush1.bf16.msra.mxu0 %v947
    %2843 = vmatprep.subr.bf16.mxu0 %v952
    %2844 = vmatpush1.bf16.msra.mxu0 %v951
    %2845 = vmatprep.subr.bf16.mxu0 %v956
    %2846 = vmatpush1.bf16.msra.mxu0 %v955
    %2847 = vmatprep.subr.bf16.mxu0 0
    %2848 = vmatpush1.bf16.msra.mxu0 0
    %2849 = vmatprep.subr.bf16.mxu0 0
    %2850 = vmatpush1.bf16.msra.mxu0 0
    %2851 = vmatprep.subr.bf16.mxu0 0
    %2852 = vmatpush1.bf16.msra.mxu0 0
    %2853 = vmatprep.subr.bf16.mxu0 0
    %2854 = vmatpush1.bf16.msra.mxu0 0
    %2855 = vmatprep.subr.bf16.mxu0 0
    %2856 = vmatpush1.bf16.msra.mxu0 0
    %2857 = vmatprep.subr.bf16.mxu0 0
    %2858 = vmatpush1.bf16.msra.mxu0 0
    %2859 = vmatprep.subr.bf16.mxu0 0
    %2860 = vmatpush1.bf16.msra.mxu0 0
    %2861 = vmatprep.subr.bf16.mxu0 0
    %2862 = vmatpush1.bf16.msra.mxu0 0
    %2863 = vmatprep.mubr.bf16.mxu0 0
    %2864 = vmatmul.mubr.bf16.gmra.mrb[0].mxu0 %v2637
    %v2865 = vpop.f32.mrb[0].mxu0
    %v2866 = vadd.f32 0.0, %v2865
    %v2867 = vpop.f32.mrb[0].mxu0
    %v2868 = vadd.f32 0.0, %v2867
    %v2869 = vpop.f32.mrb[0].mxu0
    %v2870 = vpop.f32.mrb[0].mxu0
    %2871 = vdwg.mxu0
    %2872 = vmatprep.subr.bf16.mxu0 %v930
    %2873 = vmatpush1.bf16.msra.mxu0 %v929
    %2874 = vmatprep.subr.bf16.mxu0 %v934
    %2875 = vmatpush1.bf16.msra.mxu0 %v933
    %2876 = vmatprep.subr.bf16.mxu0 %v938
    %2877 = vmatpush1.bf16.msra.mxu0 %v937
    %2878 = vmatprep.subr.bf16.mxu0 %v942
    %2879 = vmatpush1.bf16.msra.mxu0 %v941
    %2880 = vmatprep.subr.bf16.mxu0 %v946
    %2881 = vmatpush1.bf16.msra.mxu0 %v945
    %2882 = vmatprep.subr.bf16.mxu0 %v950
    %2883 = vmatpush1.bf16.msra.mxu0 %v949
    %2884 = vmatprep.subr.bf16.mxu0 %v954
    %2885 = vmatpush1.bf16.msra.mxu0 %v953
    %2886 = vmatprep.subr.bf16.mxu0 %v958
    %2887 = vmatpush1.bf16.msra.mxu0 %v957
    %2888 = vmatprep.subr.bf16.mxu0 0
    %2889 = vmatpush1.bf16.msra.mxu0 0
    %2890 = vmatprep.subr.bf16.mxu0 0
    %2891 = vmatpush1.bf16.msra.mxu0 0
    %2892 = vmatprep.subr.bf16.mxu0 0
    %2893 = vmatpush1.bf16.msra.mxu0 0
    %2894 = vmatprep.subr.bf16.mxu0 0
    %2895 = vmatpush1.bf16.msra.mxu0 0
    %2896 = vmatprep.subr.bf16.mxu0 0
    %2897 = vmatpush1.bf16.msra.mxu0 0
    %2898 = vmatprep.subr.bf16.mxu0 0
    %2899 = vmatpush1.bf16.msra.mxu0 0
    %2900 = vmatprep.subr.bf16.mxu0 0
    %2901 = vmatpush1.bf16.msra.mxu0 0
    %2902 = vmatprep.subr.bf16.mxu0 0
    %2903 = vmatpush1.bf16.msra.mxu0 0
    %2904 = vmatprep.mubr.bf16.mxu0 0
    %2905 = vmatmul.mubr.bf16.gmra.mrb[0].mxu0 %v2637
    %v2906 = vpop.f32.mrb[0].mxu0
    %v2907 = vadd.f32 0.0, %v2906
    %v2908 = vpop.f32.mrb[0].mxu0
    %v2909 = vadd.f32 0.0, %v2908
    %v2910 = vpop.f32.mrb[0].mxu0
    %v2911 = vpop.f32.mrb[0].mxu0
    %2912 = vdwg.mxu0
    %v2913 = vadd.f32 %v637, %v2866
    %v2914 = vadd.f32 %v639, %v2868
    %v2915 = vadd.f32 %v710, %v2907
    %v2916 = vadd.f32 %v712, %v2909
    %v2917 = vxor.u32 %v2913, 2147483648
    %v2918 = vxor.u32 %v2914, 2147483648
    %v2919 = vxor.u32 %v2915, 2147483648
    %v2920 = vmul.f32 %v2917, 1.442695
    %v2921 = vpow.pop %v2920
    %v2922 = vmul.f32 %v2918, 1.442695
    %v2923 = vpow.pop %v2922
    %v2924 = vmul.f32 %v2919, 1.442695
    %v2925 = vpow.pop %v2924
    %v2926 = vadd.f32 %v2921, 1.0
    %v2927 = vadd.f32 %v2923, 1.0
    %v2928 = vadd.f32 %v2925, 1.0
    %v2929 = vrcp.pop %v2926
    %v2930 = vmul.f32 1.0, %v2929
    %v2931 = vrcp.pop %v2927
    %v2932 = vmul.f32 1.0, %v2931
    %v2933 = vrcp.pop %v2928
    %v2934 = vmul.f32 1.0, %v2933
    %v2935 = vtanh.pop %v2916
    %v2936 = vmul.f32 %v2932, %v2634
    %v2937 = vmul.f32 %v2930, %v2935
    %v2938 = vadd.f32 %v2936, %v2937
    %v2939 = vtanh.pop %v2938
    %v2940 = vmul.f32 %v2934, %v2939
    %v2941 = vpack.c.bf16 %v2940, %v2940
    %v2942 = vpack.c.bf16 %v2830, %v2830
    %2943 = vmatprep.subr.bf16.mxu0 %v1200
    %2944 = vmatpush1.bf16.msra.mxu0 %v1199
    %2945 = vmatprep.subr.bf16.mxu0 %v1204
    %2946 = vmatpush1.bf16.msra.mxu0 %v1203
    %2947 = vmatprep.subr.bf16.mxu0 %v1208
    %2948 = vmatpush1.bf16.msra.mxu0 %v1207
    %2949 = vmatprep.subr.bf16.mxu0 %v1212
    %2950 = vmatpush1.bf16.msra.mxu0 %v1211
    %2951 = vmatprep.subr.bf16.mxu0 %v1216
    %2952 = vmatpush1.bf16.msra.mxu0 %v1215
    %2953 = vmatprep.subr.bf16.mxu0 %v1220
    %2954 = vmatpush1.bf16.msra.mxu0 %v1219
    %2955 = vmatprep.subr.bf16.mxu0 %v1224
    %2956 = vmatpush1.bf16.msra.mxu0 %v1223
    %2957 = vmatprep.subr.bf16.mxu0 %v1228
    %2958 = vmatpush1.bf16.msra.mxu0 %v1227
    %2959 = vmatprep.subr.bf16.mxu0 0
    %2960 = vmatpush1.bf16.msra.mxu0 0
    %2961 = vmatprep.subr.bf16.mxu0 0
    %2962 = vmatpush1.bf16.msra.mxu0 0
    %2963 = vmatprep.subr.bf16.mxu0 0
    %2964 = vmatpush1.bf16.msra.mxu0 0
    %2965 = vmatprep.subr.bf16.mxu0 0
    %2966 = vmatpush1.bf16.msra.mxu0 0
    %2967 = vmatprep.subr.bf16.mxu0 0
    %2968 = vmatpush1.bf16.msra.mxu0 0
    %2969 = vmatprep.subr.bf16.mxu0 0
    %2970 = vmatpush1.bf16.msra.mxu0 0
    %2971 = vmatprep.subr.bf16.mxu0 0
    %2972 = vmatpush1.bf16.msra.mxu0 0
    %2973 = vmatprep.subr.bf16.mxu0 0
    %2974 = vmatpush1.bf16.msra.mxu0 0
    %2975 = vmatprep.mubr.bf16.mxu0 0
    %2976 = vmatmul.mubr.bf16.gmra.mrb[0].mxu0 %v2942
    %v2977 = vpop.f32.mrb[0].mxu0
    %v2978 = vadd.f32 0.0, %v2977
    %v2979 = vpop.f32.mrb[0].mxu0
    %v2980 = vadd.f32 0.0, %v2979
    %v2981 = vpop.f32.mrb[0].mxu0
    %v2982 = vpop.f32.mrb[0].mxu0
    %2983 = vdwg.mxu0
    %2984 = vmatprep.subr.bf16.mxu0 %v1202
    %2985 = vmatpush1.bf16.msra.mxu0 %v1201
    %2986 = vmatprep.subr.bf16.mxu0 %v1206
    %2987 = vmatpush1.bf16.msra.mxu0 %v1205
    %2988 = vmatprep.subr.bf16.mxu0 %v1210
    %2989 = vmatpush1.bf16.msra.mxu0 %v1209
    %2990 = vmatprep.subr.bf16.mxu0 %v1214
    %2991 = vmatpush1.bf16.msra.mxu0 %v1213
    %2992 = vmatprep.subr.bf16.mxu0 %v1218
    %2993 = vmatpush1.bf16.msra.mxu0 %v1217
    %2994 = vmatprep.subr.bf16.mxu0 %v1222
    %2995 = vmatpush1.bf16.msra.mxu0 %v1221
    %2996 = vmatprep.subr.bf16.mxu0 %v1226
    %2997 = vmatpush1.bf16.msra.mxu0 %v1225
    %2998 = vmatprep.subr.bf16.mxu0 %v1230
    %2999 = vmatpush1.bf16.msra.mxu0 %v1229
    %3000 = vmatprep.subr.bf16.mxu0 0
    %3001 = vmatpush1.bf16.msra.mxu0 0
    %3002 = vmatprep.subr.bf16.mxu0 0
    %3003 = vmatpush1.bf16.msra.mxu0 0
    %3004 = vmatprep.subr.bf16.mxu0 0
    %3005 = vmatpush1.bf16.msra.mxu0 0
    %3006 = vmatprep.subr.bf16.mxu0 0
    %3007 = vmatpush1.bf16.msra.mxu0 0
    %3008 = vmatprep.subr.bf16.mxu0 0
    %3009 = vmatpush1.bf16.msra.mxu0 0
    %3010 = vmatprep.subr.bf16.mxu0 0
    %3011 = vmatpush1.bf16.msra.mxu0 0
    %3012 = vmatprep.subr.bf16.mxu0 0
    %3013 = vmatpush1.bf16.msra.mxu0 0
    %3014 = vmatprep.subr.bf16.mxu0 0
    %3015 = vmatpush1.bf16.msra.mxu0 0
    %3016 = vmatprep.mubr.bf16.mxu0 0
    %3017 = vmatmul.mubr.bf16.gmra.mrb[0].mxu0 %v2942
    %v3018 = vpop.f32.mrb[0].mxu0
    %v3019 = vadd.f32 0.0, %v3018
    %v3020 = vpop.f32.mrb[0].mxu0
    %v3021 = vadd.f32 0.0, %v3020
    %v3022 = vpop.f32.mrb[0].mxu0
    %v3023 = vpop.f32.mrb[0].mxu0
    %3024 = vdwg.mxu0
    %3025 = vmatprep.subr.bf16.mxu0 %v1442
    %3026 = vmatpush1.bf16.msra.mxu0 %v1441
    %3027 = vmatprep.subr.bf16.mxu0 %v1446
    %3028 = vmatpush1.bf16.msra.mxu0 %v1445
    %3029 = vmatprep.subr.bf16.mxu0 %v1450
    %3030 = vmatpush1.bf16.msra.mxu0 %v1449
    %3031 = vmatprep.subr.bf16.mxu0 %v1454
    %3032 = vmatpush1.bf16.msra.mxu0 %v1453
    %3033 = vmatprep.subr.bf16.mxu0 %v1458
    %3034 = vmatpush1.bf16.msra.mxu0 %v1457
    %3035 = vmatprep.subr.bf16.mxu0 %v1462
    %3036 = vmatpush1.bf16.msra.mxu0 %v1461
    %3037 = vmatprep.subr.bf16.mxu0 %v1466
    %3038 = vmatpush1.bf16.msra.mxu0 %v1465
    %3039 = vmatprep.subr.bf16.mxu0 %v1470
    %3040 = vmatpush1.bf16.msra.mxu0 %v1469
    %3041 = vmatprep.subr.bf16.mxu0 0
    %3042 = vmatpush1.bf16.msra.mxu0 0
    %3043 = vmatprep.subr.bf16.mxu0 0
    %3044 = vmatpush1.bf16.msra.mxu0 0
    %3045 = vmatprep.subr.bf16.mxu0 0
    %3046 = vmatpush1.bf16.msra.mxu0 0
    %3047 = vmatprep.subr.bf16.mxu0 0
    %3048 = vmatpush1.bf16.msra.mxu0 0
    %3049 = vmatprep.subr.bf16.mxu0 0
    %3050 = vmatpush1.bf16.msra.mxu0 0
    %3051 = vmatprep.subr.bf16.mxu0 0
    %3052 = vmatpush1.bf16.msra.mxu0 0
    %3053 = vmatprep.subr.bf16.mxu0 0
    %3054 = vmatpush1.bf16.msra.mxu0 0
    %3055 = vmatprep.subr.bf16.mxu0 0
    %3056 = vmatpush1.bf16.msra.mxu0 0
    %3057 = vmatprep.mubr.bf16.mxu0 0
    %3058 = vmatmul.mubr.bf16.gmra.mrb[0].mxu0 %v2941
    %v3059 = vpop.f32.mrb[0].mxu0
    %v3060 = vadd.f32 %v2978, %v3059
    %v3061 = vpop.f32.mrb[0].mxu0
    %v3062 = vadd.f32 %v2980, %v3061
    %v3063 = vpop.f32.mrb[0].mxu0
    %v3064 = vpop.f32.mrb[0].mxu0
    %3065 = vdwg.mxu0
    %3066 = vmatprep.subr.bf16.mxu0 %v1444
    %3067 = vmatpush1.bf16.msra.mxu0 %v1443
    %3068 = vmatprep.subr.bf16.mxu0 %v1448
    %3069 = vmatpush1.bf16.msra.mxu0 %v1447
    %3070 = vmatprep.subr.bf16.mxu0 %v1452
    %3071 = vmatpush1.bf16.msra.mxu0 %v1451
    %3072 = vmatprep.subr.bf16.mxu0 %v1456
    %3073 = vmatpush1.bf16.msra.mxu0 %v1455
    %3074 = vmatprep.subr.bf16.mxu0 %v1460
    %3075 = vmatpush1.bf16.msra.mxu0 %v1459
    %3076 = vmatprep.subr.bf16.mxu0 %v1464
    %3077 = vmatpush1.bf16.msra.mxu0 %v1463
    %3078 = vmatprep.subr.bf16.mxu0 %v1468
    %3079 = vmatpush1.bf16.msra.mxu0 %v1467
    %3080 = vmatprep.subr.bf16.mxu0 %v1472
    %3081 = vmatpush1.bf16.msra.mxu0 %v1471
    %3082 = vmatprep.subr.bf16.mxu0 0
    %3083 = vmatpush1.bf16.msra.mxu0 0
    %3084 = vmatprep.subr.bf16.mxu0 0
    %3085 = vmatpush1.bf16.msra.mxu0 0
    %3086 = vmatprep.subr.bf16.mxu0 0
    %3087 = vmatpush1.bf16.msra.mxu0 0
    %3088 = vmatprep.subr.bf16.mxu0 0
    %3089 = vmatpush1.bf16.msra.mxu0 0
    %3090 = vmatprep.subr.bf16.mxu0 0
    %3091 = vmatpush1.bf16.msra.mxu0 0
    %3092 = vmatprep.subr.bf16.mxu0 0
    %3093 = vmatpush1.bf16.msra.mxu0 0
    %3094 = vmatprep.subr.bf16.mxu0 0
    %3095 = vmatpush1.bf16.msra.mxu0 0
    %3096 = vmatprep.subr.bf16.mxu0 0
    %3097 = vmatpush1.bf16.msra.mxu0 0
    %3098 = vmatprep.mubr.bf16.mxu0 0
    %3099 = vmatmul.mubr.bf16.gmra.mrb[0].mxu0 %v2941
    %v3100 = vpop.f32.mrb[0].mxu0
    %v3101 = vadd.f32 %v3019, %v3100
    %v3102 = vpop.f32.mrb[0].mxu0
    %v3103 = vadd.f32 %v3021, %v3102
    %v3104 = vpop.f32.mrb[0].mxu0
    %v3105 = vpop.f32.mrb[0].mxu0
    %3106 = vdwg.mxu0
    %v3107 = vadd.f32 %v3060, %v820
    %v3108 = vadd.f32 %v3062, %v821
    %v3109 = vadd.f32 %v3101, %v822
    %v3110 = vadd.f32 %v3103, %v823
    %v3111 = vxor.u32 %v3107, 2147483648
    %v3112 = vxor.u32 %v3108, 2147483648
    %v3113 = vxor.u32 %v3109, 2147483648
    %v3114 = vmul.f32 %v3111, 1.442695
    %v3115 = vpow.pop %v3114
    %v3116 = vmul.f32 %v3112, 1.442695
    %v3117 = vpow.pop %v3116
    %v3118 = vmul.f32 %v3113, 1.442695
    %v3119 = vpow.pop %v3118
    %v3120 = vadd.f32 %v3115, 1.0
    %v3121 = vadd.f32 %v3117, 1.0
    %v3122 = vadd.f32 %v3119, 1.0
    %v3123 = vrcp.pop %v3120
    %v3124 = vmul.f32 1.0, %v3123
    %v3125 = vrcp.pop %v3121
    %v3126 = vmul.f32 1.0, %v3125
    %v3127 = vrcp.pop %v3122
    %v3128 = vmul.f32 1.0, %v3127
    %v3129 = vtanh.pop %v3110
    %v3130 = vmul.f32 %v3126, %v2828
    %v3131 = vmul.f32 %v3124, %v3129
    %v3132 = vadd.f32 %v3130, %v3131
    %v3133 = vtanh.pop %v3132
    %v3134 = vmul.f32 %v3128, %v3133
    %3135 = vmatprep.subr.bf16.mxu0 %v928
    %3136 = vmatpush1.bf16.msra.mxu0 %v927
    %3137 = vmatprep.subr.bf16.mxu0 %v932
    %3138 = vmatpush1.bf16.msra.mxu0 %v931
    %3139 = vmatprep.subr.bf16.mxu0 %v936
    %3140 = vmatpush1.bf16.msra.mxu0 %v935
    %3141 = vmatprep.subr.bf16.mxu0 %v940
    %3142 = vmatpush1.bf16.msra.mxu0 %v939
    %3143 = vmatprep.subr.bf16.mxu0 %v944
    %3144 = vmatpush1.bf16.msra.mxu0 %v943
    %3145 = vmatprep.subr.bf16.mxu0 %v948
    %3146 = vmatpush1.bf16.msra.mxu0 %v947
    %3147 = vmatprep.subr.bf16.mxu0 %v952
    %3148 = vmatpush1.bf16.msra.mxu0 %v951
    %3149 = vmatprep.subr.bf16.mxu0 %v956
    %3150 = vmatpush1.bf16.msra.mxu0 %v955
    %3151 = vmatprep.subr.bf16.mxu0 0
    %3152 = vmatpush1.bf16.msra.mxu0 0
    %3153 = vmatprep.subr.bf16.mxu0 0
    %3154 = vmatpush1.bf16.msra.mxu0 0
    %3155 = vmatprep.subr.bf16.mxu0 0
    %3156 = vmatpush1.bf16.msra.mxu0 0
    %3157 = vmatprep.subr.bf16.mxu0 0
    %3158 = vmatpush1.bf16.msra.mxu0 0
    %3159 = vmatprep.subr.bf16.mxu0 0
    %3160 = vmatpush1.bf16.msra.mxu0 0
    %3161 = vmatprep.subr.bf16.mxu0 0
    %3162 = vmatpush1.bf16.msra.mxu0 0
    %3163 = vmatprep.subr.bf16.mxu0 0
    %3164 = vmatpush1.bf16.msra.mxu0 0
    %3165 = vmatprep.subr.bf16.mxu0 0
    %3166 = vmatpush1.bf16.msra.mxu0 0
    %3167 = vmatprep.mubr.bf16.mxu0 0
    %3168 = vmatmul.mubr.bf16.gmra.mrb[0].mxu0 %v2941
    %v3169 = vpop.f32.mrb[0].mxu0
    %v3170 = vadd.f32 0.0, %v3169
    %v3171 = vpop.f32.mrb[0].mxu0
    %v3172 = vadd.f32 0.0, %v3171
    %v3173 = vpop.f32.mrb[0].mxu0
    %v3174 = vpop.f32.mrb[0].mxu0
    %3175 = vdwg.mxu0
    %3176 = vmatprep.subr.bf16.mxu0 %v930
    %3177 = vmatpush1.bf16.msra.mxu0 %v929
    %3178 = vmatprep.subr.bf16.mxu0 %v934
    %3179 = vmatpush1.bf16.msra.mxu0 %v933
    %3180 = vmatprep.subr.bf16.mxu0 %v938
    %3181 = vmatpush1.bf16.msra.mxu0 %v937
    %3182 = vmatprep.subr.bf16.mxu0 %v942
    %3183 = vmatpush1.bf16.msra.mxu0 %v941
    %3184 = vmatprep.subr.bf16.mxu0 %v946
    %3185 = vmatpush1.bf16.msra.mxu0 %v945
    %3186 = vmatprep.subr.bf16.mxu0 %v950
    %3187 = vmatpush1.bf16.msra.mxu0 %v949
    %3188 = vmatprep.subr.bf16.mxu0 %v954
    %3189 = vmatpush1.bf16.msra.mxu0 %v953
    %3190 = vmatprep.subr.bf16.mxu0 %v958
    %3191 = vmatpush1.bf16.msra.mxu0 %v957
    %3192 = vmatprep.subr.bf16.mxu0 0
    %3193 = vmatpush1.bf16.msra.mxu0 0
    %3194 = vmatprep.subr.bf16.mxu0 0
    %3195 = vmatpush1.bf16.msra.mxu0 0
    %3196 = vmatprep.subr.bf16.mxu0 0
    %3197 = vmatpush1.bf16.msra.mxu0 0
    %3198 = vmatprep.subr.bf16.mxu0 0
    %3199 = vmatpush1.bf16.msra.mxu0 0
    %3200 = vmatprep.subr.bf16.mxu0 0
    %3201 = vmatpush1.bf16.msra.mxu0 0
    %3202 = vmatprep.subr.bf16.mxu0 0
    %3203 = vmatpush1.bf16.msra.mxu0 0
    %3204 = vmatprep.subr.bf16.mxu0 0
    %3205 = vmatpush1.bf16.msra.mxu0 0
    %3206 = vmatprep.subr.bf16.mxu0 0
    %3207 = vmatpush1.bf16.msra.mxu0 0
    %3208 = vmatprep.mubr.bf16.mxu0 0
    %3209 = vmatmul.mubr.bf16.gmra.mrb[0].mxu0 %v2941
    %v3210 = vpop.f32.mrb[0].mxu0
    %v3211 = vadd.f32 0.0, %v3210
    %v3212 = vpop.f32.mrb[0].mxu0
    %v3213 = vadd.f32 0.0, %v3212
    %v3214 = vpop.f32.mrb[0].mxu0
    %v3215 = vpop.f32.mrb[0].mxu0
    %3216 = vdwg.mxu0
    %v3217 = vadd.f32 %v643, %v3170
    %v3218 = vadd.f32 %v645, %v3172
    %v3219 = vadd.f32 %v716, %v3211
    %v3220 = vadd.f32 %v718, %v3213
    %v3221 = vxor.u32 %v3217, 2147483648
    %v3222 = vxor.u32 %v3218, 2147483648
    %v3223 = vxor.u32 %v3219, 2147483648
    %v3224 = vmul.f32 %v3221, 1.442695
    %v3225 = vpow.pop %v3224
    %v3226 = vmul.f32 %v3222, 1.442695
    %v3227 = vpow.pop %v3226
    %v3228 = vmul.f32 %v3223, 1.442695
    %v3229 = vpow.pop %v3228
    %v3230 = vadd.f32 %v3225, 1.0
    %v3231 = vadd.f32 %v3227, 1.0
    %v3232 = vadd.f32 %v3229, 1.0
    %v3233 = vrcp.pop %v3230
    %v3234 = vmul.f32 1.0, %v3233
    %v3235 = vrcp.pop %v3231
    %v3236 = vmul.f32 1.0, %v3235
    %v3237 = vrcp.pop %v3232
    %v3238 = vmul.f32 1.0, %v3237
    %v3239 = vtanh.pop %v3220
    %v3240 = vmul.f32 %v3236, %v2938
    %v3241 = vmul.f32 %v3234, %v3239
    %v3242 = vadd.f32 %v3240, %v3241
    %v3243 = vtanh.pop %v3242
    %v3244 = vmul.f32 %v3238, %v3243
    %v3245 = vpack.c.bf16 %v3244, %v3244
    %v3246 = vpack.c.bf16 %v3134, %v3134
    %3247 = vmatprep.subr.bf16.mxu0 %v1200
    %3248 = vmatpush1.bf16.msra.mxu0 %v1199
    %3249 = vmatprep.subr.bf16.mxu0 %v1204
    %3250 = vmatpush1.bf16.msra.mxu0 %v1203
    %3251 = vmatprep.subr.bf16.mxu0 %v1208
    %3252 = vmatpush1.bf16.msra.mxu0 %v1207
    %3253 = vmatprep.subr.bf16.mxu0 %v1212
    %3254 = vmatpush1.bf16.msra.mxu0 %v1211
    %3255 = vmatprep.subr.bf16.mxu0 %v1216
    %3256 = vmatpush1.bf16.msra.mxu0 %v1215
    %3257 = vmatprep.subr.bf16.mxu0 %v1220
    %3258 = vmatpush1.bf16.msra.mxu0 %v1219
    %3259 = vmatprep.subr.bf16.mxu0 %v1224
    %3260 = vmatpush1.bf16.msra.mxu0 %v1223
    %3261 = vmatprep.subr.bf16.mxu0 %v1228
    %3262 = vmatpush1.bf16.msra.mxu0 %v1227
    %3263 = vmatprep.subr.bf16.mxu0 0
    %3264 = vmatpush1.bf16.msra.mxu0 0
    %3265 = vmatprep.subr.bf16.mxu0 0
    %3266 = vmatpush1.bf16.msra.mxu0 0
    %3267 = vmatprep.subr.bf16.mxu0 0
    %3268 = vmatpush1.bf16.msra.mxu0 0
    %3269 = vmatprep.subr.bf16.mxu0 0
    %3270 = vmatpush1.bf16.msra.mxu0 0
    %3271 = vmatprep.subr.bf16.mxu0 0
    %3272 = vmatpush1.bf16.msra.mxu0 0
    %3273 = vmatprep.subr.bf16.mxu0 0
    %3274 = vmatpush1.bf16.msra.mxu0 0
    %3275 = vmatprep.subr.bf16.mxu0 0
    %3276 = vmatpush1.bf16.msra.mxu0 0
    %3277 = vmatprep.subr.bf16.mxu0 0
    %3278 = vmatpush1.bf16.msra.mxu0 0
    %3279 = vmatprep.mubr.bf16.mxu0 0
    %3280 = vmatmul.mubr.bf16.gmra.mrb[0].mxu0 %v3246
    %v3281 = vpop.f32.mrb[0].mxu0
    %v3282 = vadd.f32 0.0, %v3281
    %v3283 = vpop.f32.mrb[0].mxu0
    %v3284 = vadd.f32 0.0, %v3283
    %v3285 = vpop.f32.mrb[0].mxu0
    %v3286 = vpop.f32.mrb[0].mxu0
    %3287 = vdwg.mxu0
    %3288 = vmatprep.subr.bf16.mxu0 %v1202
    %3289 = vmatpush1.bf16.msra.mxu0 %v1201
    %3290 = vmatprep.subr.bf16.mxu0 %v1206
    %3291 = vmatpush1.bf16.msra.mxu0 %v1205
    %3292 = vmatprep.subr.bf16.mxu0 %v1210
    %3293 = vmatpush1.bf16.msra.mxu0 %v1209
    %3294 = vmatprep.subr.bf16.mxu0 %v1214
    %3295 = vmatpush1.bf16.msra.mxu0 %v1213
    %3296 = vmatprep.subr.bf16.mxu0 %v1218
    %3297 = vmatpush1.bf16.msra.mxu0 %v1217
    %3298 = vmatprep.subr.bf16.mxu0 %v1222
    %3299 = vmatpush1.bf16.msra.mxu0 %v1221
    %3300 = vmatprep.subr.bf16.mxu0 %v1226
    %3301 = vmatpush1.bf16.msra.mxu0 %v1225
    %3302 = vmatprep.subr.bf16.mxu0 %v1230
    %3303 = vmatpush1.bf16.msra.mxu0 %v1229
    %3304 = vmatprep.subr.bf16.mxu0 0
    %3305 = vmatpush1.bf16.msra.mxu0 0
    %3306 = vmatprep.subr.bf16.mxu0 0
    %3307 = vmatpush1.bf16.msra.mxu0 0
    %3308 = vmatprep.subr.bf16.mxu0 0
    %3309 = vmatpush1.bf16.msra.mxu0 0
    %3310 = vmatprep.subr.bf16.mxu0 0
    %3311 = vmatpush1.bf16.msra.mxu0 0
    %3312 = vmatprep.subr.bf16.mxu0 0
    %3313 = vmatpush1.bf16.msra.mxu0 0
    %3314 = vmatprep.subr.bf16.mxu0 0
    %3315 = vmatpush1.bf16.msra.mxu0 0
    %3316 = vmatprep.subr.bf16.mxu0 0
    %3317 = vmatpush1.bf16.msra.mxu0 0
    %3318 = vmatprep.subr.bf16.mxu0 0
    %3319 = vmatpush1.bf16.msra.mxu0 0
    %3320 = vmatprep.mubr.bf16.mxu0 0
    %3321 = vmatmul.mubr.bf16.gmra.mrb[0].mxu0 %v3246
    %v3322 = vpop.f32.mrb[0].mxu0
    %v3323 = vadd.f32 0.0, %v3322
    %v3324 = vpop.f32.mrb[0].mxu0
    %v3325 = vadd.f32 0.0, %v3324
    %v3326 = vpop.f32.mrb[0].mxu0
    %v3327 = vpop.f32.mrb[0].mxu0
    %3328 = vdwg.mxu0
    %3329 = vmatprep.subr.bf16.mxu0 %v1442
    %3330 = vmatpush1.bf16.msra.mxu0 %v1441
    %3331 = vmatprep.subr.bf16.mxu0 %v1446
    %3332 = vmatpush1.bf16.msra.mxu0 %v1445
    %3333 = vmatprep.subr.bf16.mxu0 %v1450
    %3334 = vmatpush1.bf16.msra.mxu0 %v1449
    %3335 = vmatprep.subr.bf16.mxu0 %v1454
    %3336 = vmatpush1.bf16.msra.mxu0 %v1453
    %3337 = vmatprep.subr.bf16.mxu0 %v1458
    %3338 = vmatpush1.bf16.msra.mxu0 %v1457
    %3339 = vmatprep.subr.bf16.mxu0 %v1462
    %3340 = vmatpush1.bf16.msra.mxu0 %v1461
    %3341 = vmatprep.subr.bf16.mxu0 %v1466
    %3342 = vmatpush1.bf16.msra.mxu0 %v1465
    %3343 = vmatprep.subr.bf16.mxu0 %v1470
    %3344 = vmatpush1.bf16.msra.mxu0 %v1469
    %3345 = vmatprep.subr.bf16.mxu0 0
    %3346 = vmatpush1.bf16.msra.mxu0 0
    %3347 = vmatprep.subr.bf16.mxu0 0
    %3348 = vmatpush1.bf16.msra.mxu0 0
    %3349 = vmatprep.subr.bf16.mxu0 0
    %3350 = vmatpush1.bf16.msra.mxu0 0
    %3351 = vmatprep.subr.bf16.mxu0 0
    %3352 = vmatpush1.bf16.msra.mxu0 0
    %3353 = vmatprep.subr.bf16.mxu0 0
    %3354 = vmatpush1.bf16.msra.mxu0 0
    %3355 = vmatprep.subr.bf16.mxu0 0
    %3356 = vmatpush1.bf16.msra.mxu0 0
    %3357 = vmatprep.subr.bf16.mxu0 0
    %3358 = vmatpush1.bf16.msra.mxu0 0
    %3359 = vmatprep.subr.bf16.mxu0 0
    %3360 = vmatpush1.bf16.msra.mxu0 0
    %3361 = vmatprep.mubr.bf16.mxu0 0
    %3362 = vmatmul.mubr.bf16.gmra.mrb[0].mxu0 %v3245
    %v3363 = vpop.f32.mrb[0].mxu0
    %v3364 = vadd.f32 %v3282, %v3363
    %v3365 = vpop.f32.mrb[0].mxu0
    %v3366 = vadd.f32 %v3284, %v3365
    %v3367 = vpop.f32.mrb[0].mxu0
    %v3368 = vpop.f32.mrb[0].mxu0
    %3369 = vdwg.mxu0
    %3370 = vmatprep.subr.bf16.mxu0 %v1444
    %3371 = vmatpush1.bf16.msra.mxu0 %v1443
    %3372 = vmatprep.subr.bf16.mxu0 %v1448
    %3373 = vmatpush1.bf16.msra.mxu0 %v1447
    %3374 = vmatprep.subr.bf16.mxu0 %v1452
    %3375 = vmatpush1.bf16.msra.mxu0 %v1451
    %3376 = vmatprep.subr.bf16.mxu0 %v1456
    %3377 = vmatpush1.bf16.msra.mxu0 %v1455
    %3378 = vmatprep.subr.bf16.mxu0 %v1460
    %3379 = vmatpush1.bf16.msra.mxu0 %v1459
    %3380 = vmatprep.subr.bf16.mxu0 %v1464
    %3381 = vmatpush1.bf16.msra.mxu0 %v1463
    %3382 = vmatprep.subr.bf16.mxu0 %v1468
    %3383 = vmatpush1.bf16.msra.mxu0 %v1467
    %3384 = vmatprep.subr.bf16.mxu0 %v1472
    %3385 = vmatpush1.bf16.msra.mxu0 %v1471
    %3386 = vmatprep.subr.bf16.mxu0 0
    %3387 = vmatpush1.bf16.msra.mxu0 0
    %3388 = vmatprep.subr.bf16.mxu0 0
    %3389 = vmatpush1.bf16.msra.mxu0 0
    %3390 = vmatprep.subr.bf16.mxu0 0
    %3391 = vmatpush1.bf16.msra.mxu0 0
    %3392 = vmatprep.subr.bf16.mxu0 0
    %3393 = vmatpush1.bf16.msra.mxu0 0
    %3394 = vmatprep.subr.bf16.mxu0 0
    %3395 = vmatpush1.bf16.msra.mxu0 0
    %3396 = vmatprep.subr.bf16.mxu0 0
    %3397 = vmatpush1.bf16.msra.mxu0 0
    %3398 = vmatprep.subr.bf16.mxu0 0
    %3399 = vmatpush1.bf16.msra.mxu0 0
    %3400 = vmatprep.subr.bf16.mxu0 0
    %3401 = vmatpush1.bf16.msra.mxu0 0
    %3402 = vmatprep.mubr.bf16.mxu0 0
    %3403 = vmatmul.mubr.bf16.gmra.mrb[0].mxu0 %v3245
    %v3404 = vpop.f32.mrb[0].mxu0
    %v3405 = vadd.f32 %v3323, %v3404
    %v3406 = vpop.f32.mrb[0].mxu0
    %v3407 = vadd.f32 %v3325, %v3406
    %v3408 = vpop.f32.mrb[0].mxu0
    %v3409 = vpop.f32.mrb[0].mxu0
    %3410 = vdwg.mxu0
    %v3411 = vadd.f32 %v3364, %v820
    %v3412 = vadd.f32 %v3366, %v821
    %v3413 = vadd.f32 %v3405, %v822
    %v3414 = vadd.f32 %v3407, %v823
    %v3415 = vxor.u32 %v3411, 2147483648
    %v3416 = vxor.u32 %v3412, 2147483648
    %v3417 = vxor.u32 %v3413, 2147483648
    %v3418 = vmul.f32 %v3415, 1.442695
    %v3419 = vpow.pop %v3418
    %v3420 = vmul.f32 %v3416, 1.442695
    %v3421 = vpow.pop %v3420
    %v3422 = vmul.f32 %v3417, 1.442695
    %v3423 = vpow.pop %v3422
    %v3424 = vadd.f32 %v3419, 1.0
    %v3425 = vadd.f32 %v3421, 1.0
    %v3426 = vadd.f32 %v3423, 1.0
    %v3427 = vrcp.pop %v3424
    %v3428 = vmul.f32 1.0, %v3427
    %v3429 = vrcp.pop %v3425
    %v3430 = vmul.f32 1.0, %v3429
    %v3431 = vrcp.pop %v3426
    %v3432 = vmul.f32 1.0, %v3431
    %v3433 = vtanh.pop %v3414
    %v3434 = vmul.f32 %v3430, %v3132
    %v3435 = vmul.f32 %v3428, %v3433
    %v3436 = vadd.f32 %v3434, %v3435
    %v3437 = vtanh.pop %v3436
    %v3438 = vmul.f32 %v3432, %v3437
    %3439 = vmatprep.subr.bf16.mxu0 %v928
    %3440 = vmatpush1.bf16.msra.mxu0 %v927
    %3441 = vmatprep.subr.bf16.mxu0 %v932
    %3442 = vmatpush1.bf16.msra.mxu0 %v931
    %3443 = vmatprep.subr.bf16.mxu0 %v936
    %3444 = vmatpush1.bf16.msra.mxu0 %v935
    %3445 = vmatprep.subr.bf16.mxu0 %v940
    %3446 = vmatpush1.bf16.msra.mxu0 %v939
    %3447 = vmatprep.subr.bf16.mxu0 %v944
    %3448 = vmatpush1.bf16.msra.mxu0 %v943
    %3449 = vmatprep.subr.bf16.mxu0 %v948
    %3450 = vmatpush1.bf16.msra.mxu0 %v947
    %3451 = vmatprep.subr.bf16.mxu0 %v952
    %3452 = vmatpush1.bf16.msra.mxu0 %v951
    %3453 = vmatprep.subr.bf16.mxu0 %v956
    %3454 = vmatpush1.bf16.msra.mxu0 %v955
    %3455 = vmatprep.subr.bf16.mxu0 0
    %3456 = vmatpush1.bf16.msra.mxu0 0
    %3457 = vmatprep.subr.bf16.mxu0 0
    %3458 = vmatpush1.bf16.msra.mxu0 0
    %3459 = vmatprep.subr.bf16.mxu0 0
    %3460 = vmatpush1.bf16.msra.mxu0 0
    %3461 = vmatprep.subr.bf16.mxu0 0
    %3462 = vmatpush1.bf16.msra.mxu0 0
    %3463 = vmatprep.subr.bf16.mxu0 0
    %3464 = vmatpush1.bf16.msra.mxu0 0
    %3465 = vmatprep.subr.bf16.mxu0 0
    %3466 = vmatpush1.bf16.msra.mxu0 0
    %3467 = vmatprep.subr.bf16.mxu0 0
    %3468 = vmatpush1.bf16.msra.mxu0 0
    %3469 = vmatprep.subr.bf16.mxu0 0
    %3470 = vmatpush1.bf16.msra.mxu0 0
    %3471 = vmatprep.mubr.bf16.mxu0 0
    %3472 = vmatmul.mubr.bf16.gmra.mrb[0].mxu0 %v3245
    %v3473 = vpop.f32.mrb[0].mxu0
    %v3474 = vadd.f32 0.0, %v3473
    %v3475 = vpop.f32.mrb[0].mxu0
    %v3476 = vadd.f32 0.0, %v3475
    %v3477 = vpop.f32.mrb[0].mxu0
    %v3478 = vpop.f32.mrb[0].mxu0
    %3479 = vdwg.mxu0
    %3480 = vmatprep.subr.bf16.mxu0 %v930
    %3481 = vmatpush1.bf16.msra.mxu0 %v929
    %3482 = vmatprep.subr.bf16.mxu0 %v934
    %3483 = vmatpush1.bf16.msra.mxu0 %v933
    %3484 = vmatprep.subr.bf16.mxu0 %v938
    %3485 = vmatpush1.bf16.msra.mxu0 %v937
    %3486 = vmatprep.subr.bf16.mxu0 %v942
    %3487 = vmatpush1.bf16.msra.mxu0 %v941
    %3488 = vmatprep.subr.bf16.mxu0 %v946
    %3489 = vmatpush1.bf16.msra.mxu0 %v945
    %3490 = vmatprep.subr.bf16.mxu0 %v950
    %3491 = vmatpush1.bf16.msra.mxu0 %v949
    %3492 = vmatprep.subr.bf16.mxu0 %v954
    %3493 = vmatpush1.bf16.msra.mxu0 %v953
    %3494 = vmatprep.subr.bf16.mxu0 %v958
    %3495 = vmatpush1.bf16.msra.mxu0 %v957
    %3496 = vmatprep.subr.bf16.mxu0 0
    %3497 = vmatpush1.bf16.msra.mxu0 0
    %3498 = vmatprep.subr.bf16.mxu0 0
    %3499 = vmatpush1.bf16.msra.mxu0 0
    %3500 = vmatprep.subr.bf16.mxu0 0
    %3501 = vmatpush1.bf16.msra.mxu0 0
    %3502 = vmatprep.subr.bf16.mxu0 0
    %3503 = vmatpush1.bf16.msra.mxu0 0
    %3504 = vmatprep.subr.bf16.mxu0 0
    %3505 = vmatpush1.bf16.msra.mxu0 0
    %3506 = vmatprep.subr.bf16.mxu0 0
    %3507 = vmatpush1.bf16.msra.mxu0 0
    %3508 = vmatprep.subr.bf16.mxu0 0
    %3509 = vmatpush1.bf16.msra.mxu0 0
    %3510 = vmatprep.subr.bf16.mxu0 0
    %3511 = vmatpush1.bf16.msra.mxu0 0
    %3512 = vmatprep.mubr.bf16.mxu0 0
    %3513 = vmatmul.mubr.bf16.gmra.mrb[0].mxu0 %v3245
    %v3514 = vpop.f32.mrb[0].mxu0
    %v3515 = vadd.f32 0.0, %v3514
    %v3516 = vpop.f32.mrb[0].mxu0
    %v3517 = vadd.f32 0.0, %v3516
    %v3518 = vpop.f32.mrb[0].mxu0
    %v3519 = vpop.f32.mrb[0].mxu0
    %3520 = vdwg.mxu0
    %v3521 = vadd.f32 %v647, %v3474
    %v3522 = vadd.f32 %v649, %v3476
    %v3523 = vadd.f32 %v720, %v3515
    %v3524 = vadd.f32 %v722, %v3517
    %v3525 = vxor.u32 %v3521, 2147483648
    %v3526 = vxor.u32 %v3522, 2147483648
    %v3527 = vxor.u32 %v3523, 2147483648
    %v3528 = vmul.f32 %v3525, 1.442695
    %v3529 = vpow.pop %v3528
    %v3530 = vmul.f32 %v3526, 1.442695
    %v3531 = vpow.pop %v3530
    %v3532 = vmul.f32 %v3527, 1.442695
    %v3533 = vpow.pop %v3532
    %v3534 = vadd.f32 %v3529, 1.0
    %v3535 = vadd.f32 %v3531, 1.0
    %v3536 = vadd.f32 %v3533, 1.0
    %v3537 = vrcp.pop %v3534
    %v3538 = vmul.f32 1.0, %v3537
    %v3539 = vrcp.pop %v3535
    %v3540 = vmul.f32 1.0, %v3539
    %v3541 = vrcp.pop %v3536
    %v3542 = vmul.f32 1.0, %v3541
    %v3543 = vtanh.pop %v3524
    %v3544 = vmul.f32 %v3540, %v3242
    %v3545 = vmul.f32 %v3538, %v3543
    %v3546 = vadd.f32 %v3544, %v3545
    %v3547 = vtanh.pop %v3546
    %v3548 = vmul.f32 %v3542, %v3547
    %v3549 = vpack.c.bf16 %v3548, %v3548
    %v3550 = vpack.c.bf16 %v3438, %v3438
    %3551 = vmatprep.subr.bf16.mxu0 %v1200
    %3552 = vmatpush1.bf16.msra.mxu0 %v1199
    %3553 = vmatprep.subr.bf16.mxu0 %v1204
    %3554 = vmatpush1.bf16.msra.mxu0 %v1203
    %3555 = vmatprep.subr.bf16.mxu0 %v1208
    %3556 = vmatpush1.bf16.msra.mxu0 %v1207
    %3557 = vmatprep.subr.bf16.mxu0 %v1212
    %3558 = vmatpush1.bf16.msra.mxu0 %v1211
    %3559 = vmatprep.subr.bf16.mxu0 %v1216
    %3560 = vmatpush1.bf16.msra.mxu0 %v1215
    %3561 = vmatprep.subr.bf16.mxu0 %v1220
    %3562 = vmatpush1.bf16.msra.mxu0 %v1219
    %3563 = vmatprep.subr.bf16.mxu0 %v1224
    %3564 = vmatpush1.bf16.msra.mxu0 %v1223
    %3565 = vmatprep.subr.bf16.mxu0 %v1228
    %3566 = vmatpush1.bf16.msra.mxu0 %v1227
    %3567 = vmatprep.subr.bf16.mxu0 0
    %3568 = vmatpush1.bf16.msra.mxu0 0
    %3569 = vmatprep.subr.bf16.mxu0 0
    %3570 = vmatpush1.bf16.msra.mxu0 0
    %3571 = vmatprep.subr.bf16.mxu0 0
    %3572 = vmatpush1.bf16.msra.mxu0 0
    %3573 = vmatprep.subr.bf16.mxu0 0
    %3574 = vmatpush1.bf16.msra.mxu0 0
    %3575 = vmatprep.subr.bf16.mxu0 0
    %3576 = vmatpush1.bf16.msra.mxu0 0
    %3577 = vmatprep.subr.bf16.mxu0 0
    %3578 = vmatpush1.bf16.msra.mxu0 0
    %3579 = vmatprep.subr.bf16.mxu0 0
    %3580 = vmatpush1.bf16.msra.mxu0 0
    %3581 = vmatprep.subr.bf16.mxu0 0
    %3582 = vmatpush1.bf16.msra.mxu0 0
    %3583 = vmatprep.mubr.bf16.mxu0 0
    %3584 = vmatmul.mubr.bf16.gmra.mrb[0].mxu0 %v3550
    %v3585 = vpop.f32.mrb[0].mxu0
    %v3586 = vadd.f32 0.0, %v3585
    %v3587 = vpop.f32.mrb[0].mxu0
    %v3588 = vadd.f32 0.0, %v3587
    %v3589 = vpop.f32.mrb[0].mxu0
    %v3590 = vpop.f32.mrb[0].mxu0
    %3591 = vdwg.mxu0
    %3592 = vmatprep.subr.bf16.mxu0 %v1202
    %3593 = vmatpush1.bf16.msra.mxu0 %v1201
    %3594 = vmatprep.subr.bf16.mxu0 %v1206
    %3595 = vmatpush1.bf16.msra.mxu0 %v1205
    %3596 = vmatprep.subr.bf16.mxu0 %v1210
    %3597 = vmatpush1.bf16.msra.mxu0 %v1209
    %3598 = vmatprep.subr.bf16.mxu0 %v1214
    %3599 = vmatpush1.bf16.msra.mxu0 %v1213
    %3600 = vmatprep.subr.bf16.mxu0 %v1218
    %3601 = vmatpush1.bf16.msra.mxu0 %v1217
    %3602 = vmatprep.subr.bf16.mxu0 %v1222
    %3603 = vmatpush1.bf16.msra.mxu0 %v1221
    %3604 = vmatprep.subr.bf16.mxu0 %v1226
    %3605 = vmatpush1.bf16.msra.mxu0 %v1225
    %3606 = vmatprep.subr.bf16.mxu0 %v1230
    %3607 = vmatpush1.bf16.msra.mxu0 %v1229
    %3608 = vmatprep.subr.bf16.mxu0 0
    %3609 = vmatpush1.bf16.msra.mxu0 0
    %3610 = vmatprep.subr.bf16.mxu0 0
    %3611 = vmatpush1.bf16.msra.mxu0 0
    %3612 = vmatprep.subr.bf16.mxu0 0
    %3613 = vmatpush1.bf16.msra.mxu0 0
    %3614 = vmatprep.subr.bf16.mxu0 0
    %3615 = vmatpush1.bf16.msra.mxu0 0
    %3616 = vmatprep.subr.bf16.mxu0 0
    %3617 = vmatpush1.bf16.msra.mxu0 0
    %3618 = vmatprep.subr.bf16.mxu0 0
    %3619 = vmatpush1.bf16.msra.mxu0 0
    %3620 = vmatprep.subr.bf16.mxu0 0
    %3621 = vmatpush1.bf16.msra.mxu0 0
    %3622 = vmatprep.subr.bf16.mxu0 0
    %3623 = vmatpush1.bf16.msra.mxu0 0
    %3624 = vmatprep.mubr.bf16.mxu0 0
    %3625 = vmatmul.mubr.bf16.gmra.mrb[0].mxu0 %v3550
    %v3626 = vpop.f32.mrb[0].mxu0
    %v3627 = vadd.f32 0.0, %v3626
    %v3628 = vpop.f32.mrb[0].mxu0
    %v3629 = vadd.f32 0.0, %v3628
    %v3630 = vpop.f32.mrb[0].mxu0
    %v3631 = vpop.f32.mrb[0].mxu0
    %3632 = vdwg.mxu0
    %3633 = vmatprep.subr.bf16.mxu0 %v1442
    %3634 = vmatpush1.bf16.msra.mxu0 %v1441
    %3635 = vmatprep.subr.bf16.mxu0 %v1446
    %3636 = vmatpush1.bf16.msra.mxu0 %v1445
    %3637 = vmatprep.subr.bf16.mxu0 %v1450
    %3638 = vmatpush1.bf16.msra.mxu0 %v1449
    %3639 = vmatprep.subr.bf16.mxu0 %v1454
    %3640 = vmatpush1.bf16.msra.mxu0 %v1453
    %3641 = vmatprep.subr.bf16.mxu0 %v1458
    %3642 = vmatpush1.bf16.msra.mxu0 %v1457
    %3643 = vmatprep.subr.bf16.mxu0 %v1462
    %3644 = vmatpush1.bf16.msra.mxu0 %v1461
    %3645 = vmatprep.subr.bf16.mxu0 %v1466
    %3646 = vmatpush1.bf16.msra.mxu0 %v1465
    %3647 = vmatprep.subr.bf16.mxu0 %v1470
    %3648 = vmatpush1.bf16.msra.mxu0 %v1469
    %3649 = vmatprep.subr.bf16.mxu0 0
    %3650 = vmatpush1.bf16.msra.mxu0 0
    %3651 = vmatprep.subr.bf16.mxu0 0
    %3652 = vmatpush1.bf16.msra.mxu0 0
    %3653 = vmatprep.subr.bf16.mxu0 0
    %3654 = vmatpush1.bf16.msra.mxu0 0
    %3655 = vmatprep.subr.bf16.mxu0 0
    %3656 = vmatpush1.bf16.msra.mxu0 0
    %3657 = vmatprep.subr.bf16.mxu0 0
    %3658 = vmatpush1.bf16.msra.mxu0 0
    %3659 = vmatprep.subr.bf16.mxu0 0
    %3660 = vmatpush1.bf16.msra.mxu0 0
    %3661 = vmatprep.subr.bf16.mxu0 0
    %3662 = vmatpush1.bf16.msra.mxu0 0
    %3663 = vmatprep.subr.bf16.mxu0 0
    %3664 = vmatpush1.bf16.msra.mxu0 0
    %3665 = vmatprep.mubr.bf16.mxu0 0
    %3666 = vmatmul.mubr.bf16.gmra.mrb[0].mxu0 %v3549
    %v3667 = vpop.f32.mrb[0].mxu0
    %v3668 = vadd.f32 %v3586, %v3667
    %v3669 = vpop.f32.mrb[0].mxu0
    %v3670 = vadd.f32 %v3588, %v3669
    %v3671 = vpop.f32.mrb[0].mxu0
    %v3672 = vpop.f32.mrb[0].mxu0
    %3673 = vdwg.mxu0
    %3674 = vmatprep.subr.bf16.mxu0 %v1444
    %3675 = vmatpush1.bf16.msra.mxu0 %v1443
    %3676 = vmatprep.subr.bf16.mxu0 %v1448
    %3677 = vmatpush1.bf16.msra.mxu0 %v1447
    %3678 = vmatprep.subr.bf16.mxu0 %v1452
    %3679 = vmatpush1.bf16.msra.mxu0 %v1451
    %3680 = vmatprep.subr.bf16.mxu0 %v1456
    %3681 = vmatpush1.bf16.msra.mxu0 %v1455
    %3682 = vmatprep.subr.bf16.mxu0 %v1460
    %3683 = vmatpush1.bf16.msra.mxu0 %v1459
    %3684 = vmatprep.subr.bf16.mxu0 %v1464
    %3685 = vmatpush1.bf16.msra.mxu0 %v1463
    %3686 = vmatprep.subr.bf16.mxu0 %v1468
    %3687 = vmatpush1.bf16.msra.mxu0 %v1467
    %3688 = vmatprep.subr.bf16.mxu0 %v1472
    %3689 = vmatpush1.bf16.msra.mxu0 %v1471
    %3690 = vmatprep.subr.bf16.mxu0 0
    %3691 = vmatpush1.bf16.msra.mxu0 0
    %3692 = vmatprep.subr.bf16.mxu0 0
    %3693 = vmatpush1.bf16.msra.mxu0 0
    %3694 = vmatprep.subr.bf16.mxu0 0
    %3695 = vmatpush1.bf16.msra.mxu0 0
    %3696 = vmatprep.subr.bf16.mxu0 0
    %3697 = vmatpush1.bf16.msra.mxu0 0
    %3698 = vmatprep.subr.bf16.mxu0 0
    %3699 = vmatpush1.bf16.msra.mxu0 0
    %3700 = vmatprep.subr.bf16.mxu0 0
    %3701 = vmatpush1.bf16.msra.mxu0 0
    %3702 = vmatprep.subr.bf16.mxu0 0
    %3703 = vmatpush1.bf16.msra.mxu0 0
    %3704 = vmatprep.subr.bf16.mxu0 0
    %3705 = vmatpush1.bf16.msra.mxu0 0
    %3706 = vmatprep.mubr.bf16.mxu0 0
    %3707 = vmatmul.mubr.bf16.gmra.mrb[0].mxu0 %v3549
    %v3708 = vpop.f32.mrb[0].mxu0
    %v3709 = vadd.f32 %v3627, %v3708
    %v3710 = vpop.f32.mrb[0].mxu0
    %v3711 = vadd.f32 %v3629, %v3710
    %v3712 = vpop.f32.mrb[0].mxu0
    %v3713 = vpop.f32.mrb[0].mxu0
    %3714 = vdwg.mxu0
    %v3715 = vadd.f32 %v3668, %v820
    %v3716 = vadd.f32 %v3670, %v821
    %v3717 = vadd.f32 %v3709, %v822
    %v3718 = vadd.f32 %v3711, %v823
    %v3719 = vxor.u32 %v3715, 2147483648
    %v3720 = vxor.u32 %v3716, 2147483648
    %v3721 = vxor.u32 %v3717, 2147483648
    %v3722 = vmul.f32 %v3719, 1.442695
    %v3723 = vpow.pop %v3722
    %v3724 = vmul.f32 %v3720, 1.442695
    %v3725 = vpow.pop %v3724
    %v3726 = vmul.f32 %v3721, 1.442695
    %v3727 = vpow.pop %v3726
    %v3728 = vadd.f32 %v3723, 1.0
    %v3729 = vadd.f32 %v3725, 1.0
    %v3730 = vadd.f32 %v3727, 1.0
    %v3731 = vrcp.pop %v3728
    %v3732 = vmul.f32 1.0, %v3731
    %v3733 = vrcp.pop %v3729
    %v3734 = vmul.f32 1.0, %v3733
    %v3735 = vrcp.pop %v3730
    %v3736 = vmul.f32 1.0, %v3735
    %v3737 = vtanh.pop %v3718
    %v3738 = vmul.f32 %v3734, %v3436
    %v3739 = vmul.f32 %v3732, %v3737
    %v3740 = vadd.f32 %v3738, %v3739
    %v3741 = vtanh.pop %v3740
    %v3742 = vmul.f32 %v3736, %v3741
    %v3743 = vpack.c.bf16 %v3742, %v3742
    %v3744 = vld [vmem:[#allocation2 + $0x480] sm:$0xf]
    %v3745 = vld [vmem:[#allocation2 + $0x490] sm:$0xf]
    %v3746 = vld [vmem:[#allocation2 + $0x4a0] sm:$0xf]
    %v3747 = vld [vmem:[#allocation2 + $0x4b0] sm:$0xf]
    %v3748 = vld [vmem:[#allocation2 + $0x4c0] sm:$0xf]
    %v3749 = vld [vmem:[#allocation2 + $0x4d0] sm:$0xf]
    %v3750 = vld [vmem:[#allocation2 + $0x4e0] sm:$0xf]
    %v3751 = vld [vmem:[#allocation2 + $0x4f0] sm:$0xf]
    %v3752 = vld [vmem:[#allocation2 + $0x500] sm:$0xf]
    %v3753 = vld [vmem:[#allocation2 + $0x510] sm:$0xf]
    %v3754 = vld [vmem:[#allocation2 + $0x520] sm:$0xf]
    %v3755 = vld [vmem:[#allocation2 + $0x530] sm:$0xf]
    %v3756 = vld [vmem:[#allocation2 + $0x540] sm:$0xf]
    %v3757 = vld [vmem:[#allocation2 + $0x550] sm:$0xf]
    %v3758 = vld [vmem:[#allocation2 + $0x560] sm:$0xf]
    %v3759 = vld [vmem:[#allocation2 + $0x570] sm:$0xf]
    %v3760 = vld [vmem:[%s2 + $0x20] sm:$0xff]
    %v3777 = vunpack.c.l.b16 %v3744
    %v3778 = vunpack.c.l.b16 %v3745
    %v3779 = vunpack.c.l.b16 %v3746
    %v3780 = vunpack.c.l.b16 %v3747
    %v3781 = vunpack.c.l.b16 %v3748
    %v3782 = vunpack.c.l.b16 %v3749
    %v3783 = vunpack.c.l.b16 %v3750
    %v3784 = vunpack.c.l.b16 %v3751
    %v3785 = vunpack.c.l.b16 %v3752
    %v3786 = vunpack.c.l.b16 %v3753
    %v3787 = vunpack.c.l.b16 %v3754
    %v3788 = vunpack.c.l.b16 %v3755
    %v3789 = vunpack.c.l.b16 %v3756
    %v3790 = vunpack.c.l.b16 %v3757
    %v3791 = vunpack.c.l.b16 %v3758
    %v3792 = vunpack.c.l.b16 %v3759
    %v3793 = vpack.c.b16 %v3778, %v3777
    %v3794 = vpack.c.b16 %v3780, %v3779
    %v3795 = vpack.c.b16 %v3782, %v3781
    %v3796 = vpack.c.b16 %v3784, %v3783
    %v3797 = vpack.c.b16 %v3786, %v3785
    %v3798 = vpack.c.b16 %v3788, %v3787
    %v3799 = vpack.c.b16 %v3790, %v3789
    %v3800 = vpack.c.b16 %v3792, %v3791
    %3809 = vmatprep.subr.bf16.mxu0 0
    %3810 = vmatpush1.bf16.msra.mxu0 %v3793
    %3811 = vmatprep.subr.bf16.mxu0 0
    %3812 = vmatpush1.bf16.msra.mxu0 %v3794
    %3813 = vmatprep.subr.bf16.mxu0 0
    %3814 = vmatpush1.bf16.msra.mxu0 %v3795
    %3815 = vmatprep.subr.bf16.mxu0 0
    %3816 = vmatpush1.bf16.msra.mxu0 %v3796
    %3817 = vmatprep.subr.bf16.mxu0 0
    %3818 = vmatpush1.bf16.msra.mxu0 %v3797
    %3819 = vmatprep.subr.bf16.mxu0 0
    %3820 = vmatpush1.bf16.msra.mxu0 %v3798
    %3821 = vmatprep.subr.bf16.mxu0 0
    %3822 = vmatpush1.bf16.msra.mxu0 %v3799
    %3823 = vmatprep.subr.bf16.mxu0 0
    %3824 = vmatpush1.bf16.msra.mxu0 %v3800
    %3825 = vmatprep.subr.bf16.mxu0 0
    %3826 = vmatpush1.bf16.msra.mxu0 0
    %3827 = vmatprep.subr.bf16.mxu0 0
    %3828 = vmatpush1.bf16.msra.mxu0 0
    %3829 = vmatprep.subr.bf16.mxu0 0
    %3830 = vmatpush1.bf16.msra.mxu0 0
    %3831 = vmatprep.subr.bf16.mxu0 0
    %3832 = vmatpush1.bf16.msra.mxu0 0
    %3833 = vmatprep.subr.bf16.mxu0 0
    %3834 = vmatpush1.bf16.msra.mxu0 0
    %3835 = vmatprep.subr.bf16.mxu0 0
    %3836 = vmatpush1.bf16.msra.mxu0 0
    %3837 = vmatprep.subr.bf16.mxu0 0
    %3838 = vmatpush1.bf16.msra.mxu0 0
    %3839 = vmatprep.subr.bf16.mxu0 0
    %3840 = vmatpush1.bf16.msra.mxu0 0
    %3841 = vmatprep.mubr.bf16.mxu0 0
    %3842 = vmatmul.mubr.bf16.gmra.mrb[0].mxu0 %v3743
    %v3843 = vpop.f32.mrb[0].mxu0
    %v3844 = vadd.f32 %v3760, %v3843
    %v3845 = vpop.f32.mrb[0].mxu0
    %v3846 = vpop.f32.mrb[0].mxu0
    %v3847 = vpop.f32.mrb[0].mxu0
    %3848 = vdwg.mxu0
    %3849 = vmax.xlane.f32.xlu0 %v3844
    %v3850 = vpop.xlane.xlu0 %3849
    %v3851 = vsub.f32 %v3844, %v3850
    %v3852 = vmul.f32 %v3851, 1.442695
    %v3853 = vpow.pop %v3852
    %3854 = vadd.xlane.f32.xlu0 %v3853
    %v3855 = vpop.xlane.xlu0 %3854
    %v3856 = vlog2.pop %v3855
    %v3857 = vmul.f32 %v3856, 0.6931472
    %v3858 = vsub.f32 %v3851, %v3857
    %3859 = vst [vmem:[%s5] sm:$0xff] %v3858
    // Predicated region
    $region26: #{network_forward.1} parent=1 // pred_check
      _
    $region27: #{network_forward.1} parent=1 // pred_check_branch
      %3861 = sbr.rel (0) target = $region29
    $region28: #{network_forward.1} parent=1 // pred_region
      _
    $region29: #{network_forward.1} parent=1 // pred_fallthru
      _
    // Predicated region
    $region30: #{network_forward.1} parent=1 // pred_check
      _
    $region31: #{network_forward.1} parent=1 // pred_check_branch
      %3863 = sbr.rel (0) target = $region33
    $region32: #{network_forward.1} parent=1 // pred_region
      _
    $region33: #{network_forward.1} parent=1 // pred_fallthru
      _
    %3864 = vsyncpa [#allocation3], 1

</llo_original>
